<compile_context>
chip_gen: v7x
topology: tpu7x:2x2x1
jax: 0.10.0
libtpu: 0.0.40
codegen_flags: <defaults>
</compile_context>

<pallas_src>
import jax
import jax.numpy as jnp
from jax import lax
from jax.experimental import pallas as pl
from jax.experimental.pallas import tpu as pltpu

BN_EPS = 1e-3


def se_conv_bn_kernel(sq_ref, w1_ref, b1_ref, x_ref, w2_ref,
                      gamma_ref, beta_ref, o_ref):
    # conv2d76 (1x1, 48->768, bias) on the [1,1] spatial input:
    #   gate[768,1] = w1[768,48] @ sq[48,1] + b1[768,1]
    gate = jnp.dot(w1_ref[...], sq_ref[...],
                   preferred_element_type=jnp.float32) + b1_ref[...]
    # sigmoid8
    s = jax.nn.sigmoid(gate)                                   # [768, 1]
    # broadcast multiply with the full feature map (channel-major)
    xs = x_ref[...] * s                                        # [768, 196]
    # conv2d77 (1x1, 768->192, no bias): y[192,196] = w2[192,768] @ xs
    y = jnp.dot(w2_ref[...], xs, preferred_element_type=jnp.float32)
    # batchnorm2d59 (training mode): batch stats over N*H*W per channel,
    # fused single pass: mean = E[y], var = E[y^2] - mean^2 (biased)
    hw = y.shape[1]
    inv_hw = 1.0 / hw
    s1 = jnp.sum(y, axis=1, keepdims=True)                     # [192, 1]
    s2 = jnp.sum(y * y, axis=1, keepdims=True)                 # [192, 1]
    mean = s1 * inv_hw
    var = s2 * inv_hw - mean * mean
    inv = lax.rsqrt(var + BN_EPS)
    o_ref[...] = ((y - mean) * inv * gamma_ref[...]
                  + beta_ref[...]).astype(o_ref.dtype)


def se_conv_bn(x252, x249, w1_oi, b1, w2_oi, gamma, beta):
    """x252: [1,48,1,1], x249: [1,768,14,14] (NCHW, float32)."""
    N, C_mid, H, W = x249.shape
    C_se = x252.shape[1]
    C_out = w2_oi.shape[0]
    assert N == 1
    HW = H * W

    # All of these are free reshapes (no data movement / no XLA transposes).
    x_mat = x249.reshape(C_mid, HW)            # [768, 196] channel-major
    sq_col = x252.reshape(C_se, 1)             # [48, 1]
    w1_mat = w1_oi.reshape(C_mid, C_se)        # [768, 48]
    b1_col = b1.reshape(C_mid, 1)              # [768, 1]
    w2_mat = w2_oi.reshape(C_out, C_mid)       # [192, 768]
    gamma_col = gamma.reshape(C_out, 1)        # [192, 1]
    beta_col = beta.reshape(C_out, 1)          # [192, 1]

    itemsize = 4
    bytes_accessed = itemsize * (
        C_mid * HW          # x
        + C_out * C_mid     # w2
        + C_mid * C_se      # w1
        + C_se + C_mid      # sq, b1
        + 2 * C_out         # gamma, beta
        + C_out * HW        # output
    )
    cost = pl.CostEstimate(
        flops=2 * C_out * C_mid * HW + 2 * C_mid * C_se + 8 * C_out * HW,
        transcendentals=C_mid,           # one sigmoid per mid channel
        bytes_accessed=bytes_accessed,
    )

    out_mat = pl.pallas_call(
        se_conv_bn_kernel,
        out_shape=jax.ShapeDtypeStruct((C_out, HW), jnp.float32),
        in_specs=[pl.BlockSpec(memory_space=pltpu.MemorySpace.VMEM)] * 7,
        out_specs=pl.BlockSpec(memory_space=pltpu.MemorySpace.VMEM),
        cost_estimate=cost,
    )(sq_col, w1_mat, b1_col, x_mat, w2_mat, gamma_col, beta_col)

    # Free reshape back to NCHW.
    return out_mat.reshape(1, C_out, H, W)


def reference(x252, x249, w1_oi, b1, w2_oi, gamma, beta):
    """Pure-JAX reference mirroring the PyTorch forward (training-mode BN)."""
    C_mid = w1_oi.shape[0]
    C_se = w1_oi.shape[1]
    C_out = w2_oi.shape[0]
    x253 = jnp.einsum('oc,ncij->noij', w1_oi.reshape(C_mid, C_se), x252) \
        + b1.reshape(1, -1, 1, 1)
    x254 = jax.nn.sigmoid(x253)
    x255 = x254 * x249
    x256 = jnp.einsum('oc,nchw->nohw', w2_oi.reshape(C_out, C_mid), x255)
    mean = jnp.mean(x256, axis=(0, 2, 3), keepdims=True)
    var = jnp.mean((x256 - mean) ** 2, axis=(0, 2, 3), keepdims=True)
    return (x256 - mean) * lax.rsqrt(var + BN_EPS) * gamma.reshape(1, -1, 1, 1) \
        + beta.reshape(1, -1, 1, 1)


if __name__ == "__main__":
    key = jax.random.PRNGKey(0)
    k_x249, k_x252, k_w1, k_b1, k_w2 = jax.random.split(key, 5)

    # inputs (shapes from the module spec)
    x249 = jax.random.normal(k_x249, (1, 768, 14, 14), dtype=jnp.float32)
    x252 = jax.random.normal(k_x252, (1, 48, 1, 1), dtype=jnp.float32)

    # deterministic parameter init (shapes from Module.__init__)
    w1_oi = 0.1 * jax.random.normal(k_w1, (768, 48, 1, 1), dtype=jnp.float32)    # conv2d76.weight
    b1 = 0.1 * jax.random.normal(k_b1, (768,), dtype=jnp.float32)                # conv2d76.bias
    w2_oi = 0.05 * jax.random.normal(k_w2, (192, 768, 1, 1), dtype=jnp.float32)  # conv2d77.weight
    gamma = jnp.ones((192,), dtype=jnp.float32)                                  # bn.weight
    beta = jnp.zeros((192,), dtype=jnp.float32)                                  # bn.bias

    out = se_conv_bn(x252, x249, w1_oi, b1, w2_oi, gamma, beta)
    out = jax.block_until_ready(out)

    ref = reference(x252, x249, w1_oi, b1, w2_oi, gamma, beta)
    assert out.shape == (1, 192, 14, 14)
    assert jnp.allclose(out, ref, atol=1e-3, rtol=1e-3), \
        float(jnp.max(jnp.abs(out - ref)))

    print("KERNEL_OK")
</pallas_src>

<mosaic_0001>
module attributes {stable_mosaic.version = 11 : i64} {
  func.func @se_conv_bn_kernel(%arg0: memref<48x1xf32, #tpu.memory_space<vmem>>, %arg1: memref<768x48xf32, #tpu.memory_space<vmem>>, %arg2: memref<768x1xf32, #tpu.memory_space<vmem>>, %arg3: memref<768x196xf32, #tpu.memory_space<vmem>>, %arg4: memref<192x768xf32, #tpu.memory_space<vmem>>, %arg5: memref<192x1xf32, #tpu.memory_space<vmem>>, %arg6: memref<192x1xf32, #tpu.memory_space<vmem>>, %arg7: memref<192x196xf32, #tpu.memory_space<vmem>>) attributes {dimension_semantics = [], scalar_prefetch = 0 : i64, scratch_operands = 0 : i64, tpu.core_type = #tpu.core_type<tc>} {
    %c0 = arith.constant 0 : index
    %c0_0 = arith.constant 0 : index
    %0 = vector.load %arg1[%c0, %c0_0] : memref<768x48xf32, #tpu.memory_space<vmem>>, vector<768x48xf32>
    %c0_1 = arith.constant 0 : index
    %c0_2 = arith.constant 0 : index
    %1 = vector.load %arg0[%c0_1, %c0_2] : memref<48x1xf32, #tpu.memory_space<vmem>>, vector<48x1xf32>
    %cst = arith.constant dense<0.000000e+00> : vector<768x1xf32>
    %2 = tpu.matmul %0, %1, %cst {dimension_numbers = #tpu.dot_dimension_numbers<[1], [0], [0], [1], [0, 0, 1, 1], [], []>} : vector<768x48xf32>, vector<48x1xf32>, vector<768x1xf32> -> vector<768x1xf32>
    %c0_3 = arith.constant 0 : index
    %c0_4 = arith.constant 0 : index
    %3 = vector.load %arg2[%c0_3, %c0_4] : memref<768x1xf32, #tpu.memory_space<vmem>>, vector<768x1xf32>
    %4 = arith.addf %2, %3 : vector<768x1xf32>
    %5 = arith.negf %4 : vector<768x1xf32>
    %6 = math.exp %5 : vector<768x1xf32>
    %cst_5 = arith.constant 1.000000e+00 : f32
    %7 = vector.broadcast %cst_5 : f32 to vector<768x1xf32>
    %8 = arith.addf %7, %6 : vector<768x1xf32>
    %9 = arith.divf %7, %8 : vector<768x1xf32>
    %c0_6 = arith.constant 0 : index
    %c0_7 = arith.constant 0 : index
    %10 = vector.load %arg3[%c0_6, %c0_7] : memref<768x196xf32, #tpu.memory_space<vmem>>, vector<768x196xf32>
    %11 = vector.broadcast %9 : vector<768x1xf32> to vector<768x196xf32>
    %12 = arith.mulf %10, %11 : vector<768x196xf32>
    %c0_8 = arith.constant 0 : index
    %c0_9 = arith.constant 0 : index
    %13 = vector.load %arg4[%c0_8, %c0_9] : memref<192x768xf32, #tpu.memory_space<vmem>>, vector<192x768xf32>
    %cst_10 = arith.constant dense<0.000000e+00> : vector<192x196xf32>
    %14 = tpu.matmul %13, %12, %cst_10 {dimension_numbers = #tpu.dot_dimension_numbers<[1], [0], [0], [1], [0, 0, 1, 1], [], []>} : vector<192x768xf32>, vector<768x196xf32>, vector<192x196xf32> -> vector<192x196xf32>
    %cst_11 = arith.constant dense<0.000000e+00> : vector<192xf32>
    %15 = vector.multi_reduction <add>, %14, %cst_11 [1] : vector<192x196xf32> to vector<192xf32>
    %16 = vector.shape_cast %15 : vector<192xf32> to vector<192x1xf32>
    %17 = arith.mulf %14, %14 : vector<192x196xf32>
    %cst_12 = arith.constant dense<0.000000e+00> : vector<192xf32>
    %18 = vector.multi_reduction <add>, %17, %cst_12 [1] : vector<192x196xf32> to vector<192xf32>
    %19 = vector.shape_cast %18 : vector<192xf32> to vector<192x1xf32>
    %cst_13 = arith.constant 0.00510204071 : f32
    %20 = vector.broadcast %cst_13 : f32 to vector<192x1xf32>
    %21 = arith.mulf %16, %20 : vector<192x1xf32>
    %cst_14 = arith.constant 0.00510204071 : f32
    %22 = vector.broadcast %cst_14 : f32 to vector<192x1xf32>
    %23 = arith.mulf %19, %22 : vector<192x1xf32>
    %24 = arith.mulf %21, %21 : vector<192x1xf32>
    %25 = arith.subf %23, %24 : vector<192x1xf32>
    %cst_15 = arith.constant 1.000000e-03 : f32
    %26 = vector.broadcast %cst_15 : f32 to vector<192x1xf32>
    %27 = arith.addf %25, %26 : vector<192x1xf32>
    %28 = math.rsqrt %27 : vector<192x1xf32>
    %29 = vector.broadcast %21 : vector<192x1xf32> to vector<192x196xf32>
    %30 = arith.subf %14, %29 : vector<192x196xf32>
    %31 = vector.broadcast %28 : vector<192x1xf32> to vector<192x196xf32>
    %32 = arith.mulf %30, %31 : vector<192x196xf32>
    %c0_16 = arith.constant 0 : index
    %c0_17 = arith.constant 0 : index
    %33 = vector.load %arg5[%c0_16, %c0_17] : memref<192x1xf32, #tpu.memory_space<vmem>>, vector<192x1xf32>
    %34 = vector.broadcast %33 : vector<192x1xf32> to vector<192x196xf32>
    %35 = arith.mulf %32, %34 : vector<192x196xf32>
    %c0_18 = arith.constant 0 : index
    %c0_19 = arith.constant 0 : index
    %36 = vector.load %arg6[%c0_18, %c0_19] : memref<192x1xf32, #tpu.memory_space<vmem>>, vector<192x1xf32>
    %37 = vector.broadcast %36 : vector<192x1xf32> to vector<192x196xf32>
    %38 = arith.addf %35, %37 : vector<192x196xf32>
    %c0_20 = arith.constant 0 : index
    %c0_21 = arith.constant 0 : index
    %39 = vector.load %arg7[%c0_20, %c0_21] : memref<192x196xf32, #tpu.memory_space<vmem>>, vector<192x196xf32>
    tpu.vector_store %arg7[%c0_20, %c0_21], %38 {strides = array<i32>} : memref<192x196xf32, #tpu.memory_space<vmem>>, vector<192x196xf32>,
    return
  }
}

</mosaic_0001>

<llo_original>
// kernel: tpu_custom_call.1
$region0: #{tpu_custom_call.1}
  #allocation0 [shape = 'u32[]', space=smem, size = 0x4, offset = 0x4, fixed_abs, tag = 'smem constant byte address 0x4 - core index']
  #allocation1 [shape = 'u32[144,128]{1,0:T(1,128)}', space=vmem, size = 0x12000, scoped, tag = 'internal scratch']
  %s0 = inlined_call_operand.vmem [shape: f32[48,1], index: 0, kind: input, shape index: {}]
  %s1 = inlined_call_operand.vmem [shape: f32[768,48], index: 1, kind: input, shape index: {}]
  %s2 = inlined_call_operand.vmem [shape: f32[768,1], index: 2, kind: input, shape index: {}]
  %s3 = inlined_call_operand.vmem [shape: f32[768,196], index: 3, kind: input, shape index: {}]
  %s4 = inlined_call_operand.vmem [shape: f32[192,768], index: 4, kind: input, shape index: {}]
  %s5 = inlined_call_operand.vmem [shape: f32[192,1], index: 5, kind: input, shape index: {}]
  %s6 = inlined_call_operand.vmem [shape: f32[192,1], index: 6, kind: input, shape index: {}]
  %s7 = inlined_call_operand.hbm [shape: f32[192,196], index: 7, kind: output, shape index: {}]
  %s8 = sld [smem:[#allocation0]]
  $region38: #{tpu_custom_call.1} parent=0
    _
  %s10 = ssub.s32 1, %s8
  %s11 = scalar_select 0, %s10, %s8
  $region1: #{tpu_custom_call.1} parent=0
    #allocation2 [shape = 'u8[196608]{0}', space=vmem, size = 0x30000, scoped, tag = 'output window, operand 0, single buffered']
    #allocation3 [shape = 's32[1]{0}', space=sflag, size = 0x4, scoped, tag = 'scoped memory for tpu_custom_call.1']
    %12 = vsyncpa [#allocation3], 0
    // Predicated region
    $region2: #{tpu_custom_call.1} parent=1 // pred_check
      _
    $region3: #{tpu_custom_call.1} parent=1 // pred_check_branch
      %14 = sbr.rel (0) target = $region5
    $region4: #{tpu_custom_call.1} parent=1 // pred_region
      _
    $region5: #{tpu_custom_call.1} parent=1 // pred_fallthru
      _
    // Predicated region
    $region6: #{tpu_custom_call.1} parent=1 // pred_check
      _
    $region7: #{tpu_custom_call.1} parent=1 // pred_check_branch
      %16 = sbr.rel (0) target = $region9
    $region8: #{tpu_custom_call.1} parent=1 // pred_region
      _
    $region9: #{tpu_custom_call.1} parent=1 // pred_fallthru
      _
    // Predicated region
    $region10: #{tpu_custom_call.1} parent=1 // pred_check
      _
    $region11: #{tpu_custom_call.1} parent=1 // pred_check_branch
      %18 = sbr.rel (0) target = $region13
    $region12: #{tpu_custom_call.1} parent=1 // pred_region
      _
    $region13: #{tpu_custom_call.1} parent=1 // pred_fallthru
      _
    // Predicated region
    $region14: #{tpu_custom_call.1} parent=1 // pred_check
      _
    $region15: #{tpu_custom_call.1} parent=1 // pred_check_branch
      %20 = sbr.rel (0) target = $region17
    $region16: #{tpu_custom_call.1} parent=1 // pred_region
      _
    $region17: #{tpu_custom_call.1} parent=1 // pred_fallthru
      _
    // Predicated region
    $region18: #{tpu_custom_call.1} parent=1 // pred_check
      _
    $region19: #{tpu_custom_call.1} parent=1 // pred_check_branch
      %22 = sbr.rel (0) target = $region21
    $region20: #{tpu_custom_call.1} parent=1 // pred_region
      _
    $region21: #{tpu_custom_call.1} parent=1 // pred_fallthru
      _
    // Predicated region
    $region22: #{tpu_custom_call.1} parent=1 // pred_check
      _
    $region23: #{tpu_custom_call.1} parent=1 // pred_check_branch
      %24 = sbr.rel (0) target = $region25
    $region24: #{tpu_custom_call.1} parent=1 // pred_region
      _
    $region25: #{tpu_custom_call.1} parent=1 // pred_fallthru
      _
    // Predicated region
    $region26: #{tpu_custom_call.1} parent=1 // pred_check
      _
    $region27: #{tpu_custom_call.1} parent=1 // pred_check_branch
      %26 = sbr.rel (0) target = $region29
    $region28: #{tpu_custom_call.1} parent=1 // pred_region
      _
    $region29: #{tpu_custom_call.1} parent=1 // pred_fallthru
      _
    %v27 = vld [vmem:[%s1] sm:$0xff]
    %v28 = vld [vmem:[%s1 + $0x8] sm:$0xff]
    %v29 = vld [vmem:[%s1 + $0x10] sm:$0xff]
    %v30 = vld [vmem:[%s1 + $0x18] sm:$0xff]
    %v31 = vld [vmem:[%s1 + $0x20] sm:$0xff]
    %v32 = vld [vmem:[%s1 + $0x28] sm:$0xff]
    %v33 = vld [vmem:[%s1 + $0x30] sm:$0xff]
    %v34 = vld [vmem:[%s1 + $0x38] sm:$0xff]
    %v35 = vld [vmem:[%s1 + $0x40] sm:$0xff]
    %v36 = vld [vmem:[%s1 + $0x48] sm:$0xff]
    %v37 = vld [vmem:[%s1 + $0x50] sm:$0xff]
    %v38 = vld [vmem:[%s1 + $0x58] sm:$0xff]
    %v39 = vld [vmem:[%s1 + $0x60] sm:$0xff]
    %v40 = vld [vmem:[%s1 + $0x68] sm:$0xff]
    %v41 = vld [vmem:[%s1 + $0x70] sm:$0xff]
    %v42 = vld [vmem:[%s1 + $0x78] sm:$0xff]
    %v43 = vld [vmem:[%s1 + $0x80] sm:$0xff]
    %v44 = vld [vmem:[%s1 + $0x88] sm:$0xff]
    %v45 = vld [vmem:[%s1 + $0x90] sm:$0xff]
    %v46 = vld [vmem:[%s1 + $0x98] sm:$0xff]
    %v47 = vld [vmem:[%s1 + $0xa0] sm:$0xff]
    %v48 = vld [vmem:[%s1 + $0xa8] sm:$0xff]
    %v49 = vld [vmem:[%s1 + $0xb0] sm:$0xff]
    %v50 = vld [vmem:[%s1 + $0xb8] sm:$0xff]
    %v51 = vld [vmem:[%s1 + $0xc0] sm:$0xff]
    %v52 = vld [vmem:[%s1 + $0xc8] sm:$0xff]
    %v53 = vld [vmem:[%s1 + $0xd0] sm:$0xff]
    %v54 = vld [vmem:[%s1 + $0xd8] sm:$0xff]
    %v55 = vld [vmem:[%s1 + $0xe0] sm:$0xff]
    %v56 = vld [vmem:[%s1 + $0xe8] sm:$0xff]
    %v57 = vld [vmem:[%s1 + $0xf0] sm:$0xff]
    %v58 = vld [vmem:[%s1 + $0xf8] sm:$0xff]
    %v59 = vld [vmem:[%s1 + $0x100] sm:$0xff]
    %v60 = vld [vmem:[%s1 + $0x108] sm:$0xff]
    %v61 = vld [vmem:[%s1 + $0x110] sm:$0xff]
    %v62 = vld [vmem:[%s1 + $0x118] sm:$0xff]
    %v63 = vld [vmem:[%s1 + $0x120] sm:$0xff]
    %v64 = vld [vmem:[%s1 + $0x128] sm:$0xff]
    %v65 = vld [vmem:[%s1 + $0x130] sm:$0xff]
    %v66 = vld [vmem:[%s1 + $0x138] sm:$0xff]
    %v67 = vld [vmem:[%s1 + $0x140] sm:$0xff]
    %v68 = vld [vmem:[%s1 + $0x148] sm:$0xff]
    %v69 = vld [vmem:[%s1 + $0x150] sm:$0xff]
    %v70 = vld [vmem:[%s1 + $0x158] sm:$0xff]
    %v71 = vld [vmem:[%s1 + $0x160] sm:$0xff]
    %v72 = vld [vmem:[%s1 + $0x168] sm:$0xff]
    %v73 = vld [vmem:[%s1 + $0x170] sm:$0xff]
    %v74 = vld [vmem:[%s1 + $0x178] sm:$0xff]
    %v75 = vld [vmem:[%s1 + $0x180] sm:$0xff]
    %v76 = vld [vmem:[%s1 + $0x188] sm:$0xff]
    %v77 = vld [vmem:[%s1 + $0x190] sm:$0xff]
    %v78 = vld [vmem:[%s1 + $0x198] sm:$0xff]
    %v79 = vld [vmem:[%s1 + $0x1a0] sm:$0xff]
    %v80 = vld [vmem:[%s1 + $0x1a8] sm:$0xff]
    %v81 = vld [vmem:[%s1 + $0x1b0] sm:$0xff]
    %v82 = vld [vmem:[%s1 + $0x1b8] sm:$0xff]
    %v83 = vld [vmem:[%s1 + $0x1c0] sm:$0xff]
    %v84 = vld [vmem:[%s1 + $0x1c8] sm:$0xff]
    %v85 = vld [vmem:[%s1 + $0x1d0] sm:$0xff]
    %v86 = vld [vmem:[%s1 + $0x1d8] sm:$0xff]
    %v87 = vld [vmem:[%s1 + $0x1e0] sm:$0xff]
    %v88 = vld [vmem:[%s1 + $0x1e8] sm:$0xff]
    %v89 = vld [vmem:[%s1 + $0x1f0] sm:$0xff]
    %v90 = vld [vmem:[%s1 + $0x1f8] sm:$0xff]
    %v91 = vld [vmem:[%s1 + $0x200] sm:$0xff]
    %v92 = vld [vmem:[%s1 + $0x208] sm:$0xff]
    %v93 = vld [vmem:[%s1 + $0x210] sm:$0xff]
    %v94 = vld [vmem:[%s1 + $0x218] sm:$0xff]
    %v95 = vld [vmem:[%s1 + $0x220] sm:$0xff]
    %v96 = vld [vmem:[%s1 + $0x228] sm:$0xff]
    %v97 = vld [vmem:[%s1 + $0x230] sm:$0xff]
    %v98 = vld [vmem:[%s1 + $0x238] sm:$0xff]
    %v99 = vld [vmem:[%s1 + $0x240] sm:$0xff]
    %v100 = vld [vmem:[%s1 + $0x248] sm:$0xff]
    %v101 = vld [vmem:[%s1 + $0x250] sm:$0xff]
    %v102 = vld [vmem:[%s1 + $0x258] sm:$0xff]
    %v103 = vld [vmem:[%s1 + $0x260] sm:$0xff]
    %v104 = vld [vmem:[%s1 + $0x268] sm:$0xff]
    %v105 = vld [vmem:[%s1 + $0x270] sm:$0xff]
    %v106 = vld [vmem:[%s1 + $0x278] sm:$0xff]
    %v107 = vld [vmem:[%s1 + $0x280] sm:$0xff]
    %v108 = vld [vmem:[%s1 + $0x288] sm:$0xff]
    %v109 = vld [vmem:[%s1 + $0x290] sm:$0xff]
    %v110 = vld [vmem:[%s1 + $0x298] sm:$0xff]
    %v111 = vld [vmem:[%s1 + $0x2a0] sm:$0xff]
    %v112 = vld [vmem:[%s1 + $0x2a8] sm:$0xff]
    %v113 = vld [vmem:[%s1 + $0x2b0] sm:$0xff]
    %v114 = vld [vmem:[%s1 + $0x2b8] sm:$0xff]
    %v115 = vld [vmem:[%s1 + $0x2c0] sm:$0xff]
    %v116 = vld [vmem:[%s1 + $0x2c8] sm:$0xff]
    %v117 = vld [vmem:[%s1 + $0x2d0] sm:$0xff]
    %v118 = vld [vmem:[%s1 + $0x2d8] sm:$0xff]
    %v119 = vld [vmem:[%s1 + $0x2e0] sm:$0xff]
    %v120 = vld [vmem:[%s1 + $0x2e8] sm:$0xff]
    %v121 = vld [vmem:[%s1 + $0x2f0] sm:$0xff]
    %v122 = vld [vmem:[%s1 + $0x2f8] sm:$0xff]
    %v123 = vld [vmem:[%s0] sm:$0xff]
    %v124 = vld [vmem:[%s0 + $0x8] sm:$0xff]
    %v125 = vld [vmem:[%s0 + $0x10] sm:$0xff]
    %v126 = vld [vmem:[%s0 + $0x18] sm:$0xff]
    %v127 = vld [vmem:[%s0 + $0x20] sm:$0xff]
    %v128 = vld [vmem:[%s0 + $0x28] sm:$0xff]
    %v129 = vld [vmem:[%s2] sm:$0xff]
    %v130 = vld [vmem:[%s2 + $0x8] sm:$0xff]
    %v131 = vld [vmem:[%s2 + $0x10] sm:$0xff]
    %v132 = vld [vmem:[%s2 + $0x18] sm:$0xff]
    %v133 = vld [vmem:[%s2 + $0x20] sm:$0xff]
    %v134 = vld [vmem:[%s2 + $0x28] sm:$0xff]
    %v135 = vld [vmem:[%s2 + $0x30] sm:$0xff]
    %v136 = vld [vmem:[%s2 + $0x38] sm:$0xff]
    %v137 = vld [vmem:[%s2 + $0x40] sm:$0xff]
    %v138 = vld [vmem:[%s2 + $0x48] sm:$0xff]
    %v139 = vld [vmem:[%s2 + $0x50] sm:$0xff]
    %v140 = vld [vmem:[%s2 + $0x58] sm:$0xff]
    %v141 = vld [vmem:[%s2 + $0x60] sm:$0xff]
    %v142 = vld [vmem:[%s2 + $0x68] sm:$0xff]
    %v143 = vld [vmem:[%s2 + $0x70] sm:$0xff]
    %v144 = vld [vmem:[%s2 + $0x78] sm:$0xff]
    %v145 = vld [vmem:[%s2 + $0x80] sm:$0xff]
    %v146 = vld [vmem:[%s2 + $0x88] sm:$0xff]
    %v147 = vld [vmem:[%s2 + $0x90] sm:$0xff]
    %v148 = vld [vmem:[%s2 + $0x98] sm:$0xff]
    %v149 = vld [vmem:[%s2 + $0xa0] sm:$0xff]
    %v150 = vld [vmem:[%s2 + $0xa8] sm:$0xff]
    %v151 = vld [vmem:[%s2 + $0xb0] sm:$0xff]
    %v152 = vld [vmem:[%s2 + $0xb8] sm:$0xff]
    %v153 = vld [vmem:[%s2 + $0xc0] sm:$0xff]
    %v154 = vld [vmem:[%s2 + $0xc8] sm:$0xff]
    %v155 = vld [vmem:[%s2 + $0xd0] sm:$0xff]
    %v156 = vld [vmem:[%s2 + $0xd8] sm:$0xff]
    %v157 = vld [vmem:[%s2 + $0xe0] sm:$0xff]
    %v158 = vld [vmem:[%s2 + $0xe8] sm:$0xff]
    %v159 = vld [vmem:[%s2 + $0xf0] sm:$0xff]
    %v160 = vld [vmem:[%s2 + $0xf8] sm:$0xff]
    %v161 = vld [vmem:[%s2 + $0x100] sm:$0xff]
    %v162 = vld [vmem:[%s2 + $0x108] sm:$0xff]
    %v163 = vld [vmem:[%s2 + $0x110] sm:$0xff]
    %v164 = vld [vmem:[%s2 + $0x118] sm:$0xff]
    %v165 = vld [vmem:[%s2 + $0x120] sm:$0xff]
    %v166 = vld [vmem:[%s2 + $0x128] sm:$0xff]
    %v167 = vld [vmem:[%s2 + $0x130] sm:$0xff]
    %v168 = vld [vmem:[%s2 + $0x138] sm:$0xff]
    %v169 = vld [vmem:[%s2 + $0x140] sm:$0xff]
    %v170 = vld [vmem:[%s2 + $0x148] sm:$0xff]
    %v171 = vld [vmem:[%s2 + $0x150] sm:$0xff]
    %v172 = vld [vmem:[%s2 + $0x158] sm:$0xff]
    %v173 = vld [vmem:[%s2 + $0x160] sm:$0xff]
    %v174 = vld [vmem:[%s2 + $0x168] sm:$0xff]
    %v175 = vld [vmem:[%s2 + $0x170] sm:$0xff]
    %v176 = vld [vmem:[%s2 + $0x178] sm:$0xff]
    %v177 = vld [vmem:[%s2 + $0x180] sm:$0xff]
    %v178 = vld [vmem:[%s2 + $0x188] sm:$0xff]
    %v179 = vld [vmem:[%s2 + $0x190] sm:$0xff]
    %v180 = vld [vmem:[%s2 + $0x198] sm:$0xff]
    %v181 = vld [vmem:[%s2 + $0x1a0] sm:$0xff]
    %v182 = vld [vmem:[%s2 + $0x1a8] sm:$0xff]
    %v183 = vld [vmem:[%s2 + $0x1b0] sm:$0xff]
    %v184 = vld [vmem:[%s2 + $0x1b8] sm:$0xff]
    %v185 = vld [vmem:[%s2 + $0x1c0] sm:$0xff]
    %v186 = vld [vmem:[%s2 + $0x1c8] sm:$0xff]
    %v187 = vld [vmem:[%s2 + $0x1d0] sm:$0xff]
    %v188 = vld [vmem:[%s2 + $0x1d8] sm:$0xff]
    %v189 = vld [vmem:[%s2 + $0x1e0] sm:$0xff]
    %v190 = vld [vmem:[%s2 + $0x1e8] sm:$0xff]
    %v191 = vld [vmem:[%s2 + $0x1f0] sm:$0xff]
    %v192 = vld [vmem:[%s2 + $0x1f8] sm:$0xff]
    %v193 = vld [vmem:[%s2 + $0x200] sm:$0xff]
    %v194 = vld [vmem:[%s2 + $0x208] sm:$0xff]
    %v195 = vld [vmem:[%s2 + $0x210] sm:$0xff]
    %v196 = vld [vmem:[%s2 + $0x218] sm:$0xff]
    %v197 = vld [vmem:[%s2 + $0x220] sm:$0xff]
    %v198 = vld [vmem:[%s2 + $0x228] sm:$0xff]
    %v199 = vld [vmem:[%s2 + $0x230] sm:$0xff]
    %v200 = vld [vmem:[%s2 + $0x238] sm:$0xff]
    %v201 = vld [vmem:[%s2 + $0x240] sm:$0xff]
    %v202 = vld [vmem:[%s2 + $0x248] sm:$0xff]
    %v203 = vld [vmem:[%s2 + $0x250] sm:$0xff]
    %v204 = vld [vmem:[%s2 + $0x258] sm:$0xff]
    %v205 = vld [vmem:[%s2 + $0x260] sm:$0xff]
    %v206 = vld [vmem:[%s2 + $0x268] sm:$0xff]
    %v207 = vld [vmem:[%s2 + $0x270] sm:$0xff]
    %v208 = vld [vmem:[%s2 + $0x278] sm:$0xff]
    %v209 = vld [vmem:[%s2 + $0x280] sm:$0xff]
    %v210 = vld [vmem:[%s2 + $0x288] sm:$0xff]
    %v211 = vld [vmem:[%s2 + $0x290] sm:$0xff]
    %v212 = vld [vmem:[%s2 + $0x298] sm:$0xff]
    %v213 = vld [vmem:[%s2 + $0x2a0] sm:$0xff]
    %v214 = vld [vmem:[%s2 + $0x2a8] sm:$0xff]
    %v215 = vld [vmem:[%s2 + $0x2b0] sm:$0xff]
    %v216 = vld [vmem:[%s2 + $0x2b8] sm:$0xff]
    %v217 = vld [vmem:[%s2 + $0x2c0] sm:$0xff]
    %v218 = vld [vmem:[%s2 + $0x2c8] sm:$0xff]
    %v219 = vld [vmem:[%s2 + $0x2d0] sm:$0xff]
    %v220 = vld [vmem:[%s2 + $0x2d8] sm:$0xff]
    %v221 = vld [vmem:[%s2 + $0x2e0] sm:$0xff]
    %v222 = vld [vmem:[%s2 + $0x2e8] sm:$0xff]
    %v223 = vld [vmem:[%s2 + $0x2f0] sm:$0xff]
    %v224 = vld [vmem:[%s2 + $0x2f8] sm:$0xff]
    %vm225 = vcmask 392192
    %v227 = vsel %vm225, %v27, 0
    %v230 = vsel %vm225, %v28, 0
    %v233 = vsel %vm225, %v29, 0
    %v236 = vsel %vm225, %v30, 0
    %v239 = vsel %vm225, %v31, 0
    %v242 = vsel %vm225, %v32, 0
    %v245 = vsel %vm225, %v33, 0
    %v248 = vsel %vm225, %v34, 0
    %v251 = vsel %vm225, %v35, 0
    %v254 = vsel %vm225, %v36, 0
    %v257 = vsel %vm225, %v37, 0
    %v260 = vsel %vm225, %v38, 0
    %v263 = vsel %vm225, %v39, 0
    %v266 = vsel %vm225, %v40, 0
    %v269 = vsel %vm225, %v41, 0
    %v272 = vsel %vm225, %v42, 0
    %v275 = vsel %vm225, %v43, 0
    %v278 = vsel %vm225, %v44, 0
    %v281 = vsel %vm225, %v45, 0
    %v284 = vsel %vm225, %v46, 0
    %v287 = vsel %vm225, %v47, 0
    %v290 = vsel %vm225, %v48, 0
    %v293 = vsel %vm225, %v49, 0
    %v296 = vsel %vm225, %v50, 0
    %v299 = vsel %vm225, %v51, 0
    %v302 = vsel %vm225, %v52, 0
    %v305 = vsel %vm225, %v53, 0
    %v308 = vsel %vm225, %v54, 0
    %v311 = vsel %vm225, %v55, 0
    %v314 = vsel %vm225, %v56, 0
    %v317 = vsel %vm225, %v57, 0
    %v320 = vsel %vm225, %v58, 0
    %v323 = vsel %vm225, %v59, 0
    %v326 = vsel %vm225, %v60, 0
    %v329 = vsel %vm225, %v61, 0
    %v332 = vsel %vm225, %v62, 0
    %v335 = vsel %vm225, %v63, 0
    %v338 = vsel %vm225, %v64, 0
    %v341 = vsel %vm225, %v65, 0
    %v344 = vsel %vm225, %v66, 0
    %v347 = vsel %vm225, %v67, 0
    %v350 = vsel %vm225, %v68, 0
    %v353 = vsel %vm225, %v69, 0
    %v356 = vsel %vm225, %v70, 0
    %v359 = vsel %vm225, %v71, 0
    %v362 = vsel %vm225, %v72, 0
    %v365 = vsel %vm225, %v73, 0
    %v368 = vsel %vm225, %v74, 0
    %v371 = vsel %vm225, %v75, 0
    %v374 = vsel %vm225, %v76, 0
    %v377 = vsel %vm225, %v77, 0
    %v380 = vsel %vm225, %v78, 0
    %v383 = vsel %vm225, %v79, 0
    %v386 = vsel %vm225, %v80, 0
    %v389 = vsel %vm225, %v81, 0
    %v392 = vsel %vm225, %v82, 0
    %v395 = vsel %vm225, %v83, 0
    %v398 = vsel %vm225, %v84, 0
    %v401 = vsel %vm225, %v85, 0
    %v404 = vsel %vm225, %v86, 0
    %v407 = vsel %vm225, %v87, 0
    %v410 = vsel %vm225, %v88, 0
    %v413 = vsel %vm225, %v89, 0
    %v416 = vsel %vm225, %v90, 0
    %v419 = vsel %vm225, %v91, 0
    %v422 = vsel %vm225, %v92, 0
    %v425 = vsel %vm225, %v93, 0
    %v428 = vsel %vm225, %v94, 0
    %v431 = vsel %vm225, %v95, 0
    %v434 = vsel %vm225, %v96, 0
    %v437 = vsel %vm225, %v97, 0
    %v440 = vsel %vm225, %v98, 0
    %v443 = vsel %vm225, %v99, 0
    %v446 = vsel %vm225, %v100, 0
    %v449 = vsel %vm225, %v101, 0
    %v452 = vsel %vm225, %v102, 0
    %v455 = vsel %vm225, %v103, 0
    %v458 = vsel %vm225, %v104, 0
    %v461 = vsel %vm225, %v105, 0
    %v464 = vsel %vm225, %v106, 0
    %v467 = vsel %vm225, %v107, 0
    %v470 = vsel %vm225, %v108, 0
    %v473 = vsel %vm225, %v109, 0
    %v476 = vsel %vm225, %v110, 0
    %v479 = vsel %vm225, %v111, 0
    %v482 = vsel %vm225, %v112, 0
    %v485 = vsel %vm225, %v113, 0
    %v488 = vsel %vm225, %v114, 0
    %v491 = vsel %vm225, %v115, 0
    %v494 = vsel %vm225, %v116, 0
    %v497 = vsel %vm225, %v117, 0
    %v500 = vsel %vm225, %v118, 0
    %v503 = vsel %vm225, %v119, 0
    %v506 = vsel %vm225, %v120, 0
    %v509 = vsel %vm225, %v121, 0
    %v512 = vsel %vm225, %v122, 0
    %514 = vmatprep.subr.mxu0 0.0
    %515 = vmatpush1.msra.mxu0 %v123
    %516 = vmatprep.subr.mxu0 0.0
    %517 = vmatpush1.msra.mxu0 %v124
    %518 = vmatprep.subr.mxu0 0.0
    %519 = vmatpush1.msra.mxu0 %v125
    %520 = vmatprep.subr.mxu0 0.0
    %521 = vmatpush1.msra.mxu0 %v126
    %522 = vmatprep.subr.mxu0 0.0
    %523 = vmatpush1.msra.mxu0 %v127
    %524 = vmatprep.subr.mxu0 0.0
    %525 = vmatpush1.msra.mxu0 %v128
    %526 = vmatprep.subr.mxu0 0.0
    %527 = vmatpush1.msra.mxu0 0.0
    %528 = vmatprep.subr.mxu0 0.0
    %529 = vmatpush1.msra.mxu0 0.0
    %530 = vmatprep.subr.mxu0 0.0
    %531 = vmatpush1.msra.mxu0 0.0
    %532 = vmatprep.subr.mxu0 0.0
    %533 = vmatpush1.msra.mxu0 0.0
    %534 = vmatprep.subr.mxu0 0.0
    %535 = vmatpush1.msra.mxu0 0.0
    %536 = vmatprep.subr.mxu0 0.0
    %537 = vmatpush1.msra.mxu0 0.0
    %538 = vmatprep.subr.mxu0 0.0
    %539 = vmatpush1.msra.mxu0 0.0
    %540 = vmatprep.subr.mxu0 0.0
    %541 = vmatpush1.msra.mxu0 0.0
    %542 = vmatprep.subr.mxu0 0.0
    %543 = vmatpush1.msra.mxu0 0.0
    %544 = vmatprep.subr.mxu0 0.0
    %545 = vmatpush1.msra.mxu0 0.0
    %546 = vmatprep.subr.mxu0 0.0
    %547 = vmatpush1.msra.mxu0 0.0
    %548 = vmatprep.subr.mxu0 0.0
    %549 = vmatpush1.msra.mxu0 0.0
    %550 = vmatprep.subr.mxu0 0.0
    %551 = vmatpush1.msra.mxu0 0.0
    %552 = vmatprep.subr.mxu0 0.0
    %553 = vmatpush1.msra.mxu0 0.0
    %554 = vmatprep.subr.mxu0 0.0
    %555 = vmatpush1.msra.mxu0 0.0
    %556 = vmatprep.subr.mxu0 0.0
    %557 = vmatpush1.msra.mxu0 0.0
    %558 = vmatprep.subr.mxu0 0.0
    %559 = vmatpush1.msra.mxu0 0.0
    %560 = vmatprep.subr.mxu0 0.0
    %561 = vmatpush1.msra.mxu0 0.0
    %562 = vmatprep.subr.mxu0 0.0
    %563 = vmatpush1.msra.mxu0 0.0
    %564 = vmatprep.subr.mxu0 0.0
    %565 = vmatpush1.msra.mxu0 0.0
    %566 = vmatprep.subr.mxu0 0.0
    %567 = vmatpush1.msra.mxu0 0.0
    %568 = vmatprep.subr.mxu0 0.0
    %569 = vmatpush1.msra.mxu0 0.0
    %570 = vmatprep.subr.mxu0 0.0
    %571 = vmatpush1.msra.mxu0 0.0
    %572 = vmatprep.subr.mxu0 0.0
    %573 = vmatpush1.msra.mxu0 0.0
    %574 = vmatprep.subr.mxu0 0.0
    %575 = vmatpush1.msra.mxu0 0.0
    %576 = vmatprep.subr.mxu0 0.0
    %577 = vmatpush1.msra.mxu0 0.0
    %578 = vmatprep.mubr.f32.mxu0 0.0
    %579 = vmatmul.mubr.f32.gmra.mrb[0].mxu0 %v227
    %v580 = vpop.f32.mrb[0].mxu0
    %v581 = vadd.f32 %v129, %v580
    %v582 = vpop.f32.mrb[0].mxu0
    %583 = vmatprep.mubr.f32.mxu0 0.0
    %584 = vmatmul.mubr.f32.gmra.mrb[0].mxu0 %v230
    %v585 = vpop.f32.mrb[0].mxu0
    %v586 = vadd.f32 %v130, %v585
    %v587 = vpop.f32.mrb[0].mxu0
    %588 = vmatprep.mubr.f32.mxu0 0.0
    %589 = vmatmul.mubr.f32.gmra.mrb[0].mxu0 %v233
    %v590 = vpop.f32.mrb[0].mxu0
    %v591 = vadd.f32 %v131, %v590
    %v592 = vpop.f32.mrb[0].mxu0
    %593 = vmatprep.mubr.f32.mxu0 0.0
    %594 = vmatmul.mubr.f32.gmra.mrb[0].mxu0 %v236
    %v595 = vpop.f32.mrb[0].mxu0
    %v596 = vadd.f32 %v132, %v595
    %v597 = vpop.f32.mrb[0].mxu0
    %598 = vmatprep.mubr.f32.mxu0 0.0
    %599 = vmatmul.mubr.f32.gmra.mrb[0].mxu0 %v239
    %v600 = vpop.f32.mrb[0].mxu0
    %v601 = vadd.f32 %v133, %v600
    %v602 = vpop.f32.mrb[0].mxu0
    %603 = vmatprep.mubr.f32.mxu0 0.0
    %604 = vmatmul.mubr.f32.gmra.mrb[0].mxu0 %v242
    %v605 = vpop.f32.mrb[0].mxu0
    %v606 = vadd.f32 %v134, %v605
    %v607 = vpop.f32.mrb[0].mxu0
    %608 = vmatprep.mubr.f32.mxu0 0.0
    %609 = vmatmul.mubr.f32.gmra.mrb[0].mxu0 %v245
    %v610 = vpop.f32.mrb[0].mxu0
    %v611 = vadd.f32 %v135, %v610
    %v612 = vpop.f32.mrb[0].mxu0
    %613 = vmatprep.mubr.f32.mxu0 0.0
    %614 = vmatmul.mubr.f32.gmra.mrb[0].mxu0 %v248
    %v615 = vpop.f32.mrb[0].mxu0
    %v616 = vadd.f32 %v136, %v615
    %v617 = vpop.f32.mrb[0].mxu0
    %618 = vmatprep.mubr.f32.mxu0 0.0
    %619 = vmatmul.mubr.f32.gmra.mrb[0].mxu0 %v251
    %v620 = vpop.f32.mrb[0].mxu0
    %v621 = vadd.f32 %v137, %v620
    %v622 = vpop.f32.mrb[0].mxu0
    %623 = vmatprep.mubr.f32.mxu0 0.0
    %624 = vmatmul.mubr.f32.gmra.mrb[0].mxu0 %v254
    %v625 = vpop.f32.mrb[0].mxu0
    %v626 = vadd.f32 %v138, %v625
    %v627 = vpop.f32.mrb[0].mxu0
    %628 = vmatprep.mubr.f32.mxu0 0.0
    %629 = vmatmul.mubr.f32.gmra.mrb[0].mxu0 %v257
    %v630 = vpop.f32.mrb[0].mxu0
    %v631 = vadd.f32 %v139, %v630
    %v632 = vpop.f32.mrb[0].mxu0
    %633 = vmatprep.mubr.f32.mxu0 0.0
    %634 = vmatmul.mubr.f32.gmra.mrb[0].mxu0 %v260
    %v635 = vpop.f32.mrb[0].mxu0
    %v636 = vadd.f32 %v140, %v635
    %v637 = vpop.f32.mrb[0].mxu0
    %638 = vmatprep.mubr.f32.mxu0 0.0
    %639 = vmatmul.mubr.f32.gmra.mrb[0].mxu0 %v263
    %v640 = vpop.f32.mrb[0].mxu0
    %v641 = vadd.f32 %v141, %v640
    %v642 = vpop.f32.mrb[0].mxu0
    %643 = vmatprep.mubr.f32.mxu0 0.0
    %644 = vmatmul.mubr.f32.gmra.mrb[0].mxu0 %v266
    %v645 = vpop.f32.mrb[0].mxu0
    %v646 = vadd.f32 %v142, %v645
    %v647 = vpop.f32.mrb[0].mxu0
    %648 = vmatprep.mubr.f32.mxu0 0.0
    %649 = vmatmul.mubr.f32.gmra.mrb[0].mxu0 %v269
    %v650 = vpop.f32.mrb[0].mxu0
    %v651 = vadd.f32 %v143, %v650
    %v652 = vpop.f32.mrb[0].mxu0
    %653 = vmatprep.mubr.f32.mxu0 0.0
    %654 = vmatmul.mubr.f32.gmra.mrb[0].mxu0 %v272
    %v655 = vpop.f32.mrb[0].mxu0
    %v656 = vadd.f32 %v144, %v655
    %v657 = vpop.f32.mrb[0].mxu0
    %658 = vmatprep.mubr.f32.mxu0 0.0
    %659 = vmatmul.mubr.f32.gmra.mrb[0].mxu0 %v275
    %v660 = vpop.f32.mrb[0].mxu0
    %v661 = vadd.f32 %v145, %v660
    %v662 = vpop.f32.mrb[0].mxu0
    %663 = vmatprep.mubr.f32.mxu0 0.0
    %664 = vmatmul.mubr.f32.gmra.mrb[0].mxu0 %v278
    %v665 = vpop.f32.mrb[0].mxu0
    %v666 = vadd.f32 %v146, %v665
    %v667 = vpop.f32.mrb[0].mxu0
    %668 = vmatprep.mubr.f32.mxu0 0.0
    %669 = vmatmul.mubr.f32.gmra.mrb[0].mxu0 %v281
    %v670 = vpop.f32.mrb[0].mxu0
    %v671 = vadd.f32 %v147, %v670
    %v672 = vpop.f32.mrb[0].mxu0
    %673 = vmatprep.mubr.f32.mxu0 0.0
    %674 = vmatmul.mubr.f32.gmra.mrb[0].mxu0 %v284
    %v675 = vpop.f32.mrb[0].mxu0
    %v676 = vadd.f32 %v148, %v675
    %v677 = vpop.f32.mrb[0].mxu0
    %678 = vmatprep.mubr.f32.mxu0 0.0
    %679 = vmatmul.mubr.f32.gmra.mrb[0].mxu0 %v287
    %v680 = vpop.f32.mrb[0].mxu0
    %v681 = vadd.f32 %v149, %v680
    %v682 = vpop.f32.mrb[0].mxu0
    %683 = vmatprep.mubr.f32.mxu0 0.0
    %684 = vmatmul.mubr.f32.gmra.mrb[0].mxu0 %v290
    %v685 = vpop.f32.mrb[0].mxu0
    %v686 = vadd.f32 %v150, %v685
    %v687 = vpop.f32.mrb[0].mxu0
    %688 = vmatprep.mubr.f32.mxu0 0.0
    %689 = vmatmul.mubr.f32.gmra.mrb[0].mxu0 %v293
    %v690 = vpop.f32.mrb[0].mxu0
    %v691 = vadd.f32 %v151, %v690
    %v692 = vpop.f32.mrb[0].mxu0
    %693 = vmatprep.mubr.f32.mxu0 0.0
    %694 = vmatmul.mubr.f32.gmra.mrb[0].mxu0 %v296
    %v695 = vpop.f32.mrb[0].mxu0
    %v696 = vadd.f32 %v152, %v695
    %v697 = vpop.f32.mrb[0].mxu0
    %698 = vmatprep.mubr.f32.mxu0 0.0
    %699 = vmatmul.mubr.f32.gmra.mrb[0].mxu0 %v299
    %v700 = vpop.f32.mrb[0].mxu0
    %v701 = vadd.f32 %v153, %v700
    %v702 = vpop.f32.mrb[0].mxu0
    %703 = vmatprep.mubr.f32.mxu0 0.0
    %704 = vmatmul.mubr.f32.gmra.mrb[0].mxu0 %v302
    %v705 = vpop.f32.mrb[0].mxu0
    %v706 = vadd.f32 %v154, %v705
    %v707 = vpop.f32.mrb[0].mxu0
    %708 = vmatprep.mubr.f32.mxu0 0.0
    %709 = vmatmul.mubr.f32.gmra.mrb[0].mxu0 %v305
    %v710 = vpop.f32.mrb[0].mxu0
    %v711 = vadd.f32 %v155, %v710
    %v712 = vpop.f32.mrb[0].mxu0
    %713 = vmatprep.mubr.f32.mxu0 0.0
    %714 = vmatmul.mubr.f32.gmra.mrb[0].mxu0 %v308
    %v715 = vpop.f32.mrb[0].mxu0
    %v716 = vadd.f32 %v156, %v715
    %v717 = vpop.f32.mrb[0].mxu0
    %718 = vmatprep.mubr.f32.mxu0 0.0
    %719 = vmatmul.mubr.f32.gmra.mrb[0].mxu0 %v311
    %v720 = vpop.f32.mrb[0].mxu0
    %v721 = vadd.f32 %v157, %v720
    %v722 = vpop.f32.mrb[0].mxu0
    %723 = vmatprep.mubr.f32.mxu0 0.0
    %724 = vmatmul.mubr.f32.gmra.mrb[0].mxu0 %v314
    %v725 = vpop.f32.mrb[0].mxu0
    %v726 = vadd.f32 %v158, %v725
    %v727 = vpop.f32.mrb[0].mxu0
    %728 = vmatprep.mubr.f32.mxu0 0.0
    %729 = vmatmul.mubr.f32.gmra.mrb[0].mxu0 %v317
    %v730 = vpop.f32.mrb[0].mxu0
    %v731 = vadd.f32 %v159, %v730
    %v732 = vpop.f32.mrb[0].mxu0
    %733 = vmatprep.mubr.f32.mxu0 0.0
    %734 = vmatmul.mubr.f32.gmra.mrb[0].mxu0 %v320
    %v735 = vpop.f32.mrb[0].mxu0
    %v736 = vadd.f32 %v160, %v735
    %v737 = vpop.f32.mrb[0].mxu0
    %738 = vmatprep.mubr.f32.mxu0 0.0
    %739 = vmatmul.mubr.f32.gmra.mrb[0].mxu0 %v323
    %v740 = vpop.f32.mrb[0].mxu0
    %v741 = vadd.f32 %v161, %v740
    %v742 = vpop.f32.mrb[0].mxu0
    %743 = vmatprep.mubr.f32.mxu0 0.0
    %744 = vmatmul.mubr.f32.gmra.mrb[0].mxu0 %v326
    %v745 = vpop.f32.mrb[0].mxu0
    %v746 = vadd.f32 %v162, %v745
    %v747 = vpop.f32.mrb[0].mxu0
    %748 = vmatprep.mubr.f32.mxu0 0.0
    %749 = vmatmul.mubr.f32.gmra.mrb[0].mxu0 %v329
    %v750 = vpop.f32.mrb[0].mxu0
    %v751 = vadd.f32 %v163, %v750
    %v752 = vpop.f32.mrb[0].mxu0
    %753 = vmatprep.mubr.f32.mxu0 0.0
    %754 = vmatmul.mubr.f32.gmra.mrb[0].mxu0 %v332
    %v755 = vpop.f32.mrb[0].mxu0
    %v756 = vadd.f32 %v164, %v755
    %v757 = vpop.f32.mrb[0].mxu0
    %758 = vmatprep.mubr.f32.mxu0 0.0
    %759 = vmatmul.mubr.f32.gmra.mrb[0].mxu0 %v335
    %v760 = vpop.f32.mrb[0].mxu0
    %v761 = vadd.f32 %v165, %v760
    %v762 = vpop.f32.mrb[0].mxu0
    %763 = vmatprep.mubr.f32.mxu0 0.0
    %764 = vmatmul.mubr.f32.gmra.mrb[0].mxu0 %v338
    %v765 = vpop.f32.mrb[0].mxu0
    %v766 = vadd.f32 %v166, %v765
    %v767 = vpop.f32.mrb[0].mxu0
    %768 = vmatprep.mubr.f32.mxu0 0.0
    %769 = vmatmul.mubr.f32.gmra.mrb[0].mxu0 %v341
    %v770 = vpop.f32.mrb[0].mxu0
    %v771 = vadd.f32 %v167, %v770
    %v772 = vpop.f32.mrb[0].mxu0
    %773 = vmatprep.mubr.f32.mxu0 0.0
    %774 = vmatmul.mubr.f32.gmra.mrb[0].mxu0 %v344
    %v775 = vpop.f32.mrb[0].mxu0
    %v776 = vadd.f32 %v168, %v775
    %v777 = vpop.f32.mrb[0].mxu0
    %778 = vmatprep.mubr.f32.mxu0 0.0
    %779 = vmatmul.mubr.f32.gmra.mrb[0].mxu0 %v347
    %v780 = vpop.f32.mrb[0].mxu0
    %v781 = vadd.f32 %v169, %v780
    %v782 = vpop.f32.mrb[0].mxu0
    %783 = vmatprep.mubr.f32.mxu0 0.0
    %784 = vmatmul.mubr.f32.gmra.mrb[0].mxu0 %v350
    %v785 = vpop.f32.mrb[0].mxu0
    %v786 = vadd.f32 %v170, %v785
    %v787 = vpop.f32.mrb[0].mxu0
    %788 = vmatprep.mubr.f32.mxu0 0.0
    %789 = vmatmul.mubr.f32.gmra.mrb[0].mxu0 %v353
    %v790 = vpop.f32.mrb[0].mxu0
    %v791 = vadd.f32 %v171, %v790
    %v792 = vpop.f32.mrb[0].mxu0
    %793 = vmatprep.mubr.f32.mxu0 0.0
    %794 = vmatmul.mubr.f32.gmra.mrb[0].mxu0 %v356
    %v795 = vpop.f32.mrb[0].mxu0
    %v796 = vadd.f32 %v172, %v795
    %v797 = vpop.f32.mrb[0].mxu0
    %798 = vmatprep.mubr.f32.mxu0 0.0
    %799 = vmatmul.mubr.f32.gmra.mrb[0].mxu0 %v359
    %v800 = vpop.f32.mrb[0].mxu0
    %v801 = vadd.f32 %v173, %v800
    %v802 = vpop.f32.mrb[0].mxu0
    %803 = vmatprep.mubr.f32.mxu0 0.0
    %804 = vmatmul.mubr.f32.gmra.mrb[0].mxu0 %v362
    %v805 = vpop.f32.mrb[0].mxu0
    %v806 = vadd.f32 %v174, %v805
    %v807 = vpop.f32.mrb[0].mxu0
    %808 = vmatprep.mubr.f32.mxu0 0.0
    %809 = vmatmul.mubr.f32.gmra.mrb[0].mxu0 %v365
    %v810 = vpop.f32.mrb[0].mxu0
    %v811 = vadd.f32 %v175, %v810
    %v812 = vpop.f32.mrb[0].mxu0
    %813 = vmatprep.mubr.f32.mxu0 0.0
    %814 = vmatmul.mubr.f32.gmra.mrb[0].mxu0 %v368
    %v815 = vpop.f32.mrb[0].mxu0
    %v816 = vadd.f32 %v176, %v815
    %v817 = vpop.f32.mrb[0].mxu0
    %818 = vmatprep.mubr.f32.mxu0 0.0
    %819 = vmatmul.mubr.f32.gmra.mrb[0].mxu0 %v371
    %v820 = vpop.f32.mrb[0].mxu0
    %v821 = vadd.f32 %v177, %v820
    %v822 = vpop.f32.mrb[0].mxu0
    %823 = vmatprep.mubr.f32.mxu0 0.0
    %824 = vmatmul.mubr.f32.gmra.mrb[0].mxu0 %v374
    %v825 = vpop.f32.mrb[0].mxu0
    %v826 = vadd.f32 %v178, %v825
    %v827 = vpop.f32.mrb[0].mxu0
    %828 = vmatprep.mubr.f32.mxu0 0.0
    %829 = vmatmul.mubr.f32.gmra.mrb[0].mxu0 %v377
    %v830 = vpop.f32.mrb[0].mxu0
    %v831 = vadd.f32 %v179, %v830
    %v832 = vpop.f32.mrb[0].mxu0
    %833 = vmatprep.mubr.f32.mxu0 0.0
    %834 = vmatmul.mubr.f32.gmra.mrb[0].mxu0 %v380
    %v835 = vpop.f32.mrb[0].mxu0
    %v836 = vadd.f32 %v180, %v835
    %v837 = vpop.f32.mrb[0].mxu0
    %838 = vmatprep.mubr.f32.mxu0 0.0
    %839 = vmatmul.mubr.f32.gmra.mrb[0].mxu0 %v383
    %v840 = vpop.f32.mrb[0].mxu0
    %v841 = vadd.f32 %v181, %v840
    %v842 = vpop.f32.mrb[0].mxu0
    %843 = vmatprep.mubr.f32.mxu0 0.0
    %844 = vmatmul.mubr.f32.gmra.mrb[0].mxu0 %v386
    %v845 = vpop.f32.mrb[0].mxu0
    %v846 = vadd.f32 %v182, %v845
    %v847 = vpop.f32.mrb[0].mxu0
    %848 = vmatprep.mubr.f32.mxu0 0.0
    %849 = vmatmul.mubr.f32.gmra.mrb[0].mxu0 %v389
    %v850 = vpop.f32.mrb[0].mxu0
    %v851 = vadd.f32 %v183, %v850
    %v852 = vpop.f32.mrb[0].mxu0
    %853 = vmatprep.mubr.f32.mxu0 0.0
    %854 = vmatmul.mubr.f32.gmra.mrb[0].mxu0 %v392
    %v855 = vpop.f32.mrb[0].mxu0
    %v856 = vadd.f32 %v184, %v855
    %v857 = vpop.f32.mrb[0].mxu0
    %858 = vmatprep.mubr.f32.mxu0 0.0
    %859 = vmatmul.mubr.f32.gmra.mrb[0].mxu0 %v395
    %v860 = vpop.f32.mrb[0].mxu0
    %v861 = vadd.f32 %v185, %v860
    %v862 = vpop.f32.mrb[0].mxu0
    %863 = vmatprep.mubr.f32.mxu0 0.0
    %864 = vmatmul.mubr.f32.gmra.mrb[0].mxu0 %v398
    %v865 = vpop.f32.mrb[0].mxu0
    %v866 = vadd.f32 %v186, %v865
    %v867 = vpop.f32.mrb[0].mxu0
    %868 = vmatprep.mubr.f32.mxu0 0.0
    %869 = vmatmul.mubr.f32.gmra.mrb[0].mxu0 %v401
    %v870 = vpop.f32.mrb[0].mxu0
    %v871 = vadd.f32 %v187, %v870
    %v872 = vpop.f32.mrb[0].mxu0
    %873 = vmatprep.mubr.f32.mxu0 0.0
    %874 = vmatmul.mubr.f32.gmra.mrb[0].mxu0 %v404
    %v875 = vpop.f32.mrb[0].mxu0
    %v876 = vadd.f32 %v188, %v875
    %v877 = vpop.f32.mrb[0].mxu0
    %878 = vmatprep.mubr.f32.mxu0 0.0
    %879 = vmatmul.mubr.f32.gmra.mrb[0].mxu0 %v407
    %v880 = vpop.f32.mrb[0].mxu0
    %v881 = vadd.f32 %v189, %v880
    %v882 = vpop.f32.mrb[0].mxu0
    %883 = vmatprep.mubr.f32.mxu0 0.0
    %884 = vmatmul.mubr.f32.gmra.mrb[0].mxu0 %v410
    %v885 = vpop.f32.mrb[0].mxu0
    %v886 = vadd.f32 %v190, %v885
    %v887 = vpop.f32.mrb[0].mxu0
    %888 = vmatprep.mubr.f32.mxu0 0.0
    %889 = vmatmul.mubr.f32.gmra.mrb[0].mxu0 %v413
    %v890 = vpop.f32.mrb[0].mxu0
    %v891 = vadd.f32 %v191, %v890
    %v892 = vpop.f32.mrb[0].mxu0
    %893 = vmatprep.mubr.f32.mxu0 0.0
    %894 = vmatmul.mubr.f32.gmra.mrb[0].mxu0 %v416
    %v895 = vpop.f32.mrb[0].mxu0
    %v896 = vadd.f32 %v192, %v895
    %v897 = vpop.f32.mrb[0].mxu0
    %898 = vmatprep.mubr.f32.mxu0 0.0
    %899 = vmatmul.mubr.f32.gmra.mrb[0].mxu0 %v419
    %v900 = vpop.f32.mrb[0].mxu0
    %v901 = vadd.f32 %v193, %v900
    %v902 = vpop.f32.mrb[0].mxu0
    %903 = vmatprep.mubr.f32.mxu0 0.0
    %904 = vmatmul.mubr.f32.gmra.mrb[0].mxu0 %v422
    %v905 = vpop.f32.mrb[0].mxu0
    %v906 = vadd.f32 %v194, %v905
    %v907 = vpop.f32.mrb[0].mxu0
    %908 = vmatprep.mubr.f32.mxu0 0.0
    %909 = vmatmul.mubr.f32.gmra.mrb[0].mxu0 %v425
    %v910 = vpop.f32.mrb[0].mxu0
    %v911 = vadd.f32 %v195, %v910
    %v912 = vpop.f32.mrb[0].mxu0
    %913 = vmatprep.mubr.f32.mxu0 0.0
    %914 = vmatmul.mubr.f32.gmra.mrb[0].mxu0 %v428
    %v915 = vpop.f32.mrb[0].mxu0
    %v916 = vadd.f32 %v196, %v915
    %v917 = vpop.f32.mrb[0].mxu0
    %918 = vmatprep.mubr.f32.mxu0 0.0
    %919 = vmatmul.mubr.f32.gmra.mrb[0].mxu0 %v431
    %v920 = vpop.f32.mrb[0].mxu0
    %v921 = vadd.f32 %v197, %v920
    %v922 = vpop.f32.mrb[0].mxu0
    %923 = vmatprep.mubr.f32.mxu0 0.0
    %924 = vmatmul.mubr.f32.gmra.mrb[0].mxu0 %v434
    %v925 = vpop.f32.mrb[0].mxu0
    %v926 = vadd.f32 %v198, %v925
    %v927 = vpop.f32.mrb[0].mxu0
    %928 = vmatprep.mubr.f32.mxu0 0.0
    %929 = vmatmul.mubr.f32.gmra.mrb[0].mxu0 %v437
    %v930 = vpop.f32.mrb[0].mxu0
    %v931 = vadd.f32 %v199, %v930
    %v932 = vpop.f32.mrb[0].mxu0
    %933 = vmatprep.mubr.f32.mxu0 0.0
    %934 = vmatmul.mubr.f32.gmra.mrb[0].mxu0 %v440
    %v935 = vpop.f32.mrb[0].mxu0
    %v936 = vadd.f32 %v200, %v935
    %v937 = vpop.f32.mrb[0].mxu0
    %938 = vmatprep.mubr.f32.mxu0 0.0
    %939 = vmatmul.mubr.f32.gmra.mrb[0].mxu0 %v443
    %v940 = vpop.f32.mrb[0].mxu0
    %v941 = vadd.f32 %v201, %v940
    %v942 = vpop.f32.mrb[0].mxu0
    %943 = vmatprep.mubr.f32.mxu0 0.0
    %944 = vmatmul.mubr.f32.gmra.mrb[0].mxu0 %v446
    %v945 = vpop.f32.mrb[0].mxu0
    %v946 = vadd.f32 %v202, %v945
    %v947 = vpop.f32.mrb[0].mxu0
    %948 = vmatprep.mubr.f32.mxu0 0.0
    %949 = vmatmul.mubr.f32.gmra.mrb[0].mxu0 %v449
    %v950 = vpop.f32.mrb[0].mxu0
    %v951 = vadd.f32 %v203, %v950
    %v952 = vpop.f32.mrb[0].mxu0
    %953 = vmatprep.mubr.f32.mxu0 0.0
    %954 = vmatmul.mubr.f32.gmra.mrb[0].mxu0 %v452
    %v955 = vpop.f32.mrb[0].mxu0
    %v956 = vadd.f32 %v204, %v955
    %v957 = vpop.f32.mrb[0].mxu0
    %958 = vmatprep.mubr.f32.mxu0 0.0
    %959 = vmatmul.mubr.f32.gmra.mrb[0].mxu0 %v455
    %v960 = vpop.f32.mrb[0].mxu0
    %v961 = vadd.f32 %v205, %v960
    %v962 = vpop.f32.mrb[0].mxu0
    %963 = vmatprep.mubr.f32.mxu0 0.0
    %964 = vmatmul.mubr.f32.gmra.mrb[0].mxu0 %v458
    %v965 = vpop.f32.mrb[0].mxu0
    %v966 = vadd.f32 %v206, %v965
    %v967 = vpop.f32.mrb[0].mxu0
    %968 = vmatprep.mubr.f32.mxu0 0.0
    %969 = vmatmul.mubr.f32.gmra.mrb[0].mxu0 %v461
    %v970 = vpop.f32.mrb[0].mxu0
    %v971 = vadd.f32 %v207, %v970
    %v972 = vpop.f32.mrb[0].mxu0
    %973 = vmatprep.mubr.f32.mxu0 0.0
    %974 = vmatmul.mubr.f32.gmra.mrb[0].mxu0 %v464
    %v975 = vpop.f32.mrb[0].mxu0
    %v976 = vadd.f32 %v208, %v975
    %v977 = vpop.f32.mrb[0].mxu0
    %978 = vmatprep.mubr.f32.mxu0 0.0
    %979 = vmatmul.mubr.f32.gmra.mrb[0].mxu0 %v467
    %v980 = vpop.f32.mrb[0].mxu0
    %v981 = vadd.f32 %v209, %v980
    %v982 = vpop.f32.mrb[0].mxu0
    %983 = vmatprep.mubr.f32.mxu0 0.0
    %984 = vmatmul.mubr.f32.gmra.mrb[0].mxu0 %v470
    %v985 = vpop.f32.mrb[0].mxu0
    %v986 = vadd.f32 %v210, %v985
    %v987 = vpop.f32.mrb[0].mxu0
    %988 = vmatprep.mubr.f32.mxu0 0.0
    %989 = vmatmul.mubr.f32.gmra.mrb[0].mxu0 %v473
    %v990 = vpop.f32.mrb[0].mxu0
    %v991 = vadd.f32 %v211, %v990
    %v992 = vpop.f32.mrb[0].mxu0
    %993 = vmatprep.mubr.f32.mxu0 0.0
    %994 = vmatmul.mubr.f32.gmra.mrb[0].mxu0 %v476
    %v995 = vpop.f32.mrb[0].mxu0
    %v996 = vadd.f32 %v212, %v995
    %v997 = vpop.f32.mrb[0].mxu0
    %998 = vmatprep.mubr.f32.mxu0 0.0
    %999 = vmatmul.mubr.f32.gmra.mrb[0].mxu0 %v479
    %v1000 = vpop.f32.mrb[0].mxu0
    %v1001 = vadd.f32 %v213, %v1000
    %v1002 = vpop.f32.mrb[0].mxu0
    %1003 = vmatprep.mubr.f32.mxu0 0.0
    %1004 = vmatmul.mubr.f32.gmra.mrb[0].mxu0 %v482
    %v1005 = vpop.f32.mrb[0].mxu0
    %v1006 = vadd.f32 %v214, %v1005
    %v1007 = vpop.f32.mrb[0].mxu0
    %1008 = vmatprep.mubr.f32.mxu0 0.0
    %1009 = vmatmul.mubr.f32.gmra.mrb[0].mxu0 %v485
    %v1010 = vpop.f32.mrb[0].mxu0
    %v1011 = vadd.f32 %v215, %v1010
    %v1012 = vpop.f32.mrb[0].mxu0
    %1013 = vmatprep.mubr.f32.mxu0 0.0
    %1014 = vmatmul.mubr.f32.gmra.mrb[0].mxu0 %v488
    %v1015 = vpop.f32.mrb[0].mxu0
    %v1016 = vadd.f32 %v216, %v1015
    %v1017 = vpop.f32.mrb[0].mxu0
    %1018 = vmatprep.mubr.f32.mxu0 0.0
    %1019 = vmatmul.mubr.f32.gmra.mrb[0].mxu0 %v491
    %v1020 = vpop.f32.mrb[0].mxu0
    %v1021 = vadd.f32 %v217, %v1020
    %v1022 = vpop.f32.mrb[0].mxu0
    %1023 = vmatprep.mubr.f32.mxu0 0.0
    %1024 = vmatmul.mubr.f32.gmra.mrb[0].mxu0 %v494
    %v1025 = vpop.f32.mrb[0].mxu0
    %v1026 = vadd.f32 %v218, %v1025
    %v1027 = vpop.f32.mrb[0].mxu0
    %1028 = vmatprep.mubr.f32.mxu0 0.0
    %1029 = vmatmul.mubr.f32.gmra.mrb[0].mxu0 %v497
    %v1030 = vpop.f32.mrb[0].mxu0
    %v1031 = vadd.f32 %v219, %v1030
    %v1032 = vpop.f32.mrb[0].mxu0
    %1033 = vmatprep.mubr.f32.mxu0 0.0
    %1034 = vmatmul.mubr.f32.gmra.mrb[0].mxu0 %v500
    %v1035 = vpop.f32.mrb[0].mxu0
    %v1036 = vadd.f32 %v220, %v1035
    %v1037 = vpop.f32.mrb[0].mxu0
    %1038 = vmatprep.mubr.f32.mxu0 0.0
    %1039 = vmatmul.mubr.f32.gmra.mrb[0].mxu0 %v503
    %v1040 = vpop.f32.mrb[0].mxu0
    %v1041 = vadd.f32 %v221, %v1040
    %v1042 = vpop.f32.mrb[0].mxu0
    %1043 = vmatprep.mubr.f32.mxu0 0.0
    %1044 = vmatmul.mubr.f32.gmra.mrb[0].mxu0 %v506
    %v1045 = vpop.f32.mrb[0].mxu0
    %v1046 = vadd.f32 %v222, %v1045
    %v1047 = vpop.f32.mrb[0].mxu0
    %1048 = vmatprep.mubr.f32.mxu0 0.0
    %1049 = vmatmul.mubr.f32.gmra.mrb[0].mxu0 %v509
    %v1050 = vpop.f32.mrb[0].mxu0
    %v1051 = vadd.f32 %v223, %v1050
    %v1052 = vpop.f32.mrb[0].mxu0
    %1053 = vmatprep.mubr.f32.mxu0 0.0
    %1054 = vmatmul.mubr.f32.gmra.mrb[0].mxu0 %v512
    %v1055 = vpop.f32.mrb[0].mxu0
    %v1056 = vadd.f32 %v224, %v1055
    %v1057 = vpop.f32.mrb[0].mxu0
    %1058 = vdwg.mxu0
    %v1059 = vxor.u32 %v581, 2147483648
    %v1060 = vxor.u32 %v586, 2147483648
    %v1061 = vxor.u32 %v591, 2147483648
    %v1062 = vxor.u32 %v596, 2147483648
    %v1063 = vxor.u32 %v601, 2147483648
    %v1064 = vxor.u32 %v606, 2147483648
    %v1065 = vxor.u32 %v611, 2147483648
    %v1066 = vxor.u32 %v616, 2147483648
    %v1067 = vxor.u32 %v621, 2147483648
    %v1068 = vxor.u32 %v626, 2147483648
    %v1069 = vxor.u32 %v631, 2147483648
    %v1070 = vxor.u32 %v636, 2147483648
    %v1071 = vxor.u32 %v641, 2147483648
    %v1072 = vxor.u32 %v646, 2147483648
    %v1073 = vxor.u32 %v651, 2147483648
    %v1074 = vxor.u32 %v656, 2147483648
    %v1075 = vxor.u32 %v661, 2147483648
    %v1076 = vxor.u32 %v666, 2147483648
    %v1077 = vxor.u32 %v671, 2147483648
    %v1078 = vxor.u32 %v676, 2147483648
    %v1079 = vxor.u32 %v681, 2147483648
    %v1080 = vxor.u32 %v686, 2147483648
    %v1081 = vxor.u32 %v691, 2147483648
    %v1082 = vxor.u32 %v696, 2147483648
    %v1083 = vxor.u32 %v701, 2147483648
    %v1084 = vxor.u32 %v706, 2147483648
    %v1085 = vxor.u32 %v711, 2147483648
    %v1086 = vxor.u32 %v716, 2147483648
    %v1087 = vxor.u32 %v721, 2147483648
    %v1088 = vxor.u32 %v726, 2147483648
    %v1089 = vxor.u32 %v731, 2147483648
    %v1090 = vxor.u32 %v736, 2147483648
    %v1091 = vxor.u32 %v741, 2147483648
    %v1092 = vxor.u32 %v746, 2147483648
    %v1093 = vxor.u32 %v751, 2147483648
    %v1094 = vxor.u32 %v756, 2147483648
    %v1095 = vxor.u32 %v761, 2147483648
    %v1096 = vxor.u32 %v766, 2147483648
    %v1097 = vxor.u32 %v771, 2147483648
    %v1098 = vxor.u32 %v776, 2147483648
    %v1099 = vxor.u32 %v781, 2147483648
    %v1100 = vxor.u32 %v786, 2147483648
    %v1101 = vxor.u32 %v791, 2147483648
    %v1102 = vxor.u32 %v796, 2147483648
    %v1103 = vxor.u32 %v801, 2147483648
    %v1104 = vxor.u32 %v806, 2147483648
    %v1105 = vxor.u32 %v811, 2147483648
    %v1106 = vxor.u32 %v816, 2147483648
    %v1107 = vxor.u32 %v821, 2147483648
    %v1108 = vxor.u32 %v826, 2147483648
    %v1109 = vxor.u32 %v831, 2147483648
    %v1110 = vxor.u32 %v836, 2147483648
    %v1111 = vxor.u32 %v841, 2147483648
    %v1112 = vxor.u32 %v846, 2147483648
    %v1113 = vxor.u32 %v851, 2147483648
    %v1114 = vxor.u32 %v856, 2147483648
    %v1115 = vxor.u32 %v861, 2147483648
    %v1116 = vxor.u32 %v866, 2147483648
    %v1117 = vxor.u32 %v871, 2147483648
    %v1118 = vxor.u32 %v876, 2147483648
    %v1119 = vxor.u32 %v881, 2147483648
    %v1120 = vxor.u32 %v886, 2147483648
    %v1121 = vxor.u32 %v891, 2147483648
    %v1122 = vxor.u32 %v896, 2147483648
    %v1123 = vxor.u32 %v901, 2147483648
    %v1124 = vxor.u32 %v906, 2147483648
    %v1125 = vxor.u32 %v911, 2147483648
    %v1126 = vxor.u32 %v916, 2147483648
    %v1127 = vxor.u32 %v921, 2147483648
    %v1128 = vxor.u32 %v926, 2147483648
    %v1129 = vxor.u32 %v931, 2147483648
    %v1130 = vxor.u32 %v936, 2147483648
    %v1131 = vxor.u32 %v941, 2147483648
    %v1132 = vxor.u32 %v946, 2147483648
    %v1133 = vxor.u32 %v951, 2147483648
    %v1134 = vxor.u32 %v956, 2147483648
    %v1135 = vxor.u32 %v961, 2147483648
    %v1136 = vxor.u32 %v966, 2147483648
    %v1137 = vxor.u32 %v971, 2147483648
    %v1138 = vxor.u32 %v976, 2147483648
    %v1139 = vxor.u32 %v981, 2147483648
    %v1140 = vxor.u32 %v986, 2147483648
    %v1141 = vxor.u32 %v991, 2147483648
    %v1142 = vxor.u32 %v996, 2147483648
    %v1143 = vxor.u32 %v1001, 2147483648
    %v1144 = vxor.u32 %v1006, 2147483648
    %v1145 = vxor.u32 %v1011, 2147483648
    %v1146 = vxor.u32 %v1016, 2147483648
    %v1147 = vxor.u32 %v1021, 2147483648
    %v1148 = vxor.u32 %v1026, 2147483648
    %v1149 = vxor.u32 %v1031, 2147483648
    %v1150 = vxor.u32 %v1036, 2147483648
    %v1151 = vxor.u32 %v1041, 2147483648
    %v1152 = vxor.u32 %v1046, 2147483648
    %v1153 = vxor.u32 %v1051, 2147483648
    %v1154 = vxor.u32 %v1056, 2147483648
    %v1155 = vmul.f32 %v1059, 1.442695
    %v1156 = vpow.pop %v1155
    %v1157 = vmul.f32 %v1060, 1.442695
    %v1158 = vpow.pop %v1157
    %v1159 = vmul.f32 %v1061, 1.442695
    %v1160 = vpow.pop %v1159
    %v1161 = vmul.f32 %v1062, 1.442695
    %v1162 = vpow.pop %v1161
    %v1163 = vmul.f32 %v1063, 1.442695
    %v1164 = vpow.pop %v1163
    %v1165 = vmul.f32 %v1064, 1.442695
    %v1166 = vpow.pop %v1165
    %v1167 = vmul.f32 %v1065, 1.442695
    %v1168 = vpow.pop %v1167
    %v1169 = vmul.f32 %v1066, 1.442695
    %v1170 = vpow.pop %v1169
    %v1171 = vmul.f32 %v1067, 1.442695
    %v1172 = vpow.pop %v1171
    %v1173 = vmul.f32 %v1068, 1.442695
    %v1174 = vpow.pop %v1173
    %v1175 = vmul.f32 %v1069, 1.442695
    %v1176 = vpow.pop %v1175
    %v1177 = vmul.f32 %v1070, 1.442695
    %v1178 = vpow.pop %v1177
    %v1179 = vmul.f32 %v1071, 1.442695
    %v1180 = vpow.pop %v1179
    %v1181 = vmul.f32 %v1072, 1.442695
    %v1182 = vpow.pop %v1181
    %v1183 = vmul.f32 %v1073, 1.442695
    %v1184 = vpow.pop %v1183
    %v1185 = vmul.f32 %v1074, 1.442695
    %v1186 = vpow.pop %v1185
    %v1187 = vmul.f32 %v1075, 1.442695
    %v1188 = vpow.pop %v1187
    %v1189 = vmul.f32 %v1076, 1.442695
    %v1190 = vpow.pop %v1189
    %v1191 = vmul.f32 %v1077, 1.442695
    %v1192 = vpow.pop %v1191
    %v1193 = vmul.f32 %v1078, 1.442695
    %v1194 = vpow.pop %v1193
    %v1195 = vmul.f32 %v1079, 1.442695
    %v1196 = vpow.pop %v1195
    %v1197 = vmul.f32 %v1080, 1.442695
    %v1198 = vpow.pop %v1197
    %v1199 = vmul.f32 %v1081, 1.442695
    %v1200 = vpow.pop %v1199
    %v1201 = vmul.f32 %v1082, 1.442695
    %v1202 = vpow.pop %v1201
    %v1203 = vmul.f32 %v1083, 1.442695
    %v1204 = vpow.pop %v1203
    %v1205 = vmul.f32 %v1084, 1.442695
    %v1206 = vpow.pop %v1205
    %v1207 = vmul.f32 %v1085, 1.442695
    %v1208 = vpow.pop %v1207
    %v1209 = vmul.f32 %v1086, 1.442695
    %v1210 = vpow.pop %v1209
    %v1211 = vmul.f32 %v1087, 1.442695
    %v1212 = vpow.pop %v1211
    %v1213 = vmul.f32 %v1088, 1.442695
    %v1214 = vpow.pop %v1213
    %v1215 = vmul.f32 %v1089, 1.442695
    %v1216 = vpow.pop %v1215
    %v1217 = vmul.f32 %v1090, 1.442695
    %v1218 = vpow.pop %v1217
    %v1219 = vmul.f32 %v1091, 1.442695
    %v1220 = vpow.pop %v1219
    %v1221 = vmul.f32 %v1092, 1.442695
    %v1222 = vpow.pop %v1221
    %v1223 = vmul.f32 %v1093, 1.442695
    %v1224 = vpow.pop %v1223
    %v1225 = vmul.f32 %v1094, 1.442695
    %v1226 = vpow.pop %v1225
    %v1227 = vmul.f32 %v1095, 1.442695
    %v1228 = vpow.pop %v1227
    %v1229 = vmul.f32 %v1096, 1.442695
    %v1230 = vpow.pop %v1229
    %v1231 = vmul.f32 %v1097, 1.442695
    %v1232 = vpow.pop %v1231
    %v1233 = vmul.f32 %v1098, 1.442695
    %v1234 = vpow.pop %v1233
    %v1235 = vmul.f32 %v1099, 1.442695
    %v1236 = vpow.pop %v1235
    %v1237 = vmul.f32 %v1100, 1.442695
    %v1238 = vpow.pop %v1237
    %v1239 = vmul.f32 %v1101, 1.442695
    %v1240 = vpow.pop %v1239
    %v1241 = vmul.f32 %v1102, 1.442695
    %v1242 = vpow.pop %v1241
    %v1243 = vmul.f32 %v1103, 1.442695
    %v1244 = vpow.pop %v1243
    %v1245 = vmul.f32 %v1104, 1.442695
    %v1246 = vpow.pop %v1245
    %v1247 = vmul.f32 %v1105, 1.442695
    %v1248 = vpow.pop %v1247
    %v1249 = vmul.f32 %v1106, 1.442695
    %v1250 = vpow.pop %v1249
    %v1251 = vmul.f32 %v1107, 1.442695
    %v1252 = vpow.pop %v1251
    %v1253 = vmul.f32 %v1108, 1.442695
    %v1254 = vpow.pop %v1253
    %v1255 = vmul.f32 %v1109, 1.442695
    %v1256 = vpow.pop %v1255
    %v1257 = vmul.f32 %v1110, 1.442695
    %v1258 = vpow.pop %v1257
    %v1259 = vmul.f32 %v1111, 1.442695
    %v1260 = vpow.pop %v1259
    %v1261 = vmul.f32 %v1112, 1.442695
    %v1262 = vpow.pop %v1261
    %v1263 = vmul.f32 %v1113, 1.442695
    %v1264 = vpow.pop %v1263
    %v1265 = vmul.f32 %v1114, 1.442695
    %v1266 = vpow.pop %v1265
    %v1267 = vmul.f32 %v1115, 1.442695
    %v1268 = vpow.pop %v1267
    %v1269 = vmul.f32 %v1116, 1.442695
    %v1270 = vpow.pop %v1269
    %v1271 = vmul.f32 %v1117, 1.442695
    %v1272 = vpow.pop %v1271
    %v1273 = vmul.f32 %v1118, 1.442695
    %v1274 = vpow.pop %v1273
    %v1275 = vmul.f32 %v1119, 1.442695
    %v1276 = vpow.pop %v1275
    %v1277 = vmul.f32 %v1120, 1.442695
    %v1278 = vpow.pop %v1277
    %v1279 = vmul.f32 %v1121, 1.442695
    %v1280 = vpow.pop %v1279
    %v1281 = vmul.f32 %v1122, 1.442695
    %v1282 = vpow.pop %v1281
    %v1283 = vmul.f32 %v1123, 1.442695
    %v1284 = vpow.pop %v1283
    %v1285 = vmul.f32 %v1124, 1.442695
    %v1286 = vpow.pop %v1285
    %v1287 = vmul.f32 %v1125, 1.442695
    %v1288 = vpow.pop %v1287
    %v1289 = vmul.f32 %v1126, 1.442695
    %v1290 = vpow.pop %v1289
    %v1291 = vmul.f32 %v1127, 1.442695
    %v1292 = vpow.pop %v1291
    %v1293 = vmul.f32 %v1128, 1.442695
    %v1294 = vpow.pop %v1293
    %v1295 = vmul.f32 %v1129, 1.442695
    %v1296 = vpow.pop %v1295
    %v1297 = vmul.f32 %v1130, 1.442695
    %v1298 = vpow.pop %v1297
    %v1299 = vmul.f32 %v1131, 1.442695
    %v1300 = vpow.pop %v1299
    %v1301 = vmul.f32 %v1132, 1.442695
    %v1302 = vpow.pop %v1301
    %v1303 = vmul.f32 %v1133, 1.442695
    %v1304 = vpow.pop %v1303
    %v1305 = vmul.f32 %v1134, 1.442695
    %v1306 = vpow.pop %v1305
    %v1307 = vmul.f32 %v1135, 1.442695
    %v1308 = vpow.pop %v1307
    %v1309 = vmul.f32 %v1136, 1.442695
    %v1310 = vpow.pop %v1309
    %v1311 = vmul.f32 %v1137, 1.442695
    %v1312 = vpow.pop %v1311
    %v1313 = vmul.f32 %v1138, 1.442695
    %v1314 = vpow.pop %v1313
    %v1315 = vmul.f32 %v1139, 1.442695
    %v1316 = vpow.pop %v1315
    %v1317 = vmul.f32 %v1140, 1.442695
    %v1318 = vpow.pop %v1317
    %v1319 = vmul.f32 %v1141, 1.442695
    %v1320 = vpow.pop %v1319
    %v1321 = vmul.f32 %v1142, 1.442695
    %v1322 = vpow.pop %v1321
    %v1323 = vmul.f32 %v1143, 1.442695
    %v1324 = vpow.pop %v1323
    %v1325 = vmul.f32 %v1144, 1.442695
    %v1326 = vpow.pop %v1325
    %v1327 = vmul.f32 %v1145, 1.442695
    %v1328 = vpow.pop %v1327
    %v1329 = vmul.f32 %v1146, 1.442695
    %v1330 = vpow.pop %v1329
    %v1331 = vmul.f32 %v1147, 1.442695
    %v1332 = vpow.pop %v1331
    %v1333 = vmul.f32 %v1148, 1.442695
    %v1334 = vpow.pop %v1333
    %v1335 = vmul.f32 %v1149, 1.442695
    %v1336 = vpow.pop %v1335
    %v1337 = vmul.f32 %v1150, 1.442695
    %v1338 = vpow.pop %v1337
    %v1339 = vmul.f32 %v1151, 1.442695
    %v1340 = vpow.pop %v1339
    %v1341 = vmul.f32 %v1152, 1.442695
    %v1342 = vpow.pop %v1341
    %v1343 = vmul.f32 %v1153, 1.442695
    %v1344 = vpow.pop %v1343
    %v1345 = vmul.f32 %v1154, 1.442695
    %v1346 = vpow.pop %v1345
    %v1347 = vadd.f32 %v1156, 1.0
    %v1348 = vadd.f32 %v1158, 1.0
    %v1349 = vadd.f32 %v1160, 1.0
    %v1350 = vadd.f32 %v1162, 1.0
    %v1351 = vadd.f32 %v1164, 1.0
    %v1352 = vadd.f32 %v1166, 1.0
    %v1353 = vadd.f32 %v1168, 1.0
    %v1354 = vadd.f32 %v1170, 1.0
    %v1355 = vadd.f32 %v1172, 1.0
    %v1356 = vadd.f32 %v1174, 1.0
    %v1357 = vadd.f32 %v1176, 1.0
    %v1358 = vadd.f32 %v1178, 1.0
    %v1359 = vadd.f32 %v1180, 1.0
    %v1360 = vadd.f32 %v1182, 1.0
    %v1361 = vadd.f32 %v1184, 1.0
    %v1362 = vadd.f32 %v1186, 1.0
    %v1363 = vadd.f32 %v1188, 1.0
    %v1364 = vadd.f32 %v1190, 1.0
    %v1365 = vadd.f32 %v1192, 1.0
    %v1366 = vadd.f32 %v1194, 1.0
    %v1367 = vadd.f32 %v1196, 1.0
    %v1368 = vadd.f32 %v1198, 1.0
    %v1369 = vadd.f32 %v1200, 1.0
    %v1370 = vadd.f32 %v1202, 1.0
    %v1371 = vadd.f32 %v1204, 1.0
    %v1372 = vadd.f32 %v1206, 1.0
    %v1373 = vadd.f32 %v1208, 1.0
    %v1374 = vadd.f32 %v1210, 1.0
    %v1375 = vadd.f32 %v1212, 1.0
    %v1376 = vadd.f32 %v1214, 1.0
    %v1377 = vadd.f32 %v1216, 1.0
    %v1378 = vadd.f32 %v1218, 1.0
    %v1379 = vadd.f32 %v1220, 1.0
    %v1380 = vadd.f32 %v1222, 1.0
    %v1381 = vadd.f32 %v1224, 1.0
    %v1382 = vadd.f32 %v1226, 1.0
    %v1383 = vadd.f32 %v1228, 1.0
    %v1384 = vadd.f32 %v1230, 1.0
    %v1385 = vadd.f32 %v1232, 1.0
    %v1386 = vadd.f32 %v1234, 1.0
    %v1387 = vadd.f32 %v1236, 1.0
    %v1388 = vadd.f32 %v1238, 1.0
    %v1389 = vadd.f32 %v1240, 1.0
    %v1390 = vadd.f32 %v1242, 1.0
    %v1391 = vadd.f32 %v1244, 1.0
    %v1392 = vadd.f32 %v1246, 1.0
    %v1393 = vadd.f32 %v1248, 1.0
    %v1394 = vadd.f32 %v1250, 1.0
    %v1395 = vadd.f32 %v1252, 1.0
    %v1396 = vadd.f32 %v1254, 1.0
    %v1397 = vadd.f32 %v1256, 1.0
    %v1398 = vadd.f32 %v1258, 1.0
    %v1399 = vadd.f32 %v1260, 1.0
    %v1400 = vadd.f32 %v1262, 1.0
    %v1401 = vadd.f32 %v1264, 1.0
    %v1402 = vadd.f32 %v1266, 1.0
    %v1403 = vadd.f32 %v1268, 1.0
    %v1404 = vadd.f32 %v1270, 1.0
    %v1405 = vadd.f32 %v1272, 1.0
    %v1406 = vadd.f32 %v1274, 1.0
    %v1407 = vadd.f32 %v1276, 1.0
    %v1408 = vadd.f32 %v1278, 1.0
    %v1409 = vadd.f32 %v1280, 1.0
    %v1410 = vadd.f32 %v1282, 1.0
    %v1411 = vadd.f32 %v1284, 1.0
    %v1412 = vadd.f32 %v1286, 1.0
    %v1413 = vadd.f32 %v1288, 1.0
    %v1414 = vadd.f32 %v1290, 1.0
    %v1415 = vadd.f32 %v1292, 1.0
    %v1416 = vadd.f32 %v1294, 1.0
    %v1417 = vadd.f32 %v1296, 1.0
    %v1418 = vadd.f32 %v1298, 1.0
    %v1419 = vadd.f32 %v1300, 1.0
    %v1420 = vadd.f32 %v1302, 1.0
    %v1421 = vadd.f32 %v1304, 1.0
    %v1422 = vadd.f32 %v1306, 1.0
    %v1423 = vadd.f32 %v1308, 1.0
    %v1424 = vadd.f32 %v1310, 1.0
    %v1425 = vadd.f32 %v1312, 1.0
    %v1426 = vadd.f32 %v1314, 1.0
    %v1427 = vadd.f32 %v1316, 1.0
    %v1428 = vadd.f32 %v1318, 1.0
    %v1429 = vadd.f32 %v1320, 1.0
    %v1430 = vadd.f32 %v1322, 1.0
    %v1431 = vadd.f32 %v1324, 1.0
    %v1432 = vadd.f32 %v1326, 1.0
    %v1433 = vadd.f32 %v1328, 1.0
    %v1434 = vadd.f32 %v1330, 1.0
    %v1435 = vadd.f32 %v1332, 1.0
    %v1436 = vadd.f32 %v1334, 1.0
    %v1437 = vadd.f32 %v1336, 1.0
    %v1438 = vadd.f32 %v1338, 1.0
    %v1439 = vadd.f32 %v1340, 1.0
    %v1440 = vadd.f32 %v1342, 1.0
    %v1441 = vadd.f32 %v1344, 1.0
    %v1442 = vadd.f32 %v1346, 1.0
    %v1443 = vrcp.pop %v1347
    %v1444 = vmul.f32 1.0, %v1443
    %v1445 = vrcp.pop %v1348
    %v1446 = vmul.f32 1.0, %v1445
    %v1447 = vrcp.pop %v1349
    %v1448 = vmul.f32 1.0, %v1447
    %v1449 = vrcp.pop %v1350
    %v1450 = vmul.f32 1.0, %v1449
    %v1451 = vrcp.pop %v1351
    %v1452 = vmul.f32 1.0, %v1451
    %v1453 = vrcp.pop %v1352
    %v1454 = vmul.f32 1.0, %v1453
    %v1455 = vrcp.pop %v1353
    %v1456 = vmul.f32 1.0, %v1455
    %v1457 = vrcp.pop %v1354
    %v1458 = vmul.f32 1.0, %v1457
    %v1459 = vrcp.pop %v1355
    %v1460 = vmul.f32 1.0, %v1459
    %v1461 = vrcp.pop %v1356
    %v1462 = vmul.f32 1.0, %v1461
    %v1463 = vrcp.pop %v1357
    %v1464 = vmul.f32 1.0, %v1463
    %v1465 = vrcp.pop %v1358
    %v1466 = vmul.f32 1.0, %v1465
    %v1467 = vrcp.pop %v1359
    %v1468 = vmul.f32 1.0, %v1467
    %v1469 = vrcp.pop %v1360
    %v1470 = vmul.f32 1.0, %v1469
    %v1471 = vrcp.pop %v1361
    %v1472 = vmul.f32 1.0, %v1471
    %v1473 = vrcp.pop %v1362
    %v1474 = vmul.f32 1.0, %v1473
    %v1475 = vrcp.pop %v1363
    %v1476 = vmul.f32 1.0, %v1475
    %v1477 = vrcp.pop %v1364
    %v1478 = vmul.f32 1.0, %v1477
    %v1479 = vrcp.pop %v1365
    %v1480 = vmul.f32 1.0, %v1479
    %v1481 = vrcp.pop %v1366
    %v1482 = vmul.f32 1.0, %v1481
    %v1483 = vrcp.pop %v1367
    %v1484 = vmul.f32 1.0, %v1483
    %v1485 = vrcp.pop %v1368
    %v1486 = vmul.f32 1.0, %v1485
    %v1487 = vrcp.pop %v1369
    %v1488 = vmul.f32 1.0, %v1487
    %v1489 = vrcp.pop %v1370
    %v1490 = vmul.f32 1.0, %v1489
    %v1491 = vrcp.pop %v1371
    %v1492 = vmul.f32 1.0, %v1491
    %v1493 = vrcp.pop %v1372
    %v1494 = vmul.f32 1.0, %v1493
    %v1495 = vrcp.pop %v1373
    %v1496 = vmul.f32 1.0, %v1495
    %v1497 = vrcp.pop %v1374
    %v1498 = vmul.f32 1.0, %v1497
    %v1499 = vrcp.pop %v1375
    %v1500 = vmul.f32 1.0, %v1499
    %v1501 = vrcp.pop %v1376
    %v1502 = vmul.f32 1.0, %v1501
    %v1503 = vrcp.pop %v1377
    %v1504 = vmul.f32 1.0, %v1503
    %v1505 = vrcp.pop %v1378
    %v1506 = vmul.f32 1.0, %v1505
    %v1507 = vrcp.pop %v1379
    %v1508 = vmul.f32 1.0, %v1507
    %v1509 = vrcp.pop %v1380
    %v1510 = vmul.f32 1.0, %v1509
    %v1511 = vrcp.pop %v1381
    %v1512 = vmul.f32 1.0, %v1511
    %v1513 = vrcp.pop %v1382
    %v1514 = vmul.f32 1.0, %v1513
    %v1515 = vrcp.pop %v1383
    %v1516 = vmul.f32 1.0, %v1515
    %v1517 = vrcp.pop %v1384
    %v1518 = vmul.f32 1.0, %v1517
    %v1519 = vrcp.pop %v1385
    %v1520 = vmul.f32 1.0, %v1519
    %v1521 = vrcp.pop %v1386
    %v1522 = vmul.f32 1.0, %v1521
    %v1523 = vrcp.pop %v1387
    %v1524 = vmul.f32 1.0, %v1523
    %v1525 = vrcp.pop %v1388
    %v1526 = vmul.f32 1.0, %v1525
    %v1527 = vrcp.pop %v1389
    %v1528 = vmul.f32 1.0, %v1527
    %v1529 = vrcp.pop %v1390
    %v1530 = vmul.f32 1.0, %v1529
    %v1531 = vrcp.pop %v1391
    %v1532 = vmul.f32 1.0, %v1531
    %v1533 = vrcp.pop %v1392
    %v1534 = vmul.f32 1.0, %v1533
    %v1535 = vrcp.pop %v1393
    %v1536 = vmul.f32 1.0, %v1535
    %v1537 = vrcp.pop %v1394
    %v1538 = vmul.f32 1.0, %v1537
    %v1539 = vrcp.pop %v1395
    %v1540 = vmul.f32 1.0, %v1539
    %v1541 = vrcp.pop %v1396
    %v1542 = vmul.f32 1.0, %v1541
    %v1543 = vrcp.pop %v1397
    %v1544 = vmul.f32 1.0, %v1543
    %v1545 = vrcp.pop %v1398
    %v1546 = vmul.f32 1.0, %v1545
    %v1547 = vrcp.pop %v1399
    %v1548 = vmul.f32 1.0, %v1547
    %v1549 = vrcp.pop %v1400
    %v1550 = vmul.f32 1.0, %v1549
    %v1551 = vrcp.pop %v1401
    %v1552 = vmul.f32 1.0, %v1551
    %v1553 = vrcp.pop %v1402
    %v1554 = vmul.f32 1.0, %v1553
    %v1555 = vrcp.pop %v1403
    %v1556 = vmul.f32 1.0, %v1555
    %v1557 = vrcp.pop %v1404
    %v1558 = vmul.f32 1.0, %v1557
    %v1559 = vrcp.pop %v1405
    %v1560 = vmul.f32 1.0, %v1559
    %v1561 = vrcp.pop %v1406
    %v1562 = vmul.f32 1.0, %v1561
    %v1563 = vrcp.pop %v1407
    %v1564 = vmul.f32 1.0, %v1563
    %v1565 = vrcp.pop %v1408
    %v1566 = vmul.f32 1.0, %v1565
    %v1567 = vrcp.pop %v1409
    %v1568 = vmul.f32 1.0, %v1567
    %v1569 = vrcp.pop %v1410
    %v1570 = vmul.f32 1.0, %v1569
    %v1571 = vrcp.pop %v1411
    %v1572 = vmul.f32 1.0, %v1571
    %v1573 = vrcp.pop %v1412
    %v1574 = vmul.f32 1.0, %v1573
    %v1575 = vrcp.pop %v1413
    %v1576 = vmul.f32 1.0, %v1575
    %v1577 = vrcp.pop %v1414
    %v1578 = vmul.f32 1.0, %v1577
    %v1579 = vrcp.pop %v1415
    %v1580 = vmul.f32 1.0, %v1579
    %v1581 = vrcp.pop %v1416
    %v1582 = vmul.f32 1.0, %v1581
    %v1583 = vrcp.pop %v1417
    %v1584 = vmul.f32 1.0, %v1583
    %v1585 = vrcp.pop %v1418
    %v1586 = vmul.f32 1.0, %v1585
    %v1587 = vrcp.pop %v1419
    %v1588 = vmul.f32 1.0, %v1587
    %v1589 = vrcp.pop %v1420
    %v1590 = vmul.f32 1.0, %v1589
    %v1591 = vrcp.pop %v1421
    %v1592 = vmul.f32 1.0, %v1591
    %v1593 = vrcp.pop %v1422
    %v1594 = vmul.f32 1.0, %v1593
    %v1595 = vrcp.pop %v1423
    %v1596 = vmul.f32 1.0, %v1595
    %v1597 = vrcp.pop %v1424
    %v1598 = vmul.f32 1.0, %v1597
    %v1599 = vrcp.pop %v1425
    %v1600 = vmul.f32 1.0, %v1599
    %v1601 = vrcp.pop %v1426
    %v1602 = vmul.f32 1.0, %v1601
    %v1603 = vrcp.pop %v1427
    %v1604 = vmul.f32 1.0, %v1603
    %v1605 = vrcp.pop %v1428
    %v1606 = vmul.f32 1.0, %v1605
    %v1607 = vrcp.pop %v1429
    %v1608 = vmul.f32 1.0, %v1607
    %v1609 = vrcp.pop %v1430
    %v1610 = vmul.f32 1.0, %v1609
    %v1611 = vrcp.pop %v1431
    %v1612 = vmul.f32 1.0, %v1611
    %v1613 = vrcp.pop %v1432
    %v1614 = vmul.f32 1.0, %v1613
    %v1615 = vrcp.pop %v1433
    %v1616 = vmul.f32 1.0, %v1615
    %v1617 = vrcp.pop %v1434
    %v1618 = vmul.f32 1.0, %v1617
    %v1619 = vrcp.pop %v1435
    %v1620 = vmul.f32 1.0, %v1619
    %v1621 = vrcp.pop %v1436
    %v1622 = vmul.f32 1.0, %v1621
    %v1623 = vrcp.pop %v1437
    %v1624 = vmul.f32 1.0, %v1623
    %v1625 = vrcp.pop %v1438
    %v1626 = vmul.f32 1.0, %v1625
    %v1627 = vrcp.pop %v1439
    %v1628 = vmul.f32 1.0, %v1627
    %v1629 = vrcp.pop %v1440
    %v1630 = vmul.f32 1.0, %v1629
    %v1631 = vrcp.pop %v1441
    %v1632 = vmul.f32 1.0, %v1631
    %v1633 = vrcp.pop %v1442
    %v1634 = vmul.f32 1.0, %v1633
    %v1635 = vld [vmem:[%s3] sm:$0xff]
    %v1636 = vld [vmem:[%s3 + $0x8] sm:$0xff]
    %v1637 = vld [vmem:[%s3 + $0x10] sm:$0xff]
    %v1638 = vld [vmem:[%s3 + $0x18] sm:$0xff]
    %v1639 = vld [vmem:[%s3 + $0x20] sm:$0xff]
    %v1640 = vld [vmem:[%s3 + $0x28] sm:$0xff]
    %v1641 = vld [vmem:[%s3 + $0x30] sm:$0xff]
    %v1642 = vld [vmem:[%s3 + $0x38] sm:$0xff]
    %v1643 = vld [vmem:[%s3 + $0x40] sm:$0xff]
    %v1644 = vld [vmem:[%s3 + $0x48] sm:$0xff]
    %v1645 = vld [vmem:[%s3 + $0x50] sm:$0xff]
    %v1646 = vld [vmem:[%s3 + $0x58] sm:$0xff]
    %v1647 = vld [vmem:[%s3 + $0x60] sm:$0xff]
    %v1648 = vld [vmem:[%s3 + $0x68] sm:$0xff]
    %v1649 = vld [vmem:[%s3 + $0x70] sm:$0xff]
    %v1650 = vld [vmem:[%s3 + $0x78] sm:$0xff]
    %v1651 = vld [vmem:[%s3 + $0x80] sm:$0xff]
    %v1652 = vld [vmem:[%s3 + $0x88] sm:$0xff]
    %v1653 = vld [vmem:[%s3 + $0x90] sm:$0xff]
    %v1654 = vld [vmem:[%s3 + $0x98] sm:$0xff]
    %v1655 = vld [vmem:[%s3 + $0xa0] sm:$0xff]
    %v1656 = vld [vmem:[%s3 + $0xa8] sm:$0xff]
    %v1657 = vld [vmem:[%s3 + $0xb0] sm:$0xff]
    %v1658 = vld [vmem:[%s3 + $0xb8] sm:$0xff]
    %v1659 = vld [vmem:[%s3 + $0xc0] sm:$0xff]
    %v1660 = vld [vmem:[%s3 + $0xc8] sm:$0xff]
    %v1661 = vld [vmem:[%s3 + $0xd0] sm:$0xff]
    %v1662 = vld [vmem:[%s3 + $0xd8] sm:$0xff]
    %v1663 = vld [vmem:[%s3 + $0xe0] sm:$0xff]
    %v1664 = vld [vmem:[%s3 + $0xe8] sm:$0xff]
    %v1665 = vld [vmem:[%s3 + $0xf0] sm:$0xff]
    %v1666 = vld [vmem:[%s3 + $0xf8] sm:$0xff]
    %v1667 = vld [vmem:[%s3 + $0x100] sm:$0xff]
    %v1668 = vld [vmem:[%s3 + $0x108] sm:$0xff]
    %v1669 = vld [vmem:[%s3 + $0x110] sm:$0xff]
    %v1670 = vld [vmem:[%s3 + $0x118] sm:$0xff]
    %v1671 = vld [vmem:[%s3 + $0x120] sm:$0xff]
    %v1672 = vld [vmem:[%s3 + $0x128] sm:$0xff]
    %v1673 = vld [vmem:[%s3 + $0x130] sm:$0xff]
    %v1674 = vld [vmem:[%s3 + $0x138] sm:$0xff]
    %v1675 = vld [vmem:[%s3 + $0x140] sm:$0xff]
    %v1676 = vld [vmem:[%s3 + $0x148] sm:$0xff]
    %v1677 = vld [vmem:[%s3 + $0x150] sm:$0xff]
    %v1678 = vld [vmem:[%s3 + $0x158] sm:$0xff]
    %v1679 = vld [vmem:[%s3 + $0x160] sm:$0xff]
    %v1680 = vld [vmem:[%s3 + $0x168] sm:$0xff]
    %v1681 = vld [vmem:[%s3 + $0x170] sm:$0xff]
    %v1682 = vld [vmem:[%s3 + $0x178] sm:$0xff]
    %v1683 = vld [vmem:[%s3 + $0x180] sm:$0xff]
    %v1684 = vld [vmem:[%s3 + $0x188] sm:$0xff]
    %v1685 = vld [vmem:[%s3 + $0x190] sm:$0xff]
    %v1686 = vld [vmem:[%s3 + $0x198] sm:$0xff]
    %v1687 = vld [vmem:[%s3 + $0x1a0] sm:$0xff]
    %v1688 = vld [vmem:[%s3 + $0x1a8] sm:$0xff]
    %v1689 = vld [vmem:[%s3 + $0x1b0] sm:$0xff]
    %v1690 = vld [vmem:[%s3 + $0x1b8] sm:$0xff]
    %v1691 = vld [vmem:[%s3 + $0x1c0] sm:$0xff]
    %v1692 = vld [vmem:[%s3 + $0x1c8] sm:$0xff]
    %v1693 = vld [vmem:[%s3 + $0x1d0] sm:$0xff]
    %v1694 = vld [vmem:[%s3 + $0x1d8] sm:$0xff]
    %v1695 = vld [vmem:[%s3 + $0x1e0] sm:$0xff]
    %v1696 = vld [vmem:[%s3 + $0x1e8] sm:$0xff]
    %v1697 = vld [vmem:[%s3 + $0x1f0] sm:$0xff]
    %v1698 = vld [vmem:[%s3 + $0x1f8] sm:$0xff]
    %v1699 = vld [vmem:[%s3 + $0x200] sm:$0xff]
    %v1700 = vld [vmem:[%s3 + $0x208] sm:$0xff]
    %v1701 = vld [vmem:[%s3 + $0x210] sm:$0xff]
    %v1702 = vld [vmem:[%s3 + $0x218] sm:$0xff]
    %v1703 = vld [vmem:[%s3 + $0x220] sm:$0xff]
    %v1704 = vld [vmem:[%s3 + $0x228] sm:$0xff]
    %v1705 = vld [vmem:[%s3 + $0x230] sm:$0xff]
    %v1706 = vld [vmem:[%s3 + $0x238] sm:$0xff]
    %v1707 = vld [vmem:[%s3 + $0x240] sm:$0xff]
    %v1708 = vld [vmem:[%s3 + $0x248] sm:$0xff]
    %v1709 = vld [vmem:[%s3 + $0x250] sm:$0xff]
    %v1710 = vld [vmem:[%s3 + $0x258] sm:$0xff]
    %v1711 = vld [vmem:[%s3 + $0x260] sm:$0xff]
    %v1712 = vld [vmem:[%s3 + $0x268] sm:$0xff]
    %v1713 = vld [vmem:[%s3 + $0x270] sm:$0xff]
    %v1714 = vld [vmem:[%s3 + $0x278] sm:$0xff]
    %v1715 = vld [vmem:[%s3 + $0x280] sm:$0xff]
    %v1716 = vld [vmem:[%s3 + $0x288] sm:$0xff]
    %v1717 = vld [vmem:[%s3 + $0x290] sm:$0xff]
    %v1718 = vld [vmem:[%s3 + $0x298] sm:$0xff]
    %v1719 = vld [vmem:[%s3 + $0x2a0] sm:$0xff]
    %v1720 = vld [vmem:[%s3 + $0x2a8] sm:$0xff]
    %v1721 = vld [vmem:[%s3 + $0x2b0] sm:$0xff]
    %v1722 = vld [vmem:[%s3 + $0x2b8] sm:$0xff]
    %v1723 = vld [vmem:[%s3 + $0x2c0] sm:$0xff]
    %v1724 = vld [vmem:[%s3 + $0x2c8] sm:$0xff]
    %v1725 = vld [vmem:[%s3 + $0x2d0] sm:$0xff]
    %v1726 = vld [vmem:[%s3 + $0x2d8] sm:$0xff]
    %v1727 = vld [vmem:[%s3 + $0x2e0] sm:$0xff]
    %v1728 = vld [vmem:[%s3 + $0x2e8] sm:$0xff]
    %v1729 = vld [vmem:[%s3 + $0x2f0] sm:$0xff]
    %v1730 = vld [vmem:[%s3 + $0x2f8] sm:$0xff]
    %v1731 = vld [vmem:[%s3 + $0x300] sm:$0xff]
    %v1732 = vld [vmem:[%s3 + $0x308] sm:$0xff]
    %v1733 = vld [vmem:[%s3 + $0x310] sm:$0xff]
    %v1734 = vld [vmem:[%s3 + $0x318] sm:$0xff]
    %v1735 = vld [vmem:[%s3 + $0x320] sm:$0xff]
    %v1736 = vld [vmem:[%s3 + $0x328] sm:$0xff]
    %v1737 = vld [vmem:[%s3 + $0x330] sm:$0xff]
    %v1738 = vld [vmem:[%s3 + $0x338] sm:$0xff]
    %v1739 = vld [vmem:[%s3 + $0x340] sm:$0xff]
    %v1740 = vld [vmem:[%s3 + $0x348] sm:$0xff]
    %v1741 = vld [vmem:[%s3 + $0x350] sm:$0xff]
    %v1742 = vld [vmem:[%s3 + $0x358] sm:$0xff]
    %v1743 = vld [vmem:[%s3 + $0x360] sm:$0xff]
    %v1744 = vld [vmem:[%s3 + $0x368] sm:$0xff]
    %v1745 = vld [vmem:[%s3 + $0x370] sm:$0xff]
    %v1746 = vld [vmem:[%s3 + $0x378] sm:$0xff]
    %v1747 = vld [vmem:[%s3 + $0x380] sm:$0xff]
    %v1748 = vld [vmem:[%s3 + $0x388] sm:$0xff]
    %v1749 = vld [vmem:[%s3 + $0x390] sm:$0xff]
    %v1750 = vld [vmem:[%s3 + $0x398] sm:$0xff]
    %v1751 = vld [vmem:[%s3 + $0x3a0] sm:$0xff]
    %v1752 = vld [vmem:[%s3 + $0x3a8] sm:$0xff]
    %v1753 = vld [vmem:[%s3 + $0x3b0] sm:$0xff]
    %v1754 = vld [vmem:[%s3 + $0x3b8] sm:$0xff]
    %v1755 = vld [vmem:[%s3 + $0x3c0] sm:$0xff]
    %v1756 = vld [vmem:[%s3 + $0x3c8] sm:$0xff]
    %v1757 = vld [vmem:[%s3 + $0x3d0] sm:$0xff]
    %v1758 = vld [vmem:[%s3 + $0x3d8] sm:$0xff]
    %v1759 = vld [vmem:[%s3 + $0x3e0] sm:$0xff]
    %v1760 = vld [vmem:[%s3 + $0x3e8] sm:$0xff]
    %v1761 = vld [vmem:[%s3 + $0x3f0] sm:$0xff]
    %v1762 = vld [vmem:[%s3 + $0x3f8] sm:$0xff]
    %v1763 = vld [vmem:[%s3 + $0x400] sm:$0xff]
    %v1764 = vld [vmem:[%s3 + $0x408] sm:$0xff]
    %v1765 = vld [vmem:[%s3 + $0x410] sm:$0xff]
    %v1766 = vld [vmem:[%s3 + $0x418] sm:$0xff]
    %v1767 = vld [vmem:[%s3 + $0x420] sm:$0xff]
    %v1768 = vld [vmem:[%s3 + $0x428] sm:$0xff]
    %v1769 = vld [vmem:[%s3 + $0x430] sm:$0xff]
    %v1770 = vld [vmem:[%s3 + $0x438] sm:$0xff]
    %v1771 = vld [vmem:[%s3 + $0x440] sm:$0xff]
    %v1772 = vld [vmem:[%s3 + $0x448] sm:$0xff]
    %v1773 = vld [vmem:[%s3 + $0x450] sm:$0xff]
    %v1774 = vld [vmem:[%s3 + $0x458] sm:$0xff]
    %v1775 = vld [vmem:[%s3 + $0x460] sm:$0xff]
    %v1776 = vld [vmem:[%s3 + $0x468] sm:$0xff]
    %v1777 = vld [vmem:[%s3 + $0x470] sm:$0xff]
    %v1778 = vld [vmem:[%s3 + $0x478] sm:$0xff]
    %v1779 = vld [vmem:[%s3 + $0x480] sm:$0xff]
    %v1780 = vld [vmem:[%s3 + $0x488] sm:$0xff]
    %v1781 = vld [vmem:[%s3 + $0x490] sm:$0xff]
    %v1782 = vld [vmem:[%s3 + $0x498] sm:$0xff]
    %v1783 = vld [vmem:[%s3 + $0x4a0] sm:$0xff]
    %v1784 = vld [vmem:[%s3 + $0x4a8] sm:$0xff]
    %v1785 = vld [vmem:[%s3 + $0x4b0] sm:$0xff]
    %v1786 = vld [vmem:[%s3 + $0x4b8] sm:$0xff]
    %v1787 = vld [vmem:[%s3 + $0x4c0] sm:$0xff]
    %v1788 = vld [vmem:[%s3 + $0x4c8] sm:$0xff]
    %v1789 = vld [vmem:[%s3 + $0x4d0] sm:$0xff]
    %v1790 = vld [vmem:[%s3 + $0x4d8] sm:$0xff]
    %v1791 = vld [vmem:[%s3 + $0x4e0] sm:$0xff]
    %v1792 = vld [vmem:[%s3 + $0x4e8] sm:$0xff]
    %v1793 = vld [vmem:[%s3 + $0x4f0] sm:$0xff]
    %v1794 = vld [vmem:[%s3 + $0x4f8] sm:$0xff]
    %v1795 = vld [vmem:[%s3 + $0x500] sm:$0xff]
    %v1796 = vld [vmem:[%s3 + $0x508] sm:$0xff]
    %v1797 = vld [vmem:[%s3 + $0x510] sm:$0xff]
    %v1798 = vld [vmem:[%s3 + $0x518] sm:$0xff]
    %v1799 = vld [vmem:[%s3 + $0x520] sm:$0xff]
    %v1800 = vld [vmem:[%s3 + $0x528] sm:$0xff]
    %v1801 = vld [vmem:[%s3 + $0x530] sm:$0xff]
    %v1802 = vld [vmem:[%s3 + $0x538] sm:$0xff]
    %v1803 = vld [vmem:[%s3 + $0x540] sm:$0xff]
    %v1804 = vld [vmem:[%s3 + $0x548] sm:$0xff]
    %v1805 = vld [vmem:[%s3 + $0x550] sm:$0xff]
    %v1806 = vld [vmem:[%s3 + $0x558] sm:$0xff]
    %v1807 = vld [vmem:[%s3 + $0x560] sm:$0xff]
    %v1808 = vld [vmem:[%s3 + $0x568] sm:$0xff]
    %v1809 = vld [vmem:[%s3 + $0x570] sm:$0xff]
    %v1810 = vld [vmem:[%s3 + $0x578] sm:$0xff]
    %v1811 = vld [vmem:[%s3 + $0x580] sm:$0xff]
    %v1812 = vld [vmem:[%s3 + $0x588] sm:$0xff]
    %v1813 = vld [vmem:[%s3 + $0x590] sm:$0xff]
    %v1814 = vld [vmem:[%s3 + $0x598] sm:$0xff]
    %v1815 = vld [vmem:[%s3 + $0x5a0] sm:$0xff]
    %v1816 = vld [vmem:[%s3 + $0x5a8] sm:$0xff]
    %v1817 = vld [vmem:[%s3 + $0x5b0] sm:$0xff]
    %v1818 = vld [vmem:[%s3 + $0x5b8] sm:$0xff]
    %v1819 = vld [vmem:[%s3 + $0x5c0] sm:$0xff]
    %v1820 = vld [vmem:[%s3 + $0x5c8] sm:$0xff]
    %v1821 = vld [vmem:[%s3 + $0x5d0] sm:$0xff]
    %v1822 = vld [vmem:[%s3 + $0x5d8] sm:$0xff]
    %v1823 = vld [vmem:[%s3 + $0x5e0] sm:$0xff]
    %v1824 = vld [vmem:[%s3 + $0x5e8] sm:$0xff]
    %v1825 = vld [vmem:[%s3 + $0x5f0] sm:$0xff]
    %v1826 = vld [vmem:[%s3 + $0x5f8] sm:$0xff]
    %1828 = vset.pattern.permute.xlu0 0
    %1829 = vperm.xlu0 %1828, %v1444
    %v1830 = vpop.permute.xlu0 %1829
    %1833 = vset.pattern.permute.xlu0 0
    %1834 = vperm.xlu0 %1833, %v1446
    %v1835 = vpop.permute.xlu0 %1834
    %1838 = vset.pattern.permute.xlu0 0
    %1839 = vperm.xlu0 %1838, %v1448
    %v1840 = vpop.permute.xlu0 %1839
    %1843 = vset.pattern.permute.xlu0 0
    %1844 = vperm.xlu0 %1843, %v1450
    %v1845 = vpop.permute.xlu0 %1844
    %1848 = vset.pattern.permute.xlu0 0
    %1849 = vperm.xlu0 %1848, %v1452
    %v1850 = vpop.permute.xlu0 %1849
    %1853 = vset.pattern.permute.xlu0 0
    %1854 = vperm.xlu0 %1853, %v1454
    %v1855 = vpop.permute.xlu0 %1854
    %1858 = vset.pattern.permute.xlu0 0
    %1859 = vperm.xlu0 %1858, %v1456
    %v1860 = vpop.permute.xlu0 %1859
    %1863 = vset.pattern.permute.xlu0 0
    %1864 = vperm.xlu0 %1863, %v1458
    %v1865 = vpop.permute.xlu0 %1864
    %1868 = vset.pattern.permute.xlu0 0
    %1869 = vperm.xlu0 %1868, %v1460
    %v1870 = vpop.permute.xlu0 %1869
    %1873 = vset.pattern.permute.xlu0 0
    %1874 = vperm.xlu0 %1873, %v1462
    %v1875 = vpop.permute.xlu0 %1874
    %1878 = vset.pattern.permute.xlu0 0
    %1879 = vperm.xlu0 %1878, %v1464
    %v1880 = vpop.permute.xlu0 %1879
    %1883 = vset.pattern.permute.xlu0 0
    %1884 = vperm.xlu0 %1883, %v1466
    %v1885 = vpop.permute.xlu0 %1884
    %1888 = vset.pattern.permute.xlu0 0
    %1889 = vperm.xlu0 %1888, %v1468
    %v1890 = vpop.permute.xlu0 %1889
    %1893 = vset.pattern.permute.xlu0 0
    %1894 = vperm.xlu0 %1893, %v1470
    %v1895 = vpop.permute.xlu0 %1894
    %1898 = vset.pattern.permute.xlu0 0
    %1899 = vperm.xlu0 %1898, %v1472
    %v1900 = vpop.permute.xlu0 %1899
    %1903 = vset.pattern.permute.xlu0 0
    %1904 = vperm.xlu0 %1903, %v1474
    %v1905 = vpop.permute.xlu0 %1904
    %1908 = vset.pattern.permute.xlu0 0
    %1909 = vperm.xlu0 %1908, %v1476
    %v1910 = vpop.permute.xlu0 %1909
    %1913 = vset.pattern.permute.xlu0 0
    %1914 = vperm.xlu0 %1913, %v1478
    %v1915 = vpop.permute.xlu0 %1914
    %1918 = vset.pattern.permute.xlu0 0
    %1919 = vperm.xlu0 %1918, %v1480
    %v1920 = vpop.permute.xlu0 %1919
    %1923 = vset.pattern.permute.xlu0 0
    %1924 = vperm.xlu0 %1923, %v1482
    %v1925 = vpop.permute.xlu0 %1924
    %1928 = vset.pattern.permute.xlu0 0
    %1929 = vperm.xlu0 %1928, %v1484
    %v1930 = vpop.permute.xlu0 %1929
    %1933 = vset.pattern.permute.xlu0 0
    %1934 = vperm.xlu0 %1933, %v1486
    %v1935 = vpop.permute.xlu0 %1934
    %1938 = vset.pattern.permute.xlu0 0
    %1939 = vperm.xlu0 %1938, %v1488
    %v1940 = vpop.permute.xlu0 %1939
    %1943 = vset.pattern.permute.xlu0 0
    %1944 = vperm.xlu0 %1943, %v1490
    %v1945 = vpop.permute.xlu0 %1944
    %1948 = vset.pattern.permute.xlu0 0
    %1949 = vperm.xlu0 %1948, %v1492
    %v1950 = vpop.permute.xlu0 %1949
    %1953 = vset.pattern.permute.xlu0 0
    %1954 = vperm.xlu0 %1953, %v1494
    %v1955 = vpop.permute.xlu0 %1954
    %1958 = vset.pattern.permute.xlu0 0
    %1959 = vperm.xlu0 %1958, %v1496
    %v1960 = vpop.permute.xlu0 %1959
    %1963 = vset.pattern.permute.xlu0 0
    %1964 = vperm.xlu0 %1963, %v1498
    %v1965 = vpop.permute.xlu0 %1964
    %1968 = vset.pattern.permute.xlu0 0
    %1969 = vperm.xlu0 %1968, %v1500
    %v1970 = vpop.permute.xlu0 %1969
    %1973 = vset.pattern.permute.xlu0 0
    %1974 = vperm.xlu0 %1973, %v1502
    %v1975 = vpop.permute.xlu0 %1974
    %1978 = vset.pattern.permute.xlu0 0
    %1979 = vperm.xlu0 %1978, %v1504
    %v1980 = vpop.permute.xlu0 %1979
    %1983 = vset.pattern.permute.xlu0 0
    %1984 = vperm.xlu0 %1983, %v1506
    %v1985 = vpop.permute.xlu0 %1984
    %1988 = vset.pattern.permute.xlu0 0
    %1989 = vperm.xlu0 %1988, %v1508
    %v1990 = vpop.permute.xlu0 %1989
    %1993 = vset.pattern.permute.xlu0 0
    %1994 = vperm.xlu0 %1993, %v1510
    %v1995 = vpop.permute.xlu0 %1994
    %1998 = vset.pattern.permute.xlu0 0
    %1999 = vperm.xlu0 %1998, %v1512
    %v2000 = vpop.permute.xlu0 %1999
    %2003 = vset.pattern.permute.xlu0 0
    %2004 = vperm.xlu0 %2003, %v1514
    %v2005 = vpop.permute.xlu0 %2004
    %2008 = vset.pattern.permute.xlu0 0
    %2009 = vperm.xlu0 %2008, %v1516
    %v2010 = vpop.permute.xlu0 %2009
    %2013 = vset.pattern.permute.xlu0 0
    %2014 = vperm.xlu0 %2013, %v1518
    %v2015 = vpop.permute.xlu0 %2014
    %2018 = vset.pattern.permute.xlu0 0
    %2019 = vperm.xlu0 %2018, %v1520
    %v2020 = vpop.permute.xlu0 %2019
    %2023 = vset.pattern.permute.xlu0 0
    %2024 = vperm.xlu0 %2023, %v1522
    %v2025 = vpop.permute.xlu0 %2024
    %2028 = vset.pattern.permute.xlu0 0
    %2029 = vperm.xlu0 %2028, %v1524
    %v2030 = vpop.permute.xlu0 %2029
    %2033 = vset.pattern.permute.xlu0 0
    %2034 = vperm.xlu0 %2033, %v1526
    %v2035 = vpop.permute.xlu0 %2034
    %2038 = vset.pattern.permute.xlu0 0
    %2039 = vperm.xlu0 %2038, %v1528
    %v2040 = vpop.permute.xlu0 %2039
    %2043 = vset.pattern.permute.xlu0 0
    %2044 = vperm.xlu0 %2043, %v1530
    %v2045 = vpop.permute.xlu0 %2044
    %2048 = vset.pattern.permute.xlu0 0
    %2049 = vperm.xlu0 %2048, %v1532
    %v2050 = vpop.permute.xlu0 %2049
    %2053 = vset.pattern.permute.xlu0 0
    %2054 = vperm.xlu0 %2053, %v1534
    %v2055 = vpop.permute.xlu0 %2054
    %2058 = vset.pattern.permute.xlu0 0
    %2059 = vperm.xlu0 %2058, %v1536
    %v2060 = vpop.permute.xlu0 %2059
    %2063 = vset.pattern.permute.xlu0 0
    %2064 = vperm.xlu0 %2063, %v1538
    %v2065 = vpop.permute.xlu0 %2064
    %2068 = vset.pattern.permute.xlu0 0
    %2069 = vperm.xlu0 %2068, %v1540
    %v2070 = vpop.permute.xlu0 %2069
    %2073 = vset.pattern.permute.xlu0 0
    %2074 = vperm.xlu0 %2073, %v1542
    %v2075 = vpop.permute.xlu0 %2074
    %2078 = vset.pattern.permute.xlu0 0
    %2079 = vperm.xlu0 %2078, %v1544
    %v2080 = vpop.permute.xlu0 %2079
    %2083 = vset.pattern.permute.xlu0 0
    %2084 = vperm.xlu0 %2083, %v1546
    %v2085 = vpop.permute.xlu0 %2084
    %2088 = vset.pattern.permute.xlu0 0
    %2089 = vperm.xlu0 %2088, %v1548
    %v2090 = vpop.permute.xlu0 %2089
    %2093 = vset.pattern.permute.xlu0 0
    %2094 = vperm.xlu0 %2093, %v1550
    %v2095 = vpop.permute.xlu0 %2094
    %2098 = vset.pattern.permute.xlu0 0
    %2099 = vperm.xlu0 %2098, %v1552
    %v2100 = vpop.permute.xlu0 %2099
    %2103 = vset.pattern.permute.xlu0 0
    %2104 = vperm.xlu0 %2103, %v1554
    %v2105 = vpop.permute.xlu0 %2104
    %2108 = vset.pattern.permute.xlu0 0
    %2109 = vperm.xlu0 %2108, %v1556
    %v2110 = vpop.permute.xlu0 %2109
    %2113 = vset.pattern.permute.xlu0 0
    %2114 = vperm.xlu0 %2113, %v1558
    %v2115 = vpop.permute.xlu0 %2114
    %2118 = vset.pattern.permute.xlu0 0
    %2119 = vperm.xlu0 %2118, %v1560
    %v2120 = vpop.permute.xlu0 %2119
    %2123 = vset.pattern.permute.xlu0 0
    %2124 = vperm.xlu0 %2123, %v1562
    %v2125 = vpop.permute.xlu0 %2124
    %2128 = vset.pattern.permute.xlu0 0
    %2129 = vperm.xlu0 %2128, %v1564
    %v2130 = vpop.permute.xlu0 %2129
    %2133 = vset.pattern.permute.xlu0 0
    %2134 = vperm.xlu0 %2133, %v1566
    %v2135 = vpop.permute.xlu0 %2134
    %2138 = vset.pattern.permute.xlu0 0
    %2139 = vperm.xlu0 %2138, %v1568
    %v2140 = vpop.permute.xlu0 %2139
    %2143 = vset.pattern.permute.xlu0 0
    %2144 = vperm.xlu0 %2143, %v1570
    %v2145 = vpop.permute.xlu0 %2144
    %2148 = vset.pattern.permute.xlu0 0
    %2149 = vperm.xlu0 %2148, %v1572
    %v2150 = vpop.permute.xlu0 %2149
    %2153 = vset.pattern.permute.xlu0 0
    %2154 = vperm.xlu0 %2153, %v1574
    %v2155 = vpop.permute.xlu0 %2154
    %2158 = vset.pattern.permute.xlu0 0
    %2159 = vperm.xlu0 %2158, %v1576
    %v2160 = vpop.permute.xlu0 %2159
    %2163 = vset.pattern.permute.xlu0 0
    %2164 = vperm.xlu0 %2163, %v1578
    %v2165 = vpop.permute.xlu0 %2164
    %2168 = vset.pattern.permute.xlu0 0
    %2169 = vperm.xlu0 %2168, %v1580
    %v2170 = vpop.permute.xlu0 %2169
    %2173 = vset.pattern.permute.xlu0 0
    %2174 = vperm.xlu0 %2173, %v1582
    %v2175 = vpop.permute.xlu0 %2174
    %2178 = vset.pattern.permute.xlu0 0
    %2179 = vperm.xlu0 %2178, %v1584
    %v2180 = vpop.permute.xlu0 %2179
    %2183 = vset.pattern.permute.xlu0 0
    %2184 = vperm.xlu0 %2183, %v1586
    %v2185 = vpop.permute.xlu0 %2184
    %2188 = vset.pattern.permute.xlu0 0
    %2189 = vperm.xlu0 %2188, %v1588
    %v2190 = vpop.permute.xlu0 %2189
    %2193 = vset.pattern.permute.xlu0 0
    %2194 = vperm.xlu0 %2193, %v1590
    %v2195 = vpop.permute.xlu0 %2194
    %2198 = vset.pattern.permute.xlu0 0
    %2199 = vperm.xlu0 %2198, %v1592
    %v2200 = vpop.permute.xlu0 %2199
    %2203 = vset.pattern.permute.xlu0 0
    %2204 = vperm.xlu0 %2203, %v1594
    %v2205 = vpop.permute.xlu0 %2204
    %2208 = vset.pattern.permute.xlu0 0
    %2209 = vperm.xlu0 %2208, %v1596
    %v2210 = vpop.permute.xlu0 %2209
    %2213 = vset.pattern.permute.xlu0 0
    %2214 = vperm.xlu0 %2213, %v1598
    %v2215 = vpop.permute.xlu0 %2214
    %2218 = vset.pattern.permute.xlu0 0
    %2219 = vperm.xlu0 %2218, %v1600
    %v2220 = vpop.permute.xlu0 %2219
    %2223 = vset.pattern.permute.xlu0 0
    %2224 = vperm.xlu0 %2223, %v1602
    %v2225 = vpop.permute.xlu0 %2224
    %2228 = vset.pattern.permute.xlu0 0
    %2229 = vperm.xlu0 %2228, %v1604
    %v2230 = vpop.permute.xlu0 %2229
    %2233 = vset.pattern.permute.xlu0 0
    %2234 = vperm.xlu0 %2233, %v1606
    %v2235 = vpop.permute.xlu0 %2234
    %2238 = vset.pattern.permute.xlu0 0
    %2239 = vperm.xlu0 %2238, %v1608
    %v2240 = vpop.permute.xlu0 %2239
    %2243 = vset.pattern.permute.xlu0 0
    %2244 = vperm.xlu0 %2243, %v1610
    %v2245 = vpop.permute.xlu0 %2244
    %2248 = vset.pattern.permute.xlu0 0
    %2249 = vperm.xlu0 %2248, %v1612
    %v2250 = vpop.permute.xlu0 %2249
    %2253 = vset.pattern.permute.xlu0 0
    %2254 = vperm.xlu0 %2253, %v1614
    %v2255 = vpop.permute.xlu0 %2254
    %2258 = vset.pattern.permute.xlu0 0
    %2259 = vperm.xlu0 %2258, %v1616
    %v2260 = vpop.permute.xlu0 %2259
    %2263 = vset.pattern.permute.xlu0 0
    %2264 = vperm.xlu0 %2263, %v1618
    %v2265 = vpop.permute.xlu0 %2264
    %2268 = vset.pattern.permute.xlu0 0
    %2269 = vperm.xlu0 %2268, %v1620
    %v2270 = vpop.permute.xlu0 %2269
    %2273 = vset.pattern.permute.xlu0 0
    %2274 = vperm.xlu0 %2273, %v1622
    %v2275 = vpop.permute.xlu0 %2274
    %2278 = vset.pattern.permute.xlu0 0
    %2279 = vperm.xlu0 %2278, %v1624
    %v2280 = vpop.permute.xlu0 %2279
    %2283 = vset.pattern.permute.xlu0 0
    %2284 = vperm.xlu0 %2283, %v1626
    %v2285 = vpop.permute.xlu0 %2284
    %2288 = vset.pattern.permute.xlu0 0
    %2289 = vperm.xlu0 %2288, %v1628
    %v2290 = vpop.permute.xlu0 %2289
    %2293 = vset.pattern.permute.xlu0 0
    %2294 = vperm.xlu0 %2293, %v1630
    %v2295 = vpop.permute.xlu0 %2294
    %2298 = vset.pattern.permute.xlu0 0
    %2299 = vperm.xlu0 %2298, %v1632
    %v2300 = vpop.permute.xlu0 %2299
    %2303 = vset.pattern.permute.xlu0 0
    %2304 = vperm.xlu0 %2303, %v1634
    %v2305 = vpop.permute.xlu0 %2304
    %v2307 = vmul.f32 %v1635, %v1830
    %v2308 = vmul.f32 %v1636, %v1830
    %v2309 = vmul.f32 %v1637, %v1835
    %v2310 = vmul.f32 %v1638, %v1835
    %v2311 = vmul.f32 %v1639, %v1840
    %v2312 = vmul.f32 %v1640, %v1840
    %v2313 = vmul.f32 %v1641, %v1845
    %v2314 = vmul.f32 %v1642, %v1845
    %v2315 = vmul.f32 %v1643, %v1850
    %v2316 = vmul.f32 %v1644, %v1850
    %v2317 = vmul.f32 %v1645, %v1855
    %v2318 = vmul.f32 %v1646, %v1855
    %v2319 = vmul.f32 %v1647, %v1860
    %v2320 = vmul.f32 %v1648, %v1860
    %v2321 = vmul.f32 %v1649, %v1865
    %v2322 = vmul.f32 %v1650, %v1865
    %v2323 = vmul.f32 %v1651, %v1870
    %v2324 = vmul.f32 %v1652, %v1870
    %v2325 = vmul.f32 %v1653, %v1875
    %v2326 = vmul.f32 %v1654, %v1875
    %v2327 = vmul.f32 %v1655, %v1880
    %v2328 = vmul.f32 %v1656, %v1880
    %v2329 = vmul.f32 %v1657, %v1885
    %v2330 = vmul.f32 %v1658, %v1885
    %v2331 = vmul.f32 %v1659, %v1890
    %v2332 = vmul.f32 %v1660, %v1890
    %v2333 = vmul.f32 %v1661, %v1895
    %v2334 = vmul.f32 %v1662, %v1895
    %v2335 = vmul.f32 %v1663, %v1900
    %v2336 = vmul.f32 %v1664, %v1900
    %v2337 = vmul.f32 %v1665, %v1905
    %v2338 = vmul.f32 %v1666, %v1905
    %v2339 = vmul.f32 %v1667, %v1910
    %v2340 = vmul.f32 %v1668, %v1910
    %v2341 = vmul.f32 %v1669, %v1915
    %v2342 = vmul.f32 %v1670, %v1915
    %v2343 = vmul.f32 %v1671, %v1920
    %v2344 = vmul.f32 %v1672, %v1920
    %v2345 = vmul.f32 %v1673, %v1925
    %v2346 = vmul.f32 %v1674, %v1925
    %v2347 = vmul.f32 %v1675, %v1930
    %v2348 = vmul.f32 %v1676, %v1930
    %v2349 = vmul.f32 %v1677, %v1935
    %v2350 = vmul.f32 %v1678, %v1935
    %v2351 = vmul.f32 %v1679, %v1940
    %v2352 = vmul.f32 %v1680, %v1940
    %v2353 = vmul.f32 %v1681, %v1945
    %v2354 = vmul.f32 %v1682, %v1945
    %v2355 = vmul.f32 %v1683, %v1950
    %v2356 = vmul.f32 %v1684, %v1950
    %v2357 = vmul.f32 %v1685, %v1955
    %v2358 = vmul.f32 %v1686, %v1955
    %v2359 = vmul.f32 %v1687, %v1960
    %v2360 = vmul.f32 %v1688, %v1960
    %v2361 = vmul.f32 %v1689, %v1965
    %v2362 = vmul.f32 %v1690, %v1965
    %v2363 = vmul.f32 %v1691, %v1970
    %v2364 = vmul.f32 %v1692, %v1970
    %v2365 = vmul.f32 %v1693, %v1975
    %v2366 = vmul.f32 %v1694, %v1975
    %v2367 = vmul.f32 %v1695, %v1980
    %v2368 = vmul.f32 %v1696, %v1980
    %v2369 = vmul.f32 %v1697, %v1985
    %v2370 = vmul.f32 %v1698, %v1985
    %v2371 = vmul.f32 %v1699, %v1990
    %v2372 = vmul.f32 %v1700, %v1990
    %v2373 = vmul.f32 %v1701, %v1995
    %v2374 = vmul.f32 %v1702, %v1995
    %v2375 = vmul.f32 %v1703, %v2000
    %v2376 = vmul.f32 %v1704, %v2000
    %v2377 = vmul.f32 %v1705, %v2005
    %v2378 = vmul.f32 %v1706, %v2005
    %v2379 = vmul.f32 %v1707, %v2010
    %v2380 = vmul.f32 %v1708, %v2010
    %v2381 = vmul.f32 %v1709, %v2015
    %v2382 = vmul.f32 %v1710, %v2015
    %v2383 = vmul.f32 %v1711, %v2020
    %v2384 = vmul.f32 %v1712, %v2020
    %v2385 = vmul.f32 %v1713, %v2025
    %v2386 = vmul.f32 %v1714, %v2025
    %v2387 = vmul.f32 %v1715, %v2030
    %v2388 = vmul.f32 %v1716, %v2030
    %v2389 = vmul.f32 %v1717, %v2035
    %v2390 = vmul.f32 %v1718, %v2035
    %v2391 = vmul.f32 %v1719, %v2040
    %v2392 = vmul.f32 %v1720, %v2040
    %v2393 = vmul.f32 %v1721, %v2045
    %v2394 = vmul.f32 %v1722, %v2045
    %v2395 = vmul.f32 %v1723, %v2050
    %v2396 = vmul.f32 %v1724, %v2050
    %v2397 = vmul.f32 %v1725, %v2055
    %v2398 = vmul.f32 %v1726, %v2055
    %v2399 = vmul.f32 %v1727, %v2060
    %v2400 = vmul.f32 %v1728, %v2060
    %v2401 = vmul.f32 %v1729, %v2065
    %v2402 = vmul.f32 %v1730, %v2065
    %v2403 = vmul.f32 %v1731, %v2070
    %v2404 = vmul.f32 %v1732, %v2070
    %v2405 = vmul.f32 %v1733, %v2075
    %v2406 = vmul.f32 %v1734, %v2075
    %v2407 = vmul.f32 %v1735, %v2080
    %v2408 = vmul.f32 %v1736, %v2080
    %v2409 = vmul.f32 %v1737, %v2085
    %v2410 = vmul.f32 %v1738, %v2085
    %v2411 = vmul.f32 %v1739, %v2090
    %v2412 = vmul.f32 %v1740, %v2090
    %v2413 = vmul.f32 %v1741, %v2095
    %v2414 = vmul.f32 %v1742, %v2095
    %v2415 = vmul.f32 %v1743, %v2100
    %v2416 = vmul.f32 %v1744, %v2100
    %v2417 = vmul.f32 %v1745, %v2105
    %v2418 = vmul.f32 %v1746, %v2105
    %v2419 = vmul.f32 %v1747, %v2110
    %v2420 = vmul.f32 %v1748, %v2110
    %v2421 = vmul.f32 %v1749, %v2115
    %v2422 = vmul.f32 %v1750, %v2115
    %v2423 = vmul.f32 %v1751, %v2120
    %v2424 = vmul.f32 %v1752, %v2120
    %v2425 = vmul.f32 %v1753, %v2125
    %v2426 = vmul.f32 %v1754, %v2125
    %v2427 = vmul.f32 %v1755, %v2130
    %v2428 = vmul.f32 %v1756, %v2130
    %v2429 = vmul.f32 %v1757, %v2135
    %v2430 = vmul.f32 %v1758, %v2135
    %v2431 = vmul.f32 %v1759, %v2140
    %v2432 = vmul.f32 %v1760, %v2140
    %v2433 = vmul.f32 %v1761, %v2145
    %v2434 = vmul.f32 %v1762, %v2145
    %v2435 = vmul.f32 %v1763, %v2150
    %v2436 = vmul.f32 %v1764, %v2150
    %v2437 = vmul.f32 %v1765, %v2155
    %v2438 = vmul.f32 %v1766, %v2155
    %v2439 = vmul.f32 %v1767, %v2160
    %v2440 = vmul.f32 %v1768, %v2160
    %v2441 = vmul.f32 %v1769, %v2165
    %v2442 = vmul.f32 %v1770, %v2165
    %v2443 = vmul.f32 %v1771, %v2170
    %v2444 = vmul.f32 %v1772, %v2170
    %v2445 = vmul.f32 %v1773, %v2175
    %v2446 = vmul.f32 %v1774, %v2175
    %v2447 = vmul.f32 %v1775, %v2180
    %v2448 = vmul.f32 %v1776, %v2180
    %v2449 = vmul.f32 %v1777, %v2185
    %v2450 = vmul.f32 %v1778, %v2185
    %v2451 = vmul.f32 %v1779, %v2190
    %v2452 = vmul.f32 %v1780, %v2190
    %v2453 = vmul.f32 %v1781, %v2195
    %v2454 = vmul.f32 %v1782, %v2195
    %v2455 = vmul.f32 %v1783, %v2200
    %v2456 = vmul.f32 %v1784, %v2200
    %v2457 = vmul.f32 %v1785, %v2205
    %v2458 = vmul.f32 %v1786, %v2205
    %v2459 = vmul.f32 %v1787, %v2210
    %v2460 = vmul.f32 %v1788, %v2210
    %v2461 = vmul.f32 %v1789, %v2215
    %v2462 = vmul.f32 %v1790, %v2215
    %v2463 = vmul.f32 %v1791, %v2220
    %v2464 = vmul.f32 %v1792, %v2220
    %v2465 = vmul.f32 %v1793, %v2225
    %v2466 = vmul.f32 %v1794, %v2225
    %v2467 = vmul.f32 %v1795, %v2230
    %v2468 = vmul.f32 %v1796, %v2230
    %v2469 = vmul.f32 %v1797, %v2235
    %v2470 = vmul.f32 %v1798, %v2235
    %v2471 = vmul.f32 %v1799, %v2240
    %v2472 = vmul.f32 %v1800, %v2240
    %v2473 = vmul.f32 %v1801, %v2245
    %v2474 = vmul.f32 %v1802, %v2245
    %v2475 = vmul.f32 %v1803, %v2250
    %v2476 = vmul.f32 %v1804, %v2250
    %v2477 = vmul.f32 %v1805, %v2255
    %v2478 = vmul.f32 %v1806, %v2255
    %v2479 = vmul.f32 %v1807, %v2260
    %v2480 = vmul.f32 %v1808, %v2260
    %v2481 = vmul.f32 %v1809, %v2265
    %v2482 = vmul.f32 %v1810, %v2265
    %v2483 = vmul.f32 %v1811, %v2270
    %v2484 = vmul.f32 %v1812, %v2270
    %v2485 = vmul.f32 %v1813, %v2275
    %v2486 = vmul.f32 %v1814, %v2275
    %v2487 = vmul.f32 %v1815, %v2280
    %v2488 = vmul.f32 %v1816, %v2280
    %v2489 = vmul.f32 %v1817, %v2285
    %v2490 = vmul.f32 %v1818, %v2285
    %v2491 = vmul.f32 %v1819, %v2290
    %v2492 = vmul.f32 %v1820, %v2290
    %v2493 = vmul.f32 %v1821, %v2295
    %v2494 = vmul.f32 %v1822, %v2295
    %v2495 = vmul.f32 %v1823, %v2300
    %v2496 = vmul.f32 %v1824, %v2300
    %v2497 = vmul.f32 %v1825, %v2305
    %v2498 = vmul.f32 %v1826, %v2305
    %v2499 = vld [vmem:[%s4] sm:$0xff]
    %v2500 = vld [vmem:[%s4 + $0x8] sm:$0xff]
    %v2501 = vld [vmem:[%s4 + $0x10] sm:$0xff]
    %v2502 = vld [vmem:[%s4 + $0x18] sm:$0xff]
    %v2503 = vld [vmem:[%s4 + $0x20] sm:$0xff]
    %v2504 = vld [vmem:[%s4 + $0x28] sm:$0xff]
    %v2505 = vld [vmem:[%s4 + $0x30] sm:$0xff]
    %v2506 = vld [vmem:[%s4 + $0x38] sm:$0xff]
    %v2507 = vld [vmem:[%s4 + $0x40] sm:$0xff]
    %v2508 = vld [vmem:[%s4 + $0x48] sm:$0xff]
    %v2509 = vld [vmem:[%s4 + $0x50] sm:$0xff]
    %v2510 = vld [vmem:[%s4 + $0x58] sm:$0xff]
    %v2511 = vld [vmem:[%s4 + $0x60] sm:$0xff]
    %v2512 = vld [vmem:[%s4 + $0x68] sm:$0xff]
    %v2513 = vld [vmem:[%s4 + $0x70] sm:$0xff]
    %v2514 = vld [vmem:[%s4 + $0x78] sm:$0xff]
    %v2515 = vld [vmem:[%s4 + $0x80] sm:$0xff]
    %v2516 = vld [vmem:[%s4 + $0x88] sm:$0xff]
    %v2517 = vld [vmem:[%s4 + $0x90] sm:$0xff]
    %v2518 = vld [vmem:[%s4 + $0x98] sm:$0xff]
    %v2519 = vld [vmem:[%s4 + $0xa0] sm:$0xff]
    %v2520 = vld [vmem:[%s4 + $0xa8] sm:$0xff]
    %v2521 = vld [vmem:[%s4 + $0xb0] sm:$0xff]
    %v2522 = vld [vmem:[%s4 + $0xb8] sm:$0xff]
    %v2523 = vld [vmem:[%s4 + $0xc0] sm:$0xff]
    %v2524 = vld [vmem:[%s4 + $0xc8] sm:$0xff]
    %v2525 = vld [vmem:[%s4 + $0xd0] sm:$0xff]
    %v2526 = vld [vmem:[%s4 + $0xd8] sm:$0xff]
    %v2527 = vld [vmem:[%s4 + $0xe0] sm:$0xff]
    %v2528 = vld [vmem:[%s4 + $0xe8] sm:$0xff]
    %v2529 = vld [vmem:[%s4 + $0xf0] sm:$0xff]
    %v2530 = vld [vmem:[%s4 + $0xf8] sm:$0xff]
    %v2531 = vld [vmem:[%s4 + $0x100] sm:$0xff]
    %v2532 = vld [vmem:[%s4 + $0x108] sm:$0xff]
    %v2533 = vld [vmem:[%s4 + $0x110] sm:$0xff]
    %v2534 = vld [vmem:[%s4 + $0x118] sm:$0xff]
    %v2535 = vld [vmem:[%s4 + $0x120] sm:$0xff]
    %v2536 = vld [vmem:[%s4 + $0x128] sm:$0xff]
    %v2537 = vld [vmem:[%s4 + $0x130] sm:$0xff]
    %v2538 = vld [vmem:[%s4 + $0x138] sm:$0xff]
    %v2539 = vld [vmem:[%s4 + $0x140] sm:$0xff]
    %v2540 = vld [vmem:[%s4 + $0x148] sm:$0xff]
    %v2541 = vld [vmem:[%s4 + $0x150] sm:$0xff]
    %v2542 = vld [vmem:[%s4 + $0x158] sm:$0xff]
    %v2543 = vld [vmem:[%s4 + $0x160] sm:$0xff]
    %v2544 = vld [vmem:[%s4 + $0x168] sm:$0xff]
    %v2545 = vld [vmem:[%s4 + $0x170] sm:$0xff]
    %v2546 = vld [vmem:[%s4 + $0x178] sm:$0xff]
    %v2547 = vld [vmem:[%s4 + $0x180] sm:$0xff]
    %v2548 = vld [vmem:[%s4 + $0x188] sm:$0xff]
    %v2549 = vld [vmem:[%s4 + $0x190] sm:$0xff]
    %v2550 = vld [vmem:[%s4 + $0x198] sm:$0xff]
    %v2551 = vld [vmem:[%s4 + $0x1a0] sm:$0xff]
    %v2552 = vld [vmem:[%s4 + $0x1a8] sm:$0xff]
    %v2553 = vld [vmem:[%s4 + $0x1b0] sm:$0xff]
    %v2554 = vld [vmem:[%s4 + $0x1b8] sm:$0xff]
    %v2555 = vld [vmem:[%s4 + $0x1c0] sm:$0xff]
    %v2556 = vld [vmem:[%s4 + $0x1c8] sm:$0xff]
    %v2557 = vld [vmem:[%s4 + $0x1d0] sm:$0xff]
    %v2558 = vld [vmem:[%s4 + $0x1d8] sm:$0xff]
    %v2559 = vld [vmem:[%s4 + $0x1e0] sm:$0xff]
    %v2560 = vld [vmem:[%s4 + $0x1e8] sm:$0xff]
    %v2561 = vld [vmem:[%s4 + $0x1f0] sm:$0xff]
    %v2562 = vld [vmem:[%s4 + $0x1f8] sm:$0xff]
    %v2563 = vld [vmem:[%s4 + $0x200] sm:$0xff]
    %v2564 = vld [vmem:[%s4 + $0x208] sm:$0xff]
    %v2565 = vld [vmem:[%s4 + $0x210] sm:$0xff]
    %v2566 = vld [vmem:[%s4 + $0x218] sm:$0xff]
    %v2567 = vld [vmem:[%s4 + $0x220] sm:$0xff]
    %v2568 = vld [vmem:[%s4 + $0x228] sm:$0xff]
    %v2569 = vld [vmem:[%s4 + $0x230] sm:$0xff]
    %v2570 = vld [vmem:[%s4 + $0x238] sm:$0xff]
    %v2571 = vld [vmem:[%s4 + $0x240] sm:$0xff]
    %v2572 = vld [vmem:[%s4 + $0x248] sm:$0xff]
    %v2573 = vld [vmem:[%s4 + $0x250] sm:$0xff]
    %v2574 = vld [vmem:[%s4 + $0x258] sm:$0xff]
    %v2575 = vld [vmem:[%s4 + $0x260] sm:$0xff]
    %v2576 = vld [vmem:[%s4 + $0x268] sm:$0xff]
    %v2577 = vld [vmem:[%s4 + $0x270] sm:$0xff]
    %v2578 = vld [vmem:[%s4 + $0x278] sm:$0xff]
    %v2579 = vld [vmem:[%s4 + $0x280] sm:$0xff]
    %v2580 = vld [vmem:[%s4 + $0x288] sm:$0xff]
    %v2581 = vld [vmem:[%s4 + $0x290] sm:$0xff]
    %v2582 = vld [vmem:[%s4 + $0x298] sm:$0xff]
    %v2583 = vld [vmem:[%s4 + $0x2a0] sm:$0xff]
    %v2584 = vld [vmem:[%s4 + $0x2a8] sm:$0xff]
    %v2585 = vld [vmem:[%s4 + $0x2b0] sm:$0xff]
    %v2586 = vld [vmem:[%s4 + $0x2b8] sm:$0xff]
    %v2587 = vld [vmem:[%s4 + $0x2c0] sm:$0xff]
    %v2588 = vld [vmem:[%s4 + $0x2c8] sm:$0xff]
    %v2589 = vld [vmem:[%s4 + $0x2d0] sm:$0xff]
    %v2590 = vld [vmem:[%s4 + $0x2d8] sm:$0xff]
    %v2591 = vld [vmem:[%s4 + $0x2e0] sm:$0xff]
    %v2592 = vld [vmem:[%s4 + $0x2e8] sm:$0xff]
    %v2593 = vld [vmem:[%s4 + $0x2f0] sm:$0xff]
    %v2594 = vld [vmem:[%s4 + $0x2f8] sm:$0xff]
    %v2595 = vld [vmem:[%s4 + $0x300] sm:$0xff]
    %v2596 = vld [vmem:[%s4 + $0x308] sm:$0xff]
    %v2597 = vld [vmem:[%s4 + $0x310] sm:$0xff]
    %v2598 = vld [vmem:[%s4 + $0x318] sm:$0xff]
    %v2599 = vld [vmem:[%s4 + $0x320] sm:$0xff]
    %v2600 = vld [vmem:[%s4 + $0x328] sm:$0xff]
    %v2601 = vld [vmem:[%s4 + $0x330] sm:$0xff]
    %v2602 = vld [vmem:[%s4 + $0x338] sm:$0xff]
    %v2603 = vld [vmem:[%s4 + $0x340] sm:$0xff]
    %v2604 = vld [vmem:[%s4 + $0x348] sm:$0xff]
    %v2605 = vld [vmem:[%s4 + $0x350] sm:$0xff]
    %v2606 = vld [vmem:[%s4 + $0x358] sm:$0xff]
    %v2607 = vld [vmem:[%s4 + $0x360] sm:$0xff]
    %v2608 = vld [vmem:[%s4 + $0x368] sm:$0xff]
    %v2609 = vld [vmem:[%s4 + $0x370] sm:$0xff]
    %v2610 = vld [vmem:[%s4 + $0x378] sm:$0xff]
    %v2611 = vld [vmem:[%s4 + $0x380] sm:$0xff]
    %v2612 = vld [vmem:[%s4 + $0x388] sm:$0xff]
    %v2613 = vld [vmem:[%s4 + $0x390] sm:$0xff]
    %v2614 = vld [vmem:[%s4 + $0x398] sm:$0xff]
    %v2615 = vld [vmem:[%s4 + $0x3a0] sm:$0xff]
    %v2616 = vld [vmem:[%s4 + $0x3a8] sm:$0xff]
    %v2617 = vld [vmem:[%s4 + $0x3b0] sm:$0xff]
    %v2618 = vld [vmem:[%s4 + $0x3b8] sm:$0xff]
    %v2619 = vld [vmem:[%s4 + $0x3c0] sm:$0xff]
    %v2620 = vld [vmem:[%s4 + $0x3c8] sm:$0xff]
    %v2621 = vld [vmem:[%s4 + $0x3d0] sm:$0xff]
    %v2622 = vld [vmem:[%s4 + $0x3d8] sm:$0xff]
    %v2623 = vld [vmem:[%s4 + $0x3e0] sm:$0xff]
    %v2624 = vld [vmem:[%s4 + $0x3e8] sm:$0xff]
    %v2625 = vld [vmem:[%s4 + $0x3f0] sm:$0xff]
    %v2626 = vld [vmem:[%s4 + $0x3f8] sm:$0xff]
    %v2627 = vld [vmem:[%s4 + $0x400] sm:$0xff]
    %v2628 = vld [vmem:[%s4 + $0x408] sm:$0xff]
    %v2629 = vld [vmem:[%s4 + $0x410] sm:$0xff]
    %v2630 = vld [vmem:[%s4 + $0x418] sm:$0xff]
    %v2631 = vld [vmem:[%s4 + $0x420] sm:$0xff]
    %v2632 = vld [vmem:[%s4 + $0x428] sm:$0xff]
    %v2633 = vld [vmem:[%s4 + $0x430] sm:$0xff]
    %v2634 = vld [vmem:[%s4 + $0x438] sm:$0xff]
    %v2635 = vld [vmem:[%s4 + $0x440] sm:$0xff]
    %v2636 = vld [vmem:[%s4 + $0x448] sm:$0xff]
    %v2637 = vld [vmem:[%s4 + $0x450] sm:$0xff]
    %v2638 = vld [vmem:[%s4 + $0x458] sm:$0xff]
    %v2639 = vld [vmem:[%s4 + $0x460] sm:$0xff]
    %v2640 = vld [vmem:[%s4 + $0x468] sm:$0xff]
    %v2641 = vld [vmem:[%s4 + $0x470] sm:$0xff]
    %v2642 = vld [vmem:[%s4 + $0x478] sm:$0xff]
    %2643 = vmatprep.subr.mxu0 %v2308
    %2644 = vmatpush1.msra.mxu0 %v2307
    %2645 = vmatprep.subr.mxu0 %v2310
    %2646 = vmatpush1.msra.mxu0 %v2309
    %2647 = vmatprep.subr.mxu0 %v2312
    %2648 = vmatpush1.msra.mxu0 %v2311
    %2649 = vmatprep.subr.mxu0 %v2314
    %2650 = vmatpush1.msra.mxu0 %v2313
    %2651 = vmatprep.subr.mxu0 %v2316
    %2652 = vmatpush1.msra.mxu0 %v2315
    %2653 = vmatprep.subr.mxu0 %v2318
    %2654 = vmatpush1.msra.mxu0 %v2317
    %2655 = vmatprep.subr.mxu0 %v2320
    %2656 = vmatpush1.msra.mxu0 %v2319
    %2657 = vmatprep.subr.mxu0 %v2322
    %2658 = vmatpush1.msra.mxu0 %v2321
    %2659 = vmatprep.subr.mxu0 %v2324
    %2660 = vmatpush1.msra.mxu0 %v2323
    %2661 = vmatprep.subr.mxu0 %v2326
    %2662 = vmatpush1.msra.mxu0 %v2325
    %2663 = vmatprep.subr.mxu0 %v2328
    %2664 = vmatpush1.msra.mxu0 %v2327
    %2665 = vmatprep.subr.mxu0 %v2330
    %2666 = vmatpush1.msra.mxu0 %v2329
    %2667 = vmatprep.subr.mxu0 %v2332
    %2668 = vmatpush1.msra.mxu0 %v2331
    %2669 = vmatprep.subr.mxu0 %v2334
    %2670 = vmatpush1.msra.mxu0 %v2333
    %2671 = vmatprep.subr.mxu0 %v2336
    %2672 = vmatpush1.msra.mxu0 %v2335
    %2673 = vmatprep.subr.mxu0 %v2338
    %2674 = vmatpush1.msra.mxu0 %v2337
    %2675 = vmatprep.subr.mxu0 %v2340
    %2676 = vmatpush1.msra.mxu0 %v2339
    %2677 = vmatprep.subr.mxu0 %v2342
    %2678 = vmatpush1.msra.mxu0 %v2341
    %2679 = vmatprep.subr.mxu0 %v2344
    %2680 = vmatpush1.msra.mxu0 %v2343
    %2681 = vmatprep.subr.mxu0 %v2346
    %2682 = vmatpush1.msra.mxu0 %v2345
    %2683 = vmatprep.subr.mxu0 %v2348
    %2684 = vmatpush1.msra.mxu0 %v2347
    %2685 = vmatprep.subr.mxu0 %v2350
    %2686 = vmatpush1.msra.mxu0 %v2349
    %2687 = vmatprep.subr.mxu0 %v2352
    %2688 = vmatpush1.msra.mxu0 %v2351
    %2689 = vmatprep.subr.mxu0 %v2354
    %2690 = vmatpush1.msra.mxu0 %v2353
    %2691 = vmatprep.subr.mxu0 %v2356
    %2692 = vmatpush1.msra.mxu0 %v2355
    %2693 = vmatprep.subr.mxu0 %v2358
    %2694 = vmatpush1.msra.mxu0 %v2357
    %2695 = vmatprep.subr.mxu0 %v2360
    %2696 = vmatpush1.msra.mxu0 %v2359
    %2697 = vmatprep.subr.mxu0 %v2362
    %2698 = vmatpush1.msra.mxu0 %v2361
    %2699 = vmatprep.subr.mxu0 %v2364
    %2700 = vmatpush1.msra.mxu0 %v2363
    %2701 = vmatprep.subr.mxu0 %v2366
    %2702 = vmatpush1.msra.mxu0 %v2365
    %2703 = vmatprep.subr.mxu0 %v2368
    %2704 = vmatpush1.msra.mxu0 %v2367
    %2705 = vmatprep.subr.mxu0 %v2370
    %2706 = vmatpush1.msra.mxu0 %v2369
    %2707 = vmatprep.mubr.f32.mxu0 %v2500
    %2708 = vmatmul.mubr.f32.gmra.mrb[0].mxu0 %v2499
    %v2709 = vpop.f32.mrb[0].mxu0
    %v2710 = vadd.f32 0.0, %v2709
    %v2711 = vpop.f32.mrb[0].mxu0
    %v2712 = vadd.f32 0.0, %v2711
    %2713 = vmatprep.mubr.f32.mxu0 %v2506
    %2714 = vmatmul.mubr.f32.gmra.mrb[0].mxu0 %v2505
    %v2715 = vpop.f32.mrb[0].mxu0
    %v2716 = vadd.f32 0.0, %v2715
    %v2717 = vpop.f32.mrb[0].mxu0
    %v2718 = vadd.f32 0.0, %v2717
    %2719 = vmatprep.mubr.f32.mxu0 %v2512
    %2720 = vmatmul.mubr.f32.gmra.mrb[0].mxu0 %v2511
    %v2721 = vpop.f32.mrb[0].mxu0
    %v2722 = vadd.f32 0.0, %v2721
    %v2723 = vpop.f32.mrb[0].mxu0
    %v2724 = vadd.f32 0.0, %v2723
    %2725 = vmatprep.mubr.f32.mxu0 %v2518
    %2726 = vmatmul.mubr.f32.gmra.mrb[0].mxu0 %v2517
    %v2727 = vpop.f32.mrb[0].mxu0
    %v2728 = vadd.f32 0.0, %v2727
    %v2729 = vpop.f32.mrb[0].mxu0
    %v2730 = vadd.f32 0.0, %v2729
    %2731 = vmatprep.mubr.f32.mxu0 %v2524
    %2732 = vmatmul.mubr.f32.gmra.mrb[0].mxu0 %v2523
    %v2733 = vpop.f32.mrb[0].mxu0
    %v2734 = vadd.f32 0.0, %v2733
    %v2735 = vpop.f32.mrb[0].mxu0
    %v2736 = vadd.f32 0.0, %v2735
    %2737 = vmatprep.mubr.f32.mxu0 %v2530
    %2738 = vmatmul.mubr.f32.gmra.mrb[0].mxu0 %v2529
    %v2739 = vpop.f32.mrb[0].mxu0
    %v2740 = vadd.f32 0.0, %v2739
    %v2741 = vpop.f32.mrb[0].mxu0
    %v2742 = vadd.f32 0.0, %v2741
    %2743 = vmatprep.mubr.f32.mxu0 %v2536
    %2744 = vmatmul.mubr.f32.gmra.mrb[0].mxu0 %v2535
    %v2745 = vpop.f32.mrb[0].mxu0
    %v2746 = vadd.f32 0.0, %v2745
    %v2747 = vpop.f32.mrb[0].mxu0
    %v2748 = vadd.f32 0.0, %v2747
    %2749 = vmatprep.mubr.f32.mxu0 %v2542
    %2750 = vmatmul.mubr.f32.gmra.mrb[0].mxu0 %v2541
    %v2751 = vpop.f32.mrb[0].mxu0
    %v2752 = vadd.f32 0.0, %v2751
    %v2753 = vpop.f32.mrb[0].mxu0
    %v2754 = vadd.f32 0.0, %v2753
    %2755 = vmatprep.mubr.f32.mxu0 %v2548
    %2756 = vmatmul.mubr.f32.gmra.mrb[0].mxu0 %v2547
    %v2757 = vpop.f32.mrb[0].mxu0
    %v2758 = vadd.f32 0.0, %v2757
    %v2759 = vpop.f32.mrb[0].mxu0
    %v2760 = vadd.f32 0.0, %v2759
    %2761 = vmatprep.mubr.f32.mxu0 %v2554
    %2762 = vmatmul.mubr.f32.gmra.mrb[0].mxu0 %v2553
    %v2763 = vpop.f32.mrb[0].mxu0
    %v2764 = vadd.f32 0.0, %v2763
    %v2765 = vpop.f32.mrb[0].mxu0
    %v2766 = vadd.f32 0.0, %v2765
    %2767 = vmatprep.mubr.f32.mxu0 %v2560
    %2768 = vmatmul.mubr.f32.gmra.mrb[0].mxu0 %v2559
    %v2769 = vpop.f32.mrb[0].mxu0
    %v2770 = vadd.f32 0.0, %v2769
    %v2771 = vpop.f32.mrb[0].mxu0
    %v2772 = vadd.f32 0.0, %v2771
    %2773 = vmatprep.mubr.f32.mxu0 %v2566
    %2774 = vmatmul.mubr.f32.gmra.mrb[0].mxu0 %v2565
    %v2775 = vpop.f32.mrb[0].mxu0
    %v2776 = vadd.f32 0.0, %v2775
    %v2777 = vpop.f32.mrb[0].mxu0
    %v2778 = vadd.f32 0.0, %v2777
    %2779 = vmatprep.mubr.f32.mxu0 %v2572
    %2780 = vmatmul.mubr.f32.gmra.mrb[0].mxu0 %v2571
    %v2781 = vpop.f32.mrb[0].mxu0
    %v2782 = vadd.f32 0.0, %v2781
    %v2783 = vpop.f32.mrb[0].mxu0
    %v2784 = vadd.f32 0.0, %v2783
    %2785 = vmatprep.mubr.f32.mxu0 %v2578
    %2786 = vmatmul.mubr.f32.gmra.mrb[0].mxu0 %v2577
    %v2787 = vpop.f32.mrb[0].mxu0
    %v2788 = vadd.f32 0.0, %v2787
    %v2789 = vpop.f32.mrb[0].mxu0
    %v2790 = vadd.f32 0.0, %v2789
    %2791 = vmatprep.mubr.f32.mxu0 %v2584
    %2792 = vmatmul.mubr.f32.gmra.mrb[0].mxu0 %v2583
    %v2793 = vpop.f32.mrb[0].mxu0
    %v2794 = vadd.f32 0.0, %v2793
    %v2795 = vpop.f32.mrb[0].mxu0
    %v2796 = vadd.f32 0.0, %v2795
    %2797 = vmatprep.mubr.f32.mxu0 %v2590
    %2798 = vmatmul.mubr.f32.gmra.mrb[0].mxu0 %v2589
    %v2799 = vpop.f32.mrb[0].mxu0
    %v2800 = vadd.f32 0.0, %v2799
    %v2801 = vpop.f32.mrb[0].mxu0
    %v2802 = vadd.f32 0.0, %v2801
    %2803 = vmatprep.mubr.f32.mxu0 %v2596
    %2804 = vmatmul.mubr.f32.gmra.mrb[0].mxu0 %v2595
    %v2805 = vpop.f32.mrb[0].mxu0
    %v2806 = vadd.f32 0.0, %v2805
    %v2807 = vpop.f32.mrb[0].mxu0
    %v2808 = vadd.f32 0.0, %v2807
    %2809 = vmatprep.mubr.f32.mxu0 %v2602
    %2810 = vmatmul.mubr.f32.gmra.mrb[0].mxu0 %v2601
    %v2811 = vpop.f32.mrb[0].mxu0
    %v2812 = vadd.f32 0.0, %v2811
    %v2813 = vpop.f32.mrb[0].mxu0
    %v2814 = vadd.f32 0.0, %v2813
    %2815 = vmatprep.mubr.f32.mxu0 %v2608
    %2816 = vmatmul.mubr.f32.gmra.mrb[0].mxu0 %v2607
    %v2817 = vpop.f32.mrb[0].mxu0
    %v2818 = vadd.f32 0.0, %v2817
    %v2819 = vpop.f32.mrb[0].mxu0
    %v2820 = vadd.f32 0.0, %v2819
    %2821 = vmatprep.mubr.f32.mxu0 %v2614
    %2822 = vmatmul.mubr.f32.gmra.mrb[0].mxu0 %v2613
    %v2823 = vpop.f32.mrb[0].mxu0
    %v2824 = vadd.f32 0.0, %v2823
    %v2825 = vpop.f32.mrb[0].mxu0
    %v2826 = vadd.f32 0.0, %v2825
    %2827 = vmatprep.mubr.f32.mxu0 %v2620
    %2828 = vmatmul.mubr.f32.gmra.mrb[0].mxu0 %v2619
    %v2829 = vpop.f32.mrb[0].mxu0
    %v2830 = vadd.f32 0.0, %v2829
    %v2831 = vpop.f32.mrb[0].mxu0
    %v2832 = vadd.f32 0.0, %v2831
    %2833 = vmatprep.mubr.f32.mxu0 %v2626
    %2834 = vmatmul.mubr.f32.gmra.mrb[0].mxu0 %v2625
    %v2835 = vpop.f32.mrb[0].mxu0
    %v2836 = vadd.f32 0.0, %v2835
    %v2837 = vpop.f32.mrb[0].mxu0
    %v2838 = vadd.f32 0.0, %v2837
    %2839 = vmatprep.mubr.f32.mxu0 %v2632
    %2840 = vmatmul.mubr.f32.gmra.mrb[0].mxu0 %v2631
    %v2841 = vpop.f32.mrb[0].mxu0
    %v2842 = vadd.f32 0.0, %v2841
    %v2843 = vpop.f32.mrb[0].mxu0
    %v2844 = vadd.f32 0.0, %v2843
    %2845 = vmatprep.mubr.f32.mxu0 %v2638
    %2846 = vmatmul.mubr.f32.gmra.mrb[0].mxu0 %v2637
    %v2847 = vpop.f32.mrb[0].mxu0
    %v2848 = vadd.f32 0.0, %v2847
    %v2849 = vpop.f32.mrb[0].mxu0
    %v2850 = vadd.f32 0.0, %v2849
    %2851 = vdwg.mxu0
    %2852 = vmatprep.subr.mxu0 %v2372
    %2853 = vmatpush1.msra.mxu0 %v2371
    %2854 = vmatprep.subr.mxu0 %v2374
    %2855 = vmatpush1.msra.mxu0 %v2373
    %2856 = vmatprep.subr.mxu0 %v2376
    %2857 = vmatpush1.msra.mxu0 %v2375
    %2858 = vmatprep.subr.mxu0 %v2378
    %2859 = vmatpush1.msra.mxu0 %v2377
    %2860 = vmatprep.subr.mxu0 %v2380
    %2861 = vmatpush1.msra.mxu0 %v2379
    %2862 = vmatprep.subr.mxu0 %v2382
    %2863 = vmatpush1.msra.mxu0 %v2381
    %2864 = vmatprep.subr.mxu0 %v2384
    %2865 = vmatpush1.msra.mxu0 %v2383
    %2866 = vmatprep.subr.mxu0 %v2386
    %2867 = vmatpush1.msra.mxu0 %v2385
    %2868 = vmatprep.subr.mxu0 %v2388
    %2869 = vmatpush1.msra.mxu0 %v2387
    %2870 = vmatprep.subr.mxu0 %v2390
    %2871 = vmatpush1.msra.mxu0 %v2389
    %2872 = vmatprep.subr.mxu0 %v2392
    %2873 = vmatpush1.msra.mxu0 %v2391
    %2874 = vmatprep.subr.mxu0 %v2394
    %2875 = vmatpush1.msra.mxu0 %v2393
    %2876 = vmatprep.subr.mxu0 %v2396
    %2877 = vmatpush1.msra.mxu0 %v2395
    %2878 = vmatprep.subr.mxu0 %v2398
    %2879 = vmatpush1.msra.mxu0 %v2397
    %2880 = vmatprep.subr.mxu0 %v2400
    %2881 = vmatpush1.msra.mxu0 %v2399
    %2882 = vmatprep.subr.mxu0 %v2402
    %2883 = vmatpush1.msra.mxu0 %v2401
    %2884 = vmatprep.subr.mxu0 %v2404
    %2885 = vmatpush1.msra.mxu0 %v2403
    %2886 = vmatprep.subr.mxu0 %v2406
    %2887 = vmatpush1.msra.mxu0 %v2405
    %2888 = vmatprep.subr.mxu0 %v2408
    %2889 = vmatpush1.msra.mxu0 %v2407
    %2890 = vmatprep.subr.mxu0 %v2410
    %2891 = vmatpush1.msra.mxu0 %v2409
    %2892 = vmatprep.subr.mxu0 %v2412
    %2893 = vmatpush1.msra.mxu0 %v2411
    %2894 = vmatprep.subr.mxu0 %v2414
    %2895 = vmatpush1.msra.mxu0 %v2413
    %2896 = vmatprep.subr.mxu0 %v2416
    %2897 = vmatpush1.msra.mxu0 %v2415
    %2898 = vmatprep.subr.mxu0 %v2418
    %2899 = vmatpush1.msra.mxu0 %v2417
    %2900 = vmatprep.subr.mxu0 %v2420
    %2901 = vmatpush1.msra.mxu0 %v2419
    %2902 = vmatprep.subr.mxu0 %v2422
    %2903 = vmatpush1.msra.mxu0 %v2421
    %2904 = vmatprep.subr.mxu0 %v2424
    %2905 = vmatpush1.msra.mxu0 %v2423
    %2906 = vmatprep.subr.mxu0 %v2426
    %2907 = vmatpush1.msra.mxu0 %v2425
    %2908 = vmatprep.subr.mxu0 %v2428
    %2909 = vmatpush1.msra.mxu0 %v2427
    %2910 = vmatprep.subr.mxu0 %v2430
    %2911 = vmatpush1.msra.mxu0 %v2429
    %2912 = vmatprep.subr.mxu0 %v2432
    %2913 = vmatpush1.msra.mxu0 %v2431
    %2914 = vmatprep.subr.mxu0 %v2434
    %2915 = vmatpush1.msra.mxu0 %v2433
    %2916 = vmatprep.mubr.f32.mxu0 %v2502
    %2917 = vmatmul.mubr.f32.gmra.mrb[0].mxu0 %v2501
    %v2918 = vpop.f32.mrb[0].mxu0
    %v2919 = vadd.f32 %v2710, %v2918
    %v2920 = vpop.f32.mrb[0].mxu0
    %v2921 = vadd.f32 %v2712, %v2920
    %2922 = vmatprep.mubr.f32.mxu0 %v2508
    %2923 = vmatmul.mubr.f32.gmra.mrb[0].mxu0 %v2507
    %v2924 = vpop.f32.mrb[0].mxu0
    %v2925 = vadd.f32 %v2716, %v2924
    %v2926 = vpop.f32.mrb[0].mxu0
    %v2927 = vadd.f32 %v2718, %v2926
    %2928 = vmatprep.mubr.f32.mxu0 %v2514
    %2929 = vmatmul.mubr.f32.gmra.mrb[0].mxu0 %v2513
    %v2930 = vpop.f32.mrb[0].mxu0
    %v2931 = vadd.f32 %v2722, %v2930
    %v2932 = vpop.f32.mrb[0].mxu0
    %v2933 = vadd.f32 %v2724, %v2932
    %2934 = vmatprep.mubr.f32.mxu0 %v2520
    %2935 = vmatmul.mubr.f32.gmra.mrb[0].mxu0 %v2519
    %v2936 = vpop.f32.mrb[0].mxu0
    %v2937 = vadd.f32 %v2728, %v2936
    %v2938 = vpop.f32.mrb[0].mxu0
    %v2939 = vadd.f32 %v2730, %v2938
    %2940 = vmatprep.mubr.f32.mxu0 %v2526
    %2941 = vmatmul.mubr.f32.gmra.mrb[0].mxu0 %v2525
    %v2942 = vpop.f32.mrb[0].mxu0
    %v2943 = vadd.f32 %v2734, %v2942
    %v2944 = vpop.f32.mrb[0].mxu0
    %v2945 = vadd.f32 %v2736, %v2944
    %2946 = vmatprep.mubr.f32.mxu0 %v2532
    %2947 = vmatmul.mubr.f32.gmra.mrb[0].mxu0 %v2531
    %v2948 = vpop.f32.mrb[0].mxu0
    %v2949 = vadd.f32 %v2740, %v2948
    %v2950 = vpop.f32.mrb[0].mxu0
    %v2951 = vadd.f32 %v2742, %v2950
    %2952 = vmatprep.mubr.f32.mxu0 %v2538
    %2953 = vmatmul.mubr.f32.gmra.mrb[0].mxu0 %v2537
    %v2954 = vpop.f32.mrb[0].mxu0
    %v2955 = vadd.f32 %v2746, %v2954
    %v2956 = vpop.f32.mrb[0].mxu0
    %v2957 = vadd.f32 %v2748, %v2956
    %2958 = vmatprep.mubr.f32.mxu0 %v2544
    %2959 = vmatmul.mubr.f32.gmra.mrb[0].mxu0 %v2543
    %v2960 = vpop.f32.mrb[0].mxu0
    %v2961 = vadd.f32 %v2752, %v2960
    %v2962 = vpop.f32.mrb[0].mxu0
    %v2963 = vadd.f32 %v2754, %v2962
    %2964 = vmatprep.mubr.f32.mxu0 %v2550
    %2965 = vmatmul.mubr.f32.gmra.mrb[0].mxu0 %v2549
    %v2966 = vpop.f32.mrb[0].mxu0
    %v2967 = vadd.f32 %v2758, %v2966
    %v2968 = vpop.f32.mrb[0].mxu0
    %v2969 = vadd.f32 %v2760, %v2968
    %2970 = vmatprep.mubr.f32.mxu0 %v2556
    %2971 = vmatmul.mubr.f32.gmra.mrb[0].mxu0 %v2555
    %v2972 = vpop.f32.mrb[0].mxu0
    %v2973 = vadd.f32 %v2764, %v2972
    %v2974 = vpop.f32.mrb[0].mxu0
    %v2975 = vadd.f32 %v2766, %v2974
    %2976 = vmatprep.mubr.f32.mxu0 %v2562
    %2977 = vmatmul.mubr.f32.gmra.mrb[0].mxu0 %v2561
    %v2978 = vpop.f32.mrb[0].mxu0
    %v2979 = vadd.f32 %v2770, %v2978
    %v2980 = vpop.f32.mrb[0].mxu0
    %v2981 = vadd.f32 %v2772, %v2980
    %2982 = vmatprep.mubr.f32.mxu0 %v2568
    %2983 = vmatmul.mubr.f32.gmra.mrb[0].mxu0 %v2567
    %v2984 = vpop.f32.mrb[0].mxu0
    %v2985 = vadd.f32 %v2776, %v2984
    %v2986 = vpop.f32.mrb[0].mxu0
    %v2987 = vadd.f32 %v2778, %v2986
    %2988 = vmatprep.mubr.f32.mxu0 %v2574
    %2989 = vmatmul.mubr.f32.gmra.mrb[0].mxu0 %v2573
    %v2990 = vpop.f32.mrb[0].mxu0
    %v2991 = vadd.f32 %v2782, %v2990
    %v2992 = vpop.f32.mrb[0].mxu0
    %v2993 = vadd.f32 %v2784, %v2992
    %2994 = vmatprep.mubr.f32.mxu0 %v2580
    %2995 = vmatmul.mubr.f32.gmra.mrb[0].mxu0 %v2579
    %v2996 = vpop.f32.mrb[0].mxu0
    %v2997 = vadd.f32 %v2788, %v2996
    %v2998 = vpop.f32.mrb[0].mxu0
    %v2999 = vadd.f32 %v2790, %v2998
    %3000 = vmatprep.mubr.f32.mxu0 %v2586
    %3001 = vmatmul.mubr.f32.gmra.mrb[0].mxu0 %v2585
    %v3002 = vpop.f32.mrb[0].mxu0
    %v3003 = vadd.f32 %v2794, %v3002
    %v3004 = vpop.f32.mrb[0].mxu0
    %v3005 = vadd.f32 %v2796, %v3004
    %3006 = vmatprep.mubr.f32.mxu0 %v2592
    %3007 = vmatmul.mubr.f32.gmra.mrb[0].mxu0 %v2591
    %v3008 = vpop.f32.mrb[0].mxu0
    %v3009 = vadd.f32 %v2800, %v3008
    %v3010 = vpop.f32.mrb[0].mxu0
    %v3011 = vadd.f32 %v2802, %v3010
    %3012 = vmatprep.mubr.f32.mxu0 %v2598
    %3013 = vmatmul.mubr.f32.gmra.mrb[0].mxu0 %v2597
    %v3014 = vpop.f32.mrb[0].mxu0
    %v3015 = vadd.f32 %v2806, %v3014
    %v3016 = vpop.f32.mrb[0].mxu0
    %v3017 = vadd.f32 %v2808, %v3016
    %3018 = vmatprep.mubr.f32.mxu0 %v2604
    %3019 = vmatmul.mubr.f32.gmra.mrb[0].mxu0 %v2603
    %v3020 = vpop.f32.mrb[0].mxu0
    %v3021 = vadd.f32 %v2812, %v3020
    %v3022 = vpop.f32.mrb[0].mxu0
    %v3023 = vadd.f32 %v2814, %v3022
    %3024 = vmatprep.mubr.f32.mxu0 %v2610
    %3025 = vmatmul.mubr.f32.gmra.mrb[0].mxu0 %v2609
    %v3026 = vpop.f32.mrb[0].mxu0
    %v3027 = vadd.f32 %v2818, %v3026
    %v3028 = vpop.f32.mrb[0].mxu0
    %v3029 = vadd.f32 %v2820, %v3028
    %3030 = vmatprep.mubr.f32.mxu0 %v2616
    %3031 = vmatmul.mubr.f32.gmra.mrb[0].mxu0 %v2615
    %v3032 = vpop.f32.mrb[0].mxu0
    %v3033 = vadd.f32 %v2824, %v3032
    %v3034 = vpop.f32.mrb[0].mxu0
    %v3035 = vadd.f32 %v2826, %v3034
    %3036 = vmatprep.mubr.f32.mxu0 %v2622
    %3037 = vmatmul.mubr.f32.gmra.mrb[0].mxu0 %v2621
    %v3038 = vpop.f32.mrb[0].mxu0
    %v3039 = vadd.f32 %v2830, %v3038
    %v3040 = vpop.f32.mrb[0].mxu0
    %v3041 = vadd.f32 %v2832, %v3040
    %3042 = vmatprep.mubr.f32.mxu0 %v2628
    %3043 = vmatmul.mubr.f32.gmra.mrb[0].mxu0 %v2627
    %v3044 = vpop.f32.mrb[0].mxu0
    %v3045 = vadd.f32 %v2836, %v3044
    %v3046 = vpop.f32.mrb[0].mxu0
    %v3047 = vadd.f32 %v2838, %v3046
    %3048 = vmatprep.mubr.f32.mxu0 %v2634
    %3049 = vmatmul.mubr.f32.gmra.mrb[0].mxu0 %v2633
    %v3050 = vpop.f32.mrb[0].mxu0
    %v3051 = vadd.f32 %v2842, %v3050
    %v3052 = vpop.f32.mrb[0].mxu0
    %v3053 = vadd.f32 %v2844, %v3052
    %3054 = vmatprep.mubr.f32.mxu0 %v2640
    %3055 = vmatmul.mubr.f32.gmra.mrb[0].mxu0 %v2639
    %v3056 = vpop.f32.mrb[0].mxu0
    %v3057 = vadd.f32 %v2848, %v3056
    %v3058 = vpop.f32.mrb[0].mxu0
    %v3059 = vadd.f32 %v2850, %v3058
    %3060 = vdwg.mxu0
    %3061 = vmatprep.subr.mxu0 %v2436
    %3062 = vmatpush1.msra.mxu0 %v2435
    %3063 = vmatprep.subr.mxu0 %v2438
    %3064 = vmatpush1.msra.mxu0 %v2437
    %3065 = vmatprep.subr.mxu0 %v2440
    %3066 = vmatpush1.msra.mxu0 %v2439
    %3067 = vmatprep.subr.mxu0 %v2442
    %3068 = vmatpush1.msra.mxu0 %v2441
    %3069 = vmatprep.subr.mxu0 %v2444
    %3070 = vmatpush1.msra.mxu0 %v2443
    %3071 = vmatprep.subr.mxu0 %v2446
    %3072 = vmatpush1.msra.mxu0 %v2445
    %3073 = vmatprep.subr.mxu0 %v2448
    %3074 = vmatpush1.msra.mxu0 %v2447
    %3075 = vmatprep.subr.mxu0 %v2450
    %3076 = vmatpush1.msra.mxu0 %v2449
    %3077 = vmatprep.subr.mxu0 %v2452
    %3078 = vmatpush1.msra.mxu0 %v2451
    %3079 = vmatprep.subr.mxu0 %v2454
    %3080 = vmatpush1.msra.mxu0 %v2453
    %3081 = vmatprep.subr.mxu0 %v2456
    %3082 = vmatpush1.msra.mxu0 %v2455
    %3083 = vmatprep.subr.mxu0 %v2458
    %3084 = vmatpush1.msra.mxu0 %v2457
    %3085 = vmatprep.subr.mxu0 %v2460
    %3086 = vmatpush1.msra.mxu0 %v2459
    %3087 = vmatprep.subr.mxu0 %v2462
    %3088 = vmatpush1.msra.mxu0 %v2461
    %3089 = vmatprep.subr.mxu0 %v2464
    %3090 = vmatpush1.msra.mxu0 %v2463
    %3091 = vmatprep.subr.mxu0 %v2466
    %3092 = vmatpush1.msra.mxu0 %v2465
    %3093 = vmatprep.subr.mxu0 %v2468
    %3094 = vmatpush1.msra.mxu0 %v2467
    %3095 = vmatprep.subr.mxu0 %v2470
    %3096 = vmatpush1.msra.mxu0 %v2469
    %3097 = vmatprep.subr.mxu0 %v2472
    %3098 = vmatpush1.msra.mxu0 %v2471
    %3099 = vmatprep.subr.mxu0 %v2474
    %3100 = vmatpush1.msra.mxu0 %v2473
    %3101 = vmatprep.subr.mxu0 %v2476
    %3102 = vmatpush1.msra.mxu0 %v2475
    %3103 = vmatprep.subr.mxu0 %v2478
    %3104 = vmatpush1.msra.mxu0 %v2477
    %3105 = vmatprep.subr.mxu0 %v2480
    %3106 = vmatpush1.msra.mxu0 %v2479
    %3107 = vmatprep.subr.mxu0 %v2482
    %3108 = vmatpush1.msra.mxu0 %v2481
    %3109 = vmatprep.subr.mxu0 %v2484
    %3110 = vmatpush1.msra.mxu0 %v2483
    %3111 = vmatprep.subr.mxu0 %v2486
    %3112 = vmatpush1.msra.mxu0 %v2485
    %3113 = vmatprep.subr.mxu0 %v2488
    %3114 = vmatpush1.msra.mxu0 %v2487
    %3115 = vmatprep.subr.mxu0 %v2490
    %3116 = vmatpush1.msra.mxu0 %v2489
    %3117 = vmatprep.subr.mxu0 %v2492
    %3118 = vmatpush1.msra.mxu0 %v2491
    %3119 = vmatprep.subr.mxu0 %v2494
    %3120 = vmatpush1.msra.mxu0 %v2493
    %3121 = vmatprep.subr.mxu0 %v2496
    %3122 = vmatpush1.msra.mxu0 %v2495
    %3123 = vmatprep.subr.mxu0 %v2498
    %3124 = vmatpush1.msra.mxu0 %v2497
    %3125 = vmatprep.mubr.f32.mxu0 %v2504
    %3126 = vmatmul.mubr.f32.gmra.mrb[0].mxu0 %v2503
    %v3127 = vpop.f32.mrb[0].mxu0
    %v3128 = vadd.f32 %v2919, %v3127
    %v3129 = vpop.f32.mrb[0].mxu0
    %v3130 = vadd.f32 %v2921, %v3129
    %3131 = vmatprep.mubr.f32.mxu0 %v2510
    %3132 = vmatmul.mubr.f32.gmra.mrb[0].mxu0 %v2509
    %v3133 = vpop.f32.mrb[0].mxu0
    %v3134 = vadd.f32 %v2925, %v3133
    %v3135 = vpop.f32.mrb[0].mxu0
    %v3136 = vadd.f32 %v2927, %v3135
    %3137 = vmatprep.mubr.f32.mxu0 %v2516
    %3138 = vmatmul.mubr.f32.gmra.mrb[0].mxu0 %v2515
    %v3139 = vpop.f32.mrb[0].mxu0
    %v3140 = vadd.f32 %v2931, %v3139
    %v3141 = vpop.f32.mrb[0].mxu0
    %v3142 = vadd.f32 %v2933, %v3141
    %3143 = vmatprep.mubr.f32.mxu0 %v2522
    %3144 = vmatmul.mubr.f32.gmra.mrb[0].mxu0 %v2521
    %v3145 = vpop.f32.mrb[0].mxu0
    %v3146 = vadd.f32 %v2937, %v3145
    %v3147 = vpop.f32.mrb[0].mxu0
    %v3148 = vadd.f32 %v2939, %v3147
    %3149 = vmatprep.mubr.f32.mxu0 %v2528
    %3150 = vmatmul.mubr.f32.gmra.mrb[0].mxu0 %v2527
    %v3151 = vpop.f32.mrb[0].mxu0
    %v3152 = vadd.f32 %v2943, %v3151
    %v3153 = vpop.f32.mrb[0].mxu0
    %v3154 = vadd.f32 %v2945, %v3153
    %3155 = vmatprep.mubr.f32.mxu0 %v2534
    %3156 = vmatmul.mubr.f32.gmra.mrb[0].mxu0 %v2533
    %v3157 = vpop.f32.mrb[0].mxu0
    %v3158 = vadd.f32 %v2949, %v3157
    %v3159 = vpop.f32.mrb[0].mxu0
    %v3160 = vadd.f32 %v2951, %v3159
    %3161 = vmatprep.mubr.f32.mxu0 %v2540
    %3162 = vmatmul.mubr.f32.gmra.mrb[0].mxu0 %v2539
    %v3163 = vpop.f32.mrb[0].mxu0
    %v3164 = vadd.f32 %v2955, %v3163
    %v3165 = vpop.f32.mrb[0].mxu0
    %v3166 = vadd.f32 %v2957, %v3165
    %3167 = vmatprep.mubr.f32.mxu0 %v2546
    %3168 = vmatmul.mubr.f32.gmra.mrb[0].mxu0 %v2545
    %v3169 = vpop.f32.mrb[0].mxu0
    %v3170 = vadd.f32 %v2961, %v3169
    %v3171 = vpop.f32.mrb[0].mxu0
    %v3172 = vadd.f32 %v2963, %v3171
    %3173 = vmatprep.mubr.f32.mxu0 %v2552
    %3174 = vmatmul.mubr.f32.gmra.mrb[0].mxu0 %v2551
    %v3175 = vpop.f32.mrb[0].mxu0
    %v3176 = vadd.f32 %v2967, %v3175
    %v3177 = vpop.f32.mrb[0].mxu0
    %v3178 = vadd.f32 %v2969, %v3177
    %3179 = vmatprep.mubr.f32.mxu0 %v2558
    %3180 = vmatmul.mubr.f32.gmra.mrb[0].mxu0 %v2557
    %v3181 = vpop.f32.mrb[0].mxu0
    %v3182 = vadd.f32 %v2973, %v3181
    %v3183 = vpop.f32.mrb[0].mxu0
    %v3184 = vadd.f32 %v2975, %v3183
    %3185 = vmatprep.mubr.f32.mxu0 %v2564
    %3186 = vmatmul.mubr.f32.gmra.mrb[0].mxu0 %v2563
    %v3187 = vpop.f32.mrb[0].mxu0
    %v3188 = vadd.f32 %v2979, %v3187
    %v3189 = vpop.f32.mrb[0].mxu0
    %v3190 = vadd.f32 %v2981, %v3189
    %3191 = vmatprep.mubr.f32.mxu0 %v2570
    %3192 = vmatmul.mubr.f32.gmra.mrb[0].mxu0 %v2569
    %v3193 = vpop.f32.mrb[0].mxu0
    %v3194 = vadd.f32 %v2985, %v3193
    %v3195 = vpop.f32.mrb[0].mxu0
    %v3196 = vadd.f32 %v2987, %v3195
    %3197 = vmatprep.mubr.f32.mxu0 %v2576
    %3198 = vmatmul.mubr.f32.gmra.mrb[0].mxu0 %v2575
    %v3199 = vpop.f32.mrb[0].mxu0
    %v3200 = vadd.f32 %v2991, %v3199
    %v3201 = vpop.f32.mrb[0].mxu0
    %v3202 = vadd.f32 %v2993, %v3201
    %3203 = vmatprep.mubr.f32.mxu0 %v2582
    %3204 = vmatmul.mubr.f32.gmra.mrb[0].mxu0 %v2581
    %v3205 = vpop.f32.mrb[0].mxu0
    %v3206 = vadd.f32 %v2997, %v3205
    %v3207 = vpop.f32.mrb[0].mxu0
    %v3208 = vadd.f32 %v2999, %v3207
    %3209 = vmatprep.mubr.f32.mxu0 %v2588
    %3210 = vmatmul.mubr.f32.gmra.mrb[0].mxu0 %v2587
    %v3211 = vpop.f32.mrb[0].mxu0
    %v3212 = vadd.f32 %v3003, %v3211
    %v3213 = vpop.f32.mrb[0].mxu0
    %v3214 = vadd.f32 %v3005, %v3213
    %3215 = vmatprep.mubr.f32.mxu0 %v2594
    %3216 = vmatmul.mubr.f32.gmra.mrb[0].mxu0 %v2593
    %v3217 = vpop.f32.mrb[0].mxu0
    %v3218 = vadd.f32 %v3009, %v3217
    %v3219 = vpop.f32.mrb[0].mxu0
    %v3220 = vadd.f32 %v3011, %v3219
    %3221 = vmatprep.mubr.f32.mxu0 %v2600
    %3222 = vmatmul.mubr.f32.gmra.mrb[0].mxu0 %v2599
    %v3223 = vpop.f32.mrb[0].mxu0
    %v3224 = vadd.f32 %v3015, %v3223
    %v3225 = vpop.f32.mrb[0].mxu0
    %v3226 = vadd.f32 %v3017, %v3225
    %3227 = vmatprep.mubr.f32.mxu0 %v2606
    %3228 = vmatmul.mubr.f32.gmra.mrb[0].mxu0 %v2605
    %v3229 = vpop.f32.mrb[0].mxu0
    %v3230 = vadd.f32 %v3021, %v3229
    %v3231 = vpop.f32.mrb[0].mxu0
    %v3232 = vadd.f32 %v3023, %v3231
    %3233 = vmatprep.mubr.f32.mxu0 %v2612
    %3234 = vmatmul.mubr.f32.gmra.mrb[0].mxu0 %v2611
    %v3235 = vpop.f32.mrb[0].mxu0
    %v3236 = vadd.f32 %v3027, %v3235
    %v3237 = vpop.f32.mrb[0].mxu0
    %v3238 = vadd.f32 %v3029, %v3237
    %3239 = vmatprep.mubr.f32.mxu0 %v2618
    %3240 = vmatmul.mubr.f32.gmra.mrb[0].mxu0 %v2617
    %v3241 = vpop.f32.mrb[0].mxu0
    %v3242 = vadd.f32 %v3033, %v3241
    %v3243 = vpop.f32.mrb[0].mxu0
    %v3244 = vadd.f32 %v3035, %v3243
    %3245 = vmatprep.mubr.f32.mxu0 %v2624
    %3246 = vmatmul.mubr.f32.gmra.mrb[0].mxu0 %v2623
    %v3247 = vpop.f32.mrb[0].mxu0
    %v3248 = vadd.f32 %v3039, %v3247
    %v3249 = vpop.f32.mrb[0].mxu0
    %v3250 = vadd.f32 %v3041, %v3249
    %3251 = vmatprep.mubr.f32.mxu0 %v2630
    %3252 = vmatmul.mubr.f32.gmra.mrb[0].mxu0 %v2629
    %v3253 = vpop.f32.mrb[0].mxu0
    %v3254 = vadd.f32 %v3045, %v3253
    %v3255 = vpop.f32.mrb[0].mxu0
    %v3256 = vadd.f32 %v3047, %v3255
    %3257 = vmatprep.mubr.f32.mxu0 %v2636
    %3258 = vmatmul.mubr.f32.gmra.mrb[0].mxu0 %v2635
    %v3259 = vpop.f32.mrb[0].mxu0
    %v3260 = vadd.f32 %v3051, %v3259
    %v3261 = vpop.f32.mrb[0].mxu0
    %v3262 = vadd.f32 %v3053, %v3261
    %3263 = vmatprep.mubr.f32.mxu0 %v2642
    %3264 = vmatmul.mubr.f32.gmra.mrb[0].mxu0 %v2641
    %v3265 = vpop.f32.mrb[0].mxu0
    %v3266 = vadd.f32 %v3057, %v3265
    %v3267 = vpop.f32.mrb[0].mxu0
    %v3268 = vadd.f32 %v3059, %v3267
    %3269 = vdwg.mxu0
    %vm3270 = vcmask 556032
    %v3271 = vsel %vm3270, %v3130, 0.0
    %v3272 = vadd.f32 %v3128, %v3271
    %3273 = vadd.xlane.f32.xlu0 %v3272
    %v3274 = vpop.xlane.xlu0 %3273
    %v3275 = vsel %vm3270, %v3136, 0.0
    %v3276 = vadd.f32 %v3134, %v3275
    %3277 = vadd.xlane.f32.xlu0 %v3276
    %v3278 = vpop.xlane.xlu0 %3277
    %v3279 = vsel %vm3270, %v3142, 0.0
    %v3280 = vadd.f32 %v3140, %v3279
    %3281 = vadd.xlane.f32.xlu0 %v3280
    %v3282 = vpop.xlane.xlu0 %3281
    %v3283 = vsel %vm3270, %v3148, 0.0
    %v3284 = vadd.f32 %v3146, %v3283
    %3285 = vadd.xlane.f32.xlu0 %v3284
    %v3286 = vpop.xlane.xlu0 %3285
    %v3287 = vsel %vm3270, %v3154, 0.0
    %v3288 = vadd.f32 %v3152, %v3287
    %3289 = vadd.xlane.f32.xlu0 %v3288
    %v3290 = vpop.xlane.xlu0 %3289
    %v3291 = vsel %vm3270, %v3160, 0.0
    %v3292 = vadd.f32 %v3158, %v3291
    %3293 = vadd.xlane.f32.xlu0 %v3292
    %v3294 = vpop.xlane.xlu0 %3293
    %v3295 = vsel %vm3270, %v3166, 0.0
    %v3296 = vadd.f32 %v3164, %v3295
    %3297 = vadd.xlane.f32.xlu0 %v3296
    %v3298 = vpop.xlane.xlu0 %3297
    %v3299 = vsel %vm3270, %v3172, 0.0
    %v3300 = vadd.f32 %v3170, %v3299
    %3301 = vadd.xlane.f32.xlu0 %v3300
    %v3302 = vpop.xlane.xlu0 %3301
    %v3303 = vsel %vm3270, %v3178, 0.0
    %v3304 = vadd.f32 %v3176, %v3303
    %3305 = vadd.xlane.f32.xlu0 %v3304
    %v3306 = vpop.xlane.xlu0 %3305
    %v3307 = vsel %vm3270, %v3184, 0.0
    %v3308 = vadd.f32 %v3182, %v3307
    %3309 = vadd.xlane.f32.xlu0 %v3308
    %v3310 = vpop.xlane.xlu0 %3309
    %v3311 = vsel %vm3270, %v3190, 0.0
    %v3312 = vadd.f32 %v3188, %v3311
    %3313 = vadd.xlane.f32.xlu0 %v3312
    %v3314 = vpop.xlane.xlu0 %3313
    %v3315 = vsel %vm3270, %v3196, 0.0
    %v3316 = vadd.f32 %v3194, %v3315
    %3317 = vadd.xlane.f32.xlu0 %v3316
    %v3318 = vpop.xlane.xlu0 %3317
    %v3319 = vsel %vm3270, %v3202, 0.0
    %v3320 = vadd.f32 %v3200, %v3319
    %3321 = vadd.xlane.f32.xlu0 %v3320
    %v3322 = vpop.xlane.xlu0 %3321
    %v3323 = vsel %vm3270, %v3208, 0.0
    %v3324 = vadd.f32 %v3206, %v3323
    %3325 = vadd.xlane.f32.xlu0 %v3324
    %v3326 = vpop.xlane.xlu0 %3325
    %v3327 = vsel %vm3270, %v3214, 0.0
    %v3328 = vadd.f32 %v3212, %v3327
    %3329 = vadd.xlane.f32.xlu0 %v3328
    %v3330 = vpop.xlane.xlu0 %3329
    %v3331 = vsel %vm3270, %v3220, 0.0
    %v3332 = vadd.f32 %v3218, %v3331
    %3333 = vadd.xlane.f32.xlu0 %v3332
    %v3334 = vpop.xlane.xlu0 %3333
    %v3335 = vsel %vm3270, %v3226, 0.0
    %v3336 = vadd.f32 %v3224, %v3335
    %3337 = vadd.xlane.f32.xlu0 %v3336
    %v3338 = vpop.xlane.xlu0 %3337
    %v3339 = vsel %vm3270, %v3232, 0.0
    %v3340 = vadd.f32 %v3230, %v3339
    %3341 = vadd.xlane.f32.xlu0 %v3340
    %v3342 = vpop.xlane.xlu0 %3341
    %v3343 = vsel %vm3270, %v3238, 0.0
    %v3344 = vadd.f32 %v3236, %v3343
    %3345 = vadd.xlane.f32.xlu0 %v3344
    %v3346 = vpop.xlane.xlu0 %3345
    %v3347 = vsel %vm3270, %v3244, 0.0
    %v3348 = vadd.f32 %v3242, %v3347
    %3349 = vadd.xlane.f32.xlu0 %v3348
    %v3350 = vpop.xlane.xlu0 %3349
    %v3351 = vsel %vm3270, %v3250, 0.0
    %v3352 = vadd.f32 %v3248, %v3351
    %3353 = vadd.xlane.f32.xlu0 %v3352
    %v3354 = vpop.xlane.xlu0 %3353
    %v3355 = vsel %vm3270, %v3256, 0.0
    %v3356 = vadd.f32 %v3254, %v3355
    %3357 = vadd.xlane.f32.xlu0 %v3356
    %v3358 = vpop.xlane.xlu0 %3357
    %v3359 = vsel %vm3270, %v3262, 0.0
    %v3360 = vadd.f32 %v3260, %v3359
    %3361 = vadd.xlane.f32.xlu0 %v3360
    %v3362 = vpop.xlane.xlu0 %3361
    %v3363 = vsel %vm3270, %v3268, 0.0
    %v3364 = vadd.f32 %v3266, %v3363
    %3365 = vadd.xlane.f32.xlu0 %v3364
    %v3366 = vpop.xlane.xlu0 %3365
    %v3367 = vmul.f32 %v3128, %v3128
    %v3368 = vmul.f32 %v3130, %v3130
    %v3369 = vmul.f32 %v3134, %v3134
    %v3370 = vmul.f32 %v3136, %v3136
    %v3371 = vmul.f32 %v3140, %v3140
    %v3372 = vmul.f32 %v3142, %v3142
    %v3373 = vmul.f32 %v3146, %v3146
    %v3374 = vmul.f32 %v3148, %v3148
    %v3375 = vmul.f32 %v3152, %v3152
    %v3376 = vmul.f32 %v3154, %v3154
    %v3377 = vmul.f32 %v3158, %v3158
    %v3378 = vmul.f32 %v3160, %v3160
    %v3379 = vmul.f32 %v3164, %v3164
    %v3380 = vmul.f32 %v3166, %v3166
    %v3381 = vmul.f32 %v3170, %v3170
    %v3382 = vmul.f32 %v3172, %v3172
    %v3383 = vmul.f32 %v3176, %v3176
    %v3384 = vmul.f32 %v3178, %v3178
    %v3385 = vmul.f32 %v3182, %v3182
    %v3386 = vmul.f32 %v3184, %v3184
    %v3387 = vmul.f32 %v3188, %v3188
    %v3388 = vmul.f32 %v3190, %v3190
    %v3389 = vmul.f32 %v3194, %v3194
    %v3390 = vmul.f32 %v3196, %v3196
    %v3391 = vmul.f32 %v3200, %v3200
    %v3392 = vmul.f32 %v3202, %v3202
    %v3393 = vmul.f32 %v3206, %v3206
    %v3394 = vmul.f32 %v3208, %v3208
    %v3395 = vmul.f32 %v3212, %v3212
    %v3396 = vmul.f32 %v3214, %v3214
    %v3397 = vmul.f32 %v3218, %v3218
    %v3398 = vmul.f32 %v3220, %v3220
    %v3399 = vmul.f32 %v3224, %v3224
    %v3400 = vmul.f32 %v3226, %v3226
    %v3401 = vmul.f32 %v3230, %v3230
    %v3402 = vmul.f32 %v3232, %v3232
    %v3403 = vmul.f32 %v3236, %v3236
    %v3404 = vmul.f32 %v3238, %v3238
    %v3405 = vmul.f32 %v3242, %v3242
    %v3406 = vmul.f32 %v3244, %v3244
    %v3407 = vmul.f32 %v3248, %v3248
    %v3408 = vmul.f32 %v3250, %v3250
    %v3409 = vmul.f32 %v3254, %v3254
    %v3410 = vmul.f32 %v3256, %v3256
    %v3411 = vmul.f32 %v3260, %v3260
    %v3412 = vmul.f32 %v3262, %v3262
    %v3413 = vmul.f32 %v3266, %v3266
    %v3414 = vmul.f32 %v3268, %v3268
    %v3415 = vsel %vm3270, %v3368, 0.0
    %v3416 = vadd.f32 %v3367, %v3415
    %3417 = vadd.xlane.f32.xlu0 %v3416
    %v3418 = vpop.xlane.xlu0 %3417
    %v3419 = vsel %vm3270, %v3370, 0.0
    %v3420 = vadd.f32 %v3369, %v3419
    %3421 = vadd.xlane.f32.xlu0 %v3420
    %v3422 = vpop.xlane.xlu0 %3421
    %v3423 = vsel %vm3270, %v3372, 0.0
    %v3424 = vadd.f32 %v3371, %v3423
    %3425 = vadd.xlane.f32.xlu0 %v3424
    %v3426 = vpop.xlane.xlu0 %3425
    %v3427 = vsel %vm3270, %v3374, 0.0
    %v3428 = vadd.f32 %v3373, %v3427
    %3429 = vadd.xlane.f32.xlu0 %v3428
    %v3430 = vpop.xlane.xlu0 %3429
    %v3431 = vsel %vm3270, %v3376, 0.0
    %v3432 = vadd.f32 %v3375, %v3431
    %3433 = vadd.xlane.f32.xlu0 %v3432
    %v3434 = vpop.xlane.xlu0 %3433
    %v3435 = vsel %vm3270, %v3378, 0.0
    %v3436 = vadd.f32 %v3377, %v3435
    %3437 = vadd.xlane.f32.xlu0 %v3436
    %v3438 = vpop.xlane.xlu0 %3437
    %v3439 = vsel %vm3270, %v3380, 0.0
    %v3440 = vadd.f32 %v3379, %v3439
    %3441 = vadd.xlane.f32.xlu0 %v3440
    %v3442 = vpop.xlane.xlu0 %3441
    %v3443 = vsel %vm3270, %v3382, 0.0
    %v3444 = vadd.f32 %v3381, %v3443
    %3445 = vadd.xlane.f32.xlu0 %v3444
    %v3446 = vpop.xlane.xlu0 %3445
    %v3447 = vsel %vm3270, %v3384, 0.0
    %v3448 = vadd.f32 %v3383, %v3447
    %3449 = vadd.xlane.f32.xlu0 %v3448
    %v3450 = vpop.xlane.xlu0 %3449
    %v3451 = vsel %vm3270, %v3386, 0.0
    %v3452 = vadd.f32 %v3385, %v3451
    %3453 = vadd.xlane.f32.xlu0 %v3452
    %v3454 = vpop.xlane.xlu0 %3453
    %v3455 = vsel %vm3270, %v3388, 0.0
    %v3456 = vadd.f32 %v3387, %v3455
    %3457 = vadd.xlane.f32.xlu0 %v3456
    %v3458 = vpop.xlane.xlu0 %3457
    %v3459 = vsel %vm3270, %v3390, 0.0
    %v3460 = vadd.f32 %v3389, %v3459
    %3461 = vadd.xlane.f32.xlu0 %v3460
    %v3462 = vpop.xlane.xlu0 %3461
    %v3463 = vsel %vm3270, %v3392, 0.0
    %v3464 = vadd.f32 %v3391, %v3463
    %3465 = vadd.xlane.f32.xlu0 %v3464
    %v3466 = vpop.xlane.xlu0 %3465
    %v3467 = vsel %vm3270, %v3394, 0.0
    %v3468 = vadd.f32 %v3393, %v3467
    %3469 = vadd.xlane.f32.xlu0 %v3468
    %v3470 = vpop.xlane.xlu0 %3469
    %v3471 = vsel %vm3270, %v3396, 0.0
    %v3472 = vadd.f32 %v3395, %v3471
    %3473 = vadd.xlane.f32.xlu0 %v3472
    %v3474 = vpop.xlane.xlu0 %3473
    %v3475 = vsel %vm3270, %v3398, 0.0
    %v3476 = vadd.f32 %v3397, %v3475
    %3477 = vadd.xlane.f32.xlu0 %v3476
    %v3478 = vpop.xlane.xlu0 %3477
    %v3479 = vsel %vm3270, %v3400, 0.0
    %v3480 = vadd.f32 %v3399, %v3479
    %3481 = vadd.xlane.f32.xlu0 %v3480
    %v3482 = vpop.xlane.xlu0 %3481
    %v3483 = vsel %vm3270, %v3402, 0.0
    %v3484 = vadd.f32 %v3401, %v3483
    %3485 = vadd.xlane.f32.xlu0 %v3484
    %v3486 = vpop.xlane.xlu0 %3485
    %v3487 = vsel %vm3270, %v3404, 0.0
    %v3488 = vadd.f32 %v3403, %v3487
    %3489 = vadd.xlane.f32.xlu0 %v3488
    %v3490 = vpop.xlane.xlu0 %3489
    %v3491 = vsel %vm3270, %v3406, 0.0
    %v3492 = vadd.f32 %v3405, %v3491
    %3493 = vadd.xlane.f32.xlu0 %v3492
    %v3494 = vpop.xlane.xlu0 %3493
    %v3495 = vsel %vm3270, %v3408, 0.0
    %v3496 = vadd.f32 %v3407, %v3495
    %3497 = vadd.xlane.f32.xlu0 %v3496
    %v3498 = vpop.xlane.xlu0 %3497
    %v3499 = vsel %vm3270, %v3410, 0.0
    %v3500 = vadd.f32 %v3409, %v3499
    %3501 = vadd.xlane.f32.xlu0 %v3500
    %v3502 = vpop.xlane.xlu0 %3501
    %v3503 = vsel %vm3270, %v3412, 0.0
    %v3504 = vadd.f32 %v3411, %v3503
    %3505 = vadd.xlane.f32.xlu0 %v3504
    %v3506 = vpop.xlane.xlu0 %3505
    %v3507 = vsel %vm3270, %v3414, 0.0
    %v3508 = vadd.f32 %v3413, %v3507
    %3509 = vadd.xlane.f32.xlu0 %v3508
    %v3510 = vpop.xlane.xlu0 %3509
    %v3511 = vmul.f32 %v3274, 0.0051020407
    %v3512 = vmul.f32 %v3278, 0.0051020407
    %v3513 = vmul.f32 %v3282, 0.0051020407
    %v3514 = vmul.f32 %v3286, 0.0051020407
    %v3515 = vmul.f32 %v3290, 0.0051020407
    %v3516 = vmul.f32 %v3294, 0.0051020407
    %v3517 = vmul.f32 %v3298, 0.0051020407
    %v3518 = vmul.f32 %v3302, 0.0051020407
    %v3519 = vmul.f32 %v3306, 0.0051020407
    %v3520 = vmul.f32 %v3310, 0.0051020407
    %v3521 = vmul.f32 %v3314, 0.0051020407
    %v3522 = vmul.f32 %v3318, 0.0051020407
    %v3523 = vmul.f32 %v3322, 0.0051020407
    %v3524 = vmul.f32 %v3326, 0.0051020407
    %v3525 = vmul.f32 %v3330, 0.0051020407
    %v3526 = vmul.f32 %v3334, 0.0051020407
    %v3527 = vmul.f32 %v3338, 0.0051020407
    %v3528 = vmul.f32 %v3342, 0.0051020407
    %v3529 = vmul.f32 %v3346, 0.0051020407
    %v3530 = vmul.f32 %v3350, 0.0051020407
    %v3531 = vmul.f32 %v3354, 0.0051020407
    %v3532 = vmul.f32 %v3358, 0.0051020407
    %v3533 = vmul.f32 %v3362, 0.0051020407
    %v3534 = vmul.f32 %v3366, 0.0051020407
    %v3535 = vmul.f32 %v3418, 0.0051020407
    %v3536 = vmul.f32 %v3422, 0.0051020407
    %v3537 = vmul.f32 %v3426, 0.0051020407
    %v3538 = vmul.f32 %v3430, 0.0051020407
    %v3539 = vmul.f32 %v3434, 0.0051020407
    %v3540 = vmul.f32 %v3438, 0.0051020407
    %v3541 = vmul.f32 %v3442, 0.0051020407
    %v3542 = vmul.f32 %v3446, 0.0051020407
    %v3543 = vmul.f32 %v3450, 0.0051020407
    %v3544 = vmul.f32 %v3454, 0.0051020407
    %v3545 = vmul.f32 %v3458, 0.0051020407
    %v3546 = vmul.f32 %v3462, 0.0051020407
    %v3547 = vmul.f32 %v3466, 0.0051020407
    %v3548 = vmul.f32 %v3470, 0.0051020407
    %v3549 = vmul.f32 %v3474, 0.0051020407
    %v3550 = vmul.f32 %v3478, 0.0051020407
    %v3551 = vmul.f32 %v3482, 0.0051020407
    %v3552 = vmul.f32 %v3486, 0.0051020407
    %v3553 = vmul.f32 %v3490, 0.0051020407
    %v3554 = vmul.f32 %v3494, 0.0051020407
    %v3555 = vmul.f32 %v3498, 0.0051020407
    %v3556 = vmul.f32 %v3502, 0.0051020407
    %v3557 = vmul.f32 %v3506, 0.0051020407
    %v3558 = vmul.f32 %v3510, 0.0051020407
    %v3559 = vmul.f32 %v3511, %v3511
    %v3560 = vmul.f32 %v3512, %v3512
    %v3561 = vmul.f32 %v3513, %v3513
    %v3562 = vmul.f32 %v3514, %v3514
    %v3563 = vmul.f32 %v3515, %v3515
    %v3564 = vmul.f32 %v3516, %v3516
    %v3565 = vmul.f32 %v3517, %v3517
    %v3566 = vmul.f32 %v3518, %v3518
    %v3567 = vmul.f32 %v3519, %v3519
    %v3568 = vmul.f32 %v3520, %v3520
    %v3569 = vmul.f32 %v3521, %v3521
    %v3570 = vmul.f32 %v3522, %v3522
    %v3571 = vmul.f32 %v3523, %v3523
    %v3572 = vmul.f32 %v3524, %v3524
    %v3573 = vmul.f32 %v3525, %v3525
    %v3574 = vmul.f32 %v3526, %v3526
    %v3575 = vmul.f32 %v3527, %v3527
    %v3576 = vmul.f32 %v3528, %v3528
    %v3577 = vmul.f32 %v3529, %v3529
    %v3578 = vmul.f32 %v3530, %v3530
    %v3579 = vmul.f32 %v3531, %v3531
    %v3580 = vmul.f32 %v3532, %v3532
    %v3581 = vmul.f32 %v3533, %v3533
    %v3582 = vmul.f32 %v3534, %v3534
    %v3583 = vsub.f32 %v3535, %v3559
    %v3584 = vsub.f32 %v3536, %v3560
    %v3585 = vsub.f32 %v3537, %v3561
    %v3586 = vsub.f32 %v3538, %v3562
    %v3587 = vsub.f32 %v3539, %v3563
    %v3588 = vsub.f32 %v3540, %v3564
    %v3589 = vsub.f32 %v3541, %v3565
    %v3590 = vsub.f32 %v3542, %v3566
    %v3591 = vsub.f32 %v3543, %v3567
    %v3592 = vsub.f32 %v3544, %v3568
    %v3593 = vsub.f32 %v3545, %v3569
    %v3594 = vsub.f32 %v3546, %v3570
    %v3595 = vsub.f32 %v3547, %v3571
    %v3596 = vsub.f32 %v3548, %v3572
    %v3597 = vsub.f32 %v3549, %v3573
    %v3598 = vsub.f32 %v3550, %v3574
    %v3599 = vsub.f32 %v3551, %v3575
    %v3600 = vsub.f32 %v3552, %v3576
    %v3601 = vsub.f32 %v3553, %v3577
    %v3602 = vsub.f32 %v3554, %v3578
    %v3603 = vsub.f32 %v3555, %v3579
    %v3604 = vsub.f32 %v3556, %v3580
    %v3605 = vsub.f32 %v3557, %v3581
    %v3606 = vsub.f32 %v3558, %v3582
    %v3607 = vadd.f32 %v3583, 0.001
    %v3608 = vadd.f32 %v3584, 0.001
    %v3609 = vadd.f32 %v3585, 0.001
    %v3610 = vadd.f32 %v3586, 0.001
    %v3611 = vadd.f32 %v3587, 0.001
    %v3612 = vadd.f32 %v3588, 0.001
    %v3613 = vadd.f32 %v3589, 0.001
    %v3614 = vadd.f32 %v3590, 0.001
    %v3615 = vadd.f32 %v3591, 0.001
    %v3616 = vadd.f32 %v3592, 0.001
    %v3617 = vadd.f32 %v3593, 0.001
    %v3618 = vadd.f32 %v3594, 0.001
    %v3619 = vadd.f32 %v3595, 0.001
    %v3620 = vadd.f32 %v3596, 0.001
    %v3621 = vadd.f32 %v3597, 0.001
    %v3622 = vadd.f32 %v3598, 0.001
    %v3623 = vadd.f32 %v3599, 0.001
    %v3624 = vadd.f32 %v3600, 0.001
    %v3625 = vadd.f32 %v3601, 0.001
    %v3626 = vadd.f32 %v3602, 0.001
    %v3627 = vadd.f32 %v3603, 0.001
    %v3628 = vadd.f32 %v3604, 0.001
    %v3629 = vadd.f32 %v3605, 0.001
    %v3630 = vadd.f32 %v3606, 0.001
    %v3631 = vrsqrt.pop %v3607
    %v3632 = vrsqrt.pop %v3608
    %v3633 = vrsqrt.pop %v3609
    %v3634 = vrsqrt.pop %v3610
    %v3635 = vrsqrt.pop %v3611
    %v3636 = vrsqrt.pop %v3612
    %v3637 = vrsqrt.pop %v3613
    %v3638 = vrsqrt.pop %v3614
    %v3639 = vrsqrt.pop %v3615
    %v3640 = vrsqrt.pop %v3616
    %v3641 = vrsqrt.pop %v3617
    %v3642 = vrsqrt.pop %v3618
    %v3643 = vrsqrt.pop %v3619
    %v3644 = vrsqrt.pop %v3620
    %v3645 = vrsqrt.pop %v3621
    %v3646 = vrsqrt.pop %v3622
    %v3647 = vrsqrt.pop %v3623
    %v3648 = vrsqrt.pop %v3624
    %v3649 = vrsqrt.pop %v3625
    %v3650 = vrsqrt.pop %v3626
    %v3651 = vrsqrt.pop %v3627
    %v3652 = vrsqrt.pop %v3628
    %v3653 = vrsqrt.pop %v3629
    %v3654 = vrsqrt.pop %v3630
    %v3655 = vsub.f32 %v3128, %v3511
    %v3656 = vsub.f32 %v3130, %v3511
    %v3657 = vsub.f32 %v3134, %v3512
    %v3658 = vsub.f32 %v3136, %v3512
    %v3659 = vsub.f32 %v3140, %v3513
    %v3660 = vsub.f32 %v3142, %v3513
    %v3661 = vsub.f32 %v3146, %v3514
    %v3662 = vsub.f32 %v3148, %v3514
    %v3663 = vsub.f32 %v3152, %v3515
    %v3664 = vsub.f32 %v3154, %v3515
    %v3665 = vsub.f32 %v3158, %v3516
    %v3666 = vsub.f32 %v3160, %v3516
    %v3667 = vsub.f32 %v3164, %v3517
    %v3668 = vsub.f32 %v3166, %v3517
    %v3669 = vsub.f32 %v3170, %v3518
    %v3670 = vsub.f32 %v3172, %v3518
    %v3671 = vsub.f32 %v3176, %v3519
    %v3672 = vsub.f32 %v3178, %v3519
    %v3673 = vsub.f32 %v3182, %v3520
    %v3674 = vsub.f32 %v3184, %v3520
    %v3675 = vsub.f32 %v3188, %v3521
    %v3676 = vsub.f32 %v3190, %v3521
    %v3677 = vsub.f32 %v3194, %v3522
    %v3678 = vsub.f32 %v3196, %v3522
    %v3679 = vsub.f32 %v3200, %v3523
    %v3680 = vsub.f32 %v3202, %v3523
    %v3681 = vsub.f32 %v3206, %v3524
    %v3682 = vsub.f32 %v3208, %v3524
    %v3683 = vsub.f32 %v3212, %v3525
    %v3684 = vsub.f32 %v3214, %v3525
    %v3685 = vsub.f32 %v3218, %v3526
    %v3686 = vsub.f32 %v3220, %v3526
    %v3687 = vsub.f32 %v3224, %v3527
    %v3688 = vsub.f32 %v3226, %v3527
    %v3689 = vsub.f32 %v3230, %v3528
    %v3690 = vsub.f32 %v3232, %v3528
    %v3691 = vsub.f32 %v3236, %v3529
    %v3692 = vsub.f32 %v3238, %v3529
    %v3693 = vsub.f32 %v3242, %v3530
    %v3694 = vsub.f32 %v3244, %v3530
    %v3695 = vsub.f32 %v3248, %v3531
    %v3696 = vsub.f32 %v3250, %v3531
    %v3697 = vsub.f32 %v3254, %v3532
    %v3698 = vsub.f32 %v3256, %v3532
    %v3699 = vsub.f32 %v3260, %v3533
    %v3700 = vsub.f32 %v3262, %v3533
    %v3701 = vsub.f32 %v3266, %v3534
    %v3702 = vsub.f32 %v3268, %v3534
    %v3703 = vmul.f32 %v3655, %v3631
    %v3704 = vmul.f32 %v3656, %v3631
    %v3705 = vmul.f32 %v3657, %v3632
    %v3706 = vmul.f32 %v3658, %v3632
    %v3707 = vmul.f32 %v3659, %v3633
    %v3708 = vmul.f32 %v3660, %v3633
    %v3709 = vmul.f32 %v3661, %v3634
    %v3710 = vmul.f32 %v3662, %v3634
    %v3711 = vmul.f32 %v3663, %v3635
    %v3712 = vmul.f32 %v3664, %v3635
    %v3713 = vmul.f32 %v3665, %v3636
    %v3714 = vmul.f32 %v3666, %v3636
    %v3715 = vmul.f32 %v3667, %v3637
    %v3716 = vmul.f32 %v3668, %v3637
    %v3717 = vmul.f32 %v3669, %v3638
    %v3718 = vmul.f32 %v3670, %v3638
    %v3719 = vmul.f32 %v3671, %v3639
    %v3720 = vmul.f32 %v3672, %v3639
    %v3721 = vmul.f32 %v3673, %v3640
    %v3722 = vmul.f32 %v3674, %v3640
    %v3723 = vmul.f32 %v3675, %v3641
    %v3724 = vmul.f32 %v3676, %v3641
    %v3725 = vmul.f32 %v3677, %v3642
    %v3726 = vmul.f32 %v3678, %v3642
    %v3727 = vmul.f32 %v3679, %v3643
    %v3728 = vmul.f32 %v3680, %v3643
    %v3729 = vmul.f32 %v3681, %v3644
    %v3730 = vmul.f32 %v3682, %v3644
    %v3731 = vmul.f32 %v3683, %v3645
    %v3732 = vmul.f32 %v3684, %v3645
    %v3733 = vmul.f32 %v3685, %v3646
    %v3734 = vmul.f32 %v3686, %v3646
    %v3735 = vmul.f32 %v3687, %v3647
    %v3736 = vmul.f32 %v3688, %v3647
    %v3737 = vmul.f32 %v3689, %v3648
    %v3738 = vmul.f32 %v3690, %v3648
    %v3739 = vmul.f32 %v3691, %v3649
    %v3740 = vmul.f32 %v3692, %v3649
    %v3741 = vmul.f32 %v3693, %v3650
    %v3742 = vmul.f32 %v3694, %v3650
    %v3743 = vmul.f32 %v3695, %v3651
    %v3744 = vmul.f32 %v3696, %v3651
    %v3745 = vmul.f32 %v3697, %v3652
    %v3746 = vmul.f32 %v3698, %v3652
    %v3747 = vmul.f32 %v3699, %v3653
    %v3748 = vmul.f32 %v3700, %v3653
    %v3749 = vmul.f32 %v3701, %v3654
    %v3750 = vmul.f32 %v3702, %v3654
    %v3751 = vld [vmem:[%s5] sm:$0xff]
    %v3752 = vld [vmem:[%s5 + $0x8] sm:$0xff]
    %v3753 = vld [vmem:[%s5 + $0x10] sm:$0xff]
    %v3754 = vld [vmem:[%s5 + $0x18] sm:$0xff]
    %v3755 = vld [vmem:[%s5 + $0x20] sm:$0xff]
    %v3756 = vld [vmem:[%s5 + $0x28] sm:$0xff]
    %v3757 = vld [vmem:[%s5 + $0x30] sm:$0xff]
    %v3758 = vld [vmem:[%s5 + $0x38] sm:$0xff]
    %v3759 = vld [vmem:[%s5 + $0x40] sm:$0xff]
    %v3760 = vld [vmem:[%s5 + $0x48] sm:$0xff]
    %v3761 = vld [vmem:[%s5 + $0x50] sm:$0xff]
    %v3762 = vld [vmem:[%s5 + $0x58] sm:$0xff]
    %v3763 = vld [vmem:[%s5 + $0x60] sm:$0xff]
    %v3764 = vld [vmem:[%s5 + $0x68] sm:$0xff]
    %v3765 = vld [vmem:[%s5 + $0x70] sm:$0xff]
    %v3766 = vld [vmem:[%s5 + $0x78] sm:$0xff]
    %v3767 = vld [vmem:[%s5 + $0x80] sm:$0xff]
    %v3768 = vld [vmem:[%s5 + $0x88] sm:$0xff]
    %v3769 = vld [vmem:[%s5 + $0x90] sm:$0xff]
    %v3770 = vld [vmem:[%s5 + $0x98] sm:$0xff]
    %v3771 = vld [vmem:[%s5 + $0xa0] sm:$0xff]
    %v3772 = vld [vmem:[%s5 + $0xa8] sm:$0xff]
    %v3773 = vld [vmem:[%s5 + $0xb0] sm:$0xff]
    %v3774 = vld [vmem:[%s5 + $0xb8] sm:$0xff]
    %3776 = vset.pattern.permute.xlu0 0
    %3777 = vperm.xlu0 %3776, %v3751
    %v3778 = vpop.permute.xlu0 %3777
    %3781 = vset.pattern.permute.xlu0 0
    %3782 = vperm.xlu0 %3781, %v3752
    %v3783 = vpop.permute.xlu0 %3782
    %3786 = vset.pattern.permute.xlu0 0
    %3787 = vperm.xlu0 %3786, %v3753
    %v3788 = vpop.permute.xlu0 %3787
    %3791 = vset.pattern.permute.xlu0 0
    %3792 = vperm.xlu0 %3791, %v3754
    %v3793 = vpop.permute.xlu0 %3792
    %3796 = vset.pattern.permute.xlu0 0
    %3797 = vperm.xlu0 %3796, %v3755
    %v3798 = vpop.permute.xlu0 %3797
    %3801 = vset.pattern.permute.xlu0 0
    %3802 = vperm.xlu0 %3801, %v3756
    %v3803 = vpop.permute.xlu0 %3802
    %3806 = vset.pattern.permute.xlu0 0
    %3807 = vperm.xlu0 %3806, %v3757
    %v3808 = vpop.permute.xlu0 %3807
    %3811 = vset.pattern.permute.xlu0 0
    %3812 = vperm.xlu0 %3811, %v3758
    %v3813 = vpop.permute.xlu0 %3812
    %3816 = vset.pattern.permute.xlu0 0
    %3817 = vperm.xlu0 %3816, %v3759
    %v3818 = vpop.permute.xlu0 %3817
    %3821 = vset.pattern.permute.xlu0 0
    %3822 = vperm.xlu0 %3821, %v3760
    %v3823 = vpop.permute.xlu0 %3822
    %3826 = vset.pattern.permute.xlu0 0
    %3827 = vperm.xlu0 %3826, %v3761
    %v3828 = vpop.permute.xlu0 %3827
    %3831 = vset.pattern.permute.xlu0 0
    %3832 = vperm.xlu0 %3831, %v3762
    %v3833 = vpop.permute.xlu0 %3832
    %3836 = vset.pattern.permute.xlu0 0
    %3837 = vperm.xlu0 %3836, %v3763
    %v3838 = vpop.permute.xlu0 %3837
    %3841 = vset.pattern.permute.xlu0 0
    %3842 = vperm.xlu0 %3841, %v3764
    %v3843 = vpop.permute.xlu0 %3842
    %3846 = vset.pattern.permute.xlu0 0
    %3847 = vperm.xlu0 %3846, %v3765
    %v3848 = vpop.permute.xlu0 %3847
    %3851 = vset.pattern.permute.xlu0 0
    %3852 = vperm.xlu0 %3851, %v3766
    %v3853 = vpop.permute.xlu0 %3852
    %3856 = vset.pattern.permute.xlu0 0
    %3857 = vperm.xlu0 %3856, %v3767
    %v3858 = vpop.permute.xlu0 %3857
    %3861 = vset.pattern.permute.xlu0 0
    %3862 = vperm.xlu0 %3861, %v3768
    %v3863 = vpop.permute.xlu0 %3862
    %3866 = vset.pattern.permute.xlu0 0
    %3867 = vperm.xlu0 %3866, %v3769
    %v3868 = vpop.permute.xlu0 %3867
    %3871 = vset.pattern.permute.xlu0 0
    %3872 = vperm.xlu0 %3871, %v3770
    %v3873 = vpop.permute.xlu0 %3872
    %3876 = vset.pattern.permute.xlu0 0
    %3877 = vperm.xlu0 %3876, %v3771
    %v3878 = vpop.permute.xlu0 %3877
    %3881 = vset.pattern.permute.xlu0 0
    %3882 = vperm.xlu0 %3881, %v3772
    %v3883 = vpop.permute.xlu0 %3882
    %3886 = vset.pattern.permute.xlu0 0
    %3887 = vperm.xlu0 %3886, %v3773
    %v3888 = vpop.permute.xlu0 %3887
    %3891 = vset.pattern.permute.xlu0 0
    %3892 = vperm.xlu0 %3891, %v3774
    %v3893 = vpop.permute.xlu0 %3892
    %v3895 = vmul.f32 %v3703, %v3778
    %v3896 = vmul.f32 %v3704, %v3778
    %v3897 = vmul.f32 %v3705, %v3783
    %v3898 = vmul.f32 %v3706, %v3783
    %v3899 = vmul.f32 %v3707, %v3788
    %v3900 = vmul.f32 %v3708, %v3788
    %v3901 = vmul.f32 %v3709, %v3793
    %v3902 = vmul.f32 %v3710, %v3793
    %v3903 = vmul.f32 %v3711, %v3798
    %v3904 = vmul.f32 %v3712, %v3798
    %v3905 = vmul.f32 %v3713, %v3803
    %v3906 = vmul.f32 %v3714, %v3803
    %v3907 = vmul.f32 %v3715, %v3808
    %v3908 = vmul.f32 %v3716, %v3808
    %v3909 = vmul.f32 %v3717, %v3813
    %v3910 = vmul.f32 %v3718, %v3813
    %v3911 = vmul.f32 %v3719, %v3818
    %v3912 = vmul.f32 %v3720, %v3818
    %v3913 = vmul.f32 %v3721, %v3823
    %v3914 = vmul.f32 %v3722, %v3823
    %v3915 = vmul.f32 %v3723, %v3828
    %v3916 = vmul.f32 %v3724, %v3828
    %v3917 = vmul.f32 %v3725, %v3833
    %v3918 = vmul.f32 %v3726, %v3833
    %v3919 = vmul.f32 %v3727, %v3838
    %v3920 = vmul.f32 %v3728, %v3838
    %v3921 = vmul.f32 %v3729, %v3843
    %v3922 = vmul.f32 %v3730, %v3843
    %v3923 = vmul.f32 %v3731, %v3848
    %v3924 = vmul.f32 %v3732, %v3848
    %v3925 = vmul.f32 %v3733, %v3853
    %v3926 = vmul.f32 %v3734, %v3853
    %v3927 = vmul.f32 %v3735, %v3858
    %v3928 = vmul.f32 %v3736, %v3858
    %v3929 = vmul.f32 %v3737, %v3863
    %v3930 = vmul.f32 %v3738, %v3863
    %v3931 = vmul.f32 %v3739, %v3868
    %v3932 = vmul.f32 %v3740, %v3868
    %v3933 = vmul.f32 %v3741, %v3873
    %v3934 = vmul.f32 %v3742, %v3873
    %v3935 = vmul.f32 %v3743, %v3878
    %v3936 = vmul.f32 %v3744, %v3878
    %v3937 = vmul.f32 %v3745, %v3883
    %v3938 = vmul.f32 %v3746, %v3883
    %v3939 = vmul.f32 %v3747, %v3888
    %v3940 = vmul.f32 %v3748, %v3888
    %v3941 = vmul.f32 %v3749, %v3893
    %v3942 = vmul.f32 %v3750, %v3893
    %v3943 = vld [vmem:[%s6] sm:$0xff]
    %v3944 = vld [vmem:[%s6 + $0x8] sm:$0xff]
    %v3945 = vld [vmem:[%s6 + $0x10] sm:$0xff]
    %v3946 = vld [vmem:[%s6 + $0x18] sm:$0xff]
    %v3947 = vld [vmem:[%s6 + $0x20] sm:$0xff]
    %v3948 = vld [vmem:[%s6 + $0x28] sm:$0xff]
    %v3949 = vld [vmem:[%s6 + $0x30] sm:$0xff]
    %v3950 = vld [vmem:[%s6 + $0x38] sm:$0xff]
    %v3951 = vld [vmem:[%s6 + $0x40] sm:$0xff]
    %v3952 = vld [vmem:[%s6 + $0x48] sm:$0xff]
    %v3953 = vld [vmem:[%s6 + $0x50] sm:$0xff]
    %v3954 = vld [vmem:[%s6 + $0x58] sm:$0xff]
    %v3955 = vld [vmem:[%s6 + $0x60] sm:$0xff]
    %v3956 = vld [vmem:[%s6 + $0x68] sm:$0xff]
    %v3957 = vld [vmem:[%s6 + $0x70] sm:$0xff]
    %v3958 = vld [vmem:[%s6 + $0x78] sm:$0xff]
    %v3959 = vld [vmem:[%s6 + $0x80] sm:$0xff]
    %v3960 = vld [vmem:[%s6 + $0x88] sm:$0xff]
    %v3961 = vld [vmem:[%s6 + $0x90] sm:$0xff]
    %v3962 = vld [vmem:[%s6 + $0x98] sm:$0xff]
    %v3963 = vld [vmem:[%s6 + $0xa0] sm:$0xff]
    %v3964 = vld [vmem:[%s6 + $0xa8] sm:$0xff]
    %v3965 = vld [vmem:[%s6 + $0xb0] sm:$0xff]
    %v3966 = vld [vmem:[%s6 + $0xb8] sm:$0xff]
    %3968 = vset.pattern.permute.xlu0 0
    %3969 = vperm.xlu0 %3968, %v3943
    %v3970 = vpop.permute.xlu0 %3969
    %3973 = vset.pattern.permute.xlu0 0
    %3974 = vperm.xlu0 %3973, %v3944
    %v3975 = vpop.permute.xlu0 %3974
    %3978 = vset.pattern.permute.xlu0 0
    %3979 = vperm.xlu0 %3978, %v3945
    %v3980 = vpop.permute.xlu0 %3979
    %3983 = vset.pattern.permute.xlu0 0
    %3984 = vperm.xlu0 %3983, %v3946
    %v3985 = vpop.permute.xlu0 %3984
    %3988 = vset.pattern.permute.xlu0 0
    %3989 = vperm.xlu0 %3988, %v3947
    %v3990 = vpop.permute.xlu0 %3989
    %3993 = vset.pattern.permute.xlu0 0
    %3994 = vperm.xlu0 %3993, %v3948
    %v3995 = vpop.permute.xlu0 %3994
    %3998 = vset.pattern.permute.xlu0 0
    %3999 = vperm.xlu0 %3998, %v3949
    %v4000 = vpop.permute.xlu0 %3999
    %4003 = vset.pattern.permute.xlu0 0
    %4004 = vperm.xlu0 %4003, %v3950
    %v4005 = vpop.permute.xlu0 %4004
    %4008 = vset.pattern.permute.xlu0 0
    %4009 = vperm.xlu0 %4008, %v3951
    %v4010 = vpop.permute.xlu0 %4009
    %4013 = vset.pattern.permute.xlu0 0
    %4014 = vperm.xlu0 %4013, %v3952
    %v4015 = vpop.permute.xlu0 %4014
    %4018 = vset.pattern.permute.xlu0 0
    %4019 = vperm.xlu0 %4018, %v3953
    %v4020 = vpop.permute.xlu0 %4019
    %4023 = vset.pattern.permute.xlu0 0
    %4024 = vperm.xlu0 %4023, %v3954
    %v4025 = vpop.permute.xlu0 %4024
    %4028 = vset.pattern.permute.xlu0 0
    %4029 = vperm.xlu0 %4028, %v3955
    %v4030 = vpop.permute.xlu0 %4029
    %4033 = vset.pattern.permute.xlu0 0
    %4034 = vperm.xlu0 %4033, %v3956
    %v4035 = vpop.permute.xlu0 %4034
    %4038 = vset.pattern.permute.xlu0 0
    %4039 = vperm.xlu0 %4038, %v3957
    %v4040 = vpop.permute.xlu0 %4039
    %4043 = vset.pattern.permute.xlu0 0
    %4044 = vperm.xlu0 %4043, %v3958
    %v4045 = vpop.permute.xlu0 %4044
    %4048 = vset.pattern.permute.xlu0 0
    %4049 = vperm.xlu0 %4048, %v3959
    %v4050 = vpop.permute.xlu0 %4049
    %4053 = vset.pattern.permute.xlu0 0
    %4054 = vperm.xlu0 %4053, %v3960
    %v4055 = vpop.permute.xlu0 %4054
    %4058 = vset.pattern.permute.xlu0 0
    %4059 = vperm.xlu0 %4058, %v3961
    %v4060 = vpop.permute.xlu0 %4059
    %4063 = vset.pattern.permute.xlu0 0
    %4064 = vperm.xlu0 %4063, %v3962
    %v4065 = vpop.permute.xlu0 %4064
    %4068 = vset.pattern.permute.xlu0 0
    %4069 = vperm.xlu0 %4068, %v3963
    %v4070 = vpop.permute.xlu0 %4069
    %4073 = vset.pattern.permute.xlu0 0
    %4074 = vperm.xlu0 %4073, %v3964
    %v4075 = vpop.permute.xlu0 %4074
    %4078 = vset.pattern.permute.xlu0 0
    %4079 = vperm.xlu0 %4078, %v3965
    %v4080 = vpop.permute.xlu0 %4079
    %4083 = vset.pattern.permute.xlu0 0
    %4084 = vperm.xlu0 %4083, %v3966
    %v4085 = vpop.permute.xlu0 %4084
    %v4087 = vadd.f32 %v3895, %v3970
    %v4088 = vadd.f32 %v3896, %v3970
    %v4089 = vadd.f32 %v3897, %v3975
    %v4090 = vadd.f32 %v3898, %v3975
    %v4091 = vadd.f32 %v3899, %v3980
    %v4092 = vadd.f32 %v3900, %v3980
    %v4093 = vadd.f32 %v3901, %v3985
    %v4094 = vadd.f32 %v3902, %v3985
    %v4095 = vadd.f32 %v3903, %v3990
    %v4096 = vadd.f32 %v3904, %v3990
    %v4097 = vadd.f32 %v3905, %v3995
    %v4098 = vadd.f32 %v3906, %v3995
    %v4099 = vadd.f32 %v3907, %v4000
    %v4100 = vadd.f32 %v3908, %v4000
    %v4101 = vadd.f32 %v3909, %v4005
    %v4102 = vadd.f32 %v3910, %v4005
    %v4103 = vadd.f32 %v3911, %v4010
    %v4104 = vadd.f32 %v3912, %v4010
    %v4105 = vadd.f32 %v3913, %v4015
    %v4106 = vadd.f32 %v3914, %v4015
    %v4107 = vadd.f32 %v3915, %v4020
    %v4108 = vadd.f32 %v3916, %v4020
    %v4109 = vadd.f32 %v3917, %v4025
    %v4110 = vadd.f32 %v3918, %v4025
    %v4111 = vadd.f32 %v3919, %v4030
    %v4112 = vadd.f32 %v3920, %v4030
    %v4113 = vadd.f32 %v3921, %v4035
    %v4114 = vadd.f32 %v3922, %v4035
    %v4115 = vadd.f32 %v3923, %v4040
    %v4116 = vadd.f32 %v3924, %v4040
    %v4117 = vadd.f32 %v3925, %v4045
    %v4118 = vadd.f32 %v3926, %v4045
    %v4119 = vadd.f32 %v3927, %v4050
    %v4120 = vadd.f32 %v3928, %v4050
    %v4121 = vadd.f32 %v3929, %v4055
    %v4122 = vadd.f32 %v3930, %v4055
    %v4123 = vadd.f32 %v3931, %v4060
    %v4124 = vadd.f32 %v3932, %v4060
    %v4125 = vadd.f32 %v3933, %v4065
    %v4126 = vadd.f32 %v3934, %v4065
    %v4127 = vadd.f32 %v3935, %v4070
    %v4128 = vadd.f32 %v3936, %v4070
    %v4129 = vadd.f32 %v3937, %v4075
    %v4130 = vadd.f32 %v3938, %v4075
    %v4131 = vadd.f32 %v3939, %v4080
    %v4132 = vadd.f32 %v3940, %v4080
    %v4133 = vadd.f32 %v3941, %v4085
    %v4134 = vadd.f32 %v3942, %v4085
    %4135 = vst [vmem:[#allocation2] sm:$0xff] %v4087
    %4136 = vst.msk [vmem:[#allocation2 + $0x8] sm:$0xff] %vm3270, %v4088
    %4137 = vst [vmem:[#allocation2 + $0x10] sm:$0xff] %v4089
    %4138 = vst.msk [vmem:[#allocation2 + $0x18] sm:$0xff] %vm3270, %v4090
    %4139 = vst [vmem:[#allocation2 + $0x20] sm:$0xff] %v4091
    %4140 = vst.msk [vmem:[#allocation2 + $0x28] sm:$0xff] %vm3270, %v4092
    %4141 = vst [vmem:[#allocation2 + $0x30] sm:$0xff] %v4093
    %4142 = vst.msk [vmem:[#allocation2 + $0x38] sm:$0xff] %vm3270, %v4094
    %4143 = vst [vmem:[#allocation2 + $0x40] sm:$0xff] %v4095
    %4144 = vst.msk [vmem:[#allocation2 + $0x48] sm:$0xff] %vm3270, %v4096
    %4145 = vst [vmem:[#allocation2 + $0x50] sm:$0xff] %v4097
    %4146 = vst.msk [vmem:[#allocation2 + $0x58] sm:$0xff] %vm3270, %v4098
    %4147 = vst [vmem:[#allocation2 + $0x60] sm:$0xff] %v4099
    %4148 = vst.msk [vmem:[#allocation2 + $0x68] sm:$0xff] %vm3270, %v4100
    %4149 = vst [vmem:[#allocation2 + $0x70] sm:$0xff] %v4101
    %4150 = vst.msk [vmem:[#allocation2 + $0x78] sm:$0xff] %vm3270, %v4102
    %4151 = vst [vmem:[#allocation2 + $0x80] sm:$0xff] %v4103
    %4152 = vst.msk [vmem:[#allocation2 + $0x88] sm:$0xff] %vm3270, %v4104
    %4153 = vst [vmem:[#allocation2 + $0x90] sm:$0xff] %v4105
    %4154 = vst.msk [vmem:[#allocation2 + $0x98] sm:$0xff] %vm3270, %v4106
    %4155 = vst [vmem:[#allocation2 + $0xa0] sm:$0xff] %v4107
    %4156 = vst.msk [vmem:[#allocation2 + $0xa8] sm:$0xff] %vm3270, %v4108
    %4157 = vst [vmem:[#allocation2 + $0xb0] sm:$0xff] %v4109
    %4158 = vst.msk [vmem:[#allocation2 + $0xb8] sm:$0xff] %vm3270, %v4110
    %4159 = vst [vmem:[#allocation2 + $0xc0] sm:$0xff] %v4111
    %4160 = vst.msk [vmem:[#allocation2 + $0xc8] sm:$0xff] %vm3270, %v4112
    %4161 = vst [vmem:[#allocation2 + $0xd0] sm:$0xff] %v4113
    %4162 = vst.msk [vmem:[#allocation2 + $0xd8] sm:$0xff] %vm3270, %v4114
    %4163 = vst [vmem:[#allocation2 + $0xe0] sm:$0xff] %v4115
    %4164 = vst.msk [vmem:[#allocation2 + $0xe8] sm:$0xff] %vm3270, %v4116
    %4165 = vst [vmem:[#allocation2 + $0xf0] sm:$0xff] %v4117
    %4166 = vst.msk [vmem:[#allocation2 + $0xf8] sm:$0xff] %vm3270, %v4118
    %4167 = vst [vmem:[#allocation2 + $0x100] sm:$0xff] %v4119
    %4168 = vst.msk [vmem:[#allocation2 + $0x108] sm:$0xff] %vm3270, %v4120
    %4169 = vst [vmem:[#allocation2 + $0x110] sm:$0xff] %v4121
    %4170 = vst.msk [vmem:[#allocation2 + $0x118] sm:$0xff] %vm3270, %v4122
    %4171 = vst [vmem:[#allocation2 + $0x120] sm:$0xff] %v4123
    %4172 = vst.msk [vmem:[#allocation2 + $0x128] sm:$0xff] %vm3270, %v4124
    %4173 = vst [vmem:[#allocation2 + $0x130] sm:$0xff] %v4125
    %4174 = vst.msk [vmem:[#allocation2 + $0x138] sm:$0xff] %vm3270, %v4126
    %4175 = vst [vmem:[#allocation2 + $0x140] sm:$0xff] %v4127
    %4176 = vst.msk [vmem:[#allocation2 + $0x148] sm:$0xff] %vm3270, %v4128
    %4177 = vst [vmem:[#allocation2 + $0x150] sm:$0xff] %v4129
    %4178 = vst.msk [vmem:[#allocation2 + $0x158] sm:$0xff] %vm3270, %v4130
    %4179 = vst [vmem:[#allocation2 + $0x160] sm:$0xff] %v4131
    %4180 = vst.msk [vmem:[#allocation2 + $0x168] sm:$0xff] %vm3270, %v4132
    %4181 = vst [vmem:[#allocation2 + $0x170] sm:$0xff] %v4133
    %4182 = vst.msk [vmem:[#allocation2 + $0x178] sm:$0xff] %vm3270, %v4134
    // Predicated region
    $region30: #{tpu_custom_call.1} parent=1 // pred_check
      _
    $region31: #{tpu_custom_call.1} parent=1 // pred_check_branch
      %4184 = sbr.rel (0) target = $region33
    $region32: #{tpu_custom_call.1} parent=1 // pred_region
      %s4186 = ssub.s32 6144, 6144
      %4187 = vsyncadd [#allocation3], %s4186
      %s4188 = sshll.u32 [#allocation2], 4
      %s4189 = int_to_ptr.vmem [resolvable:$true] %s4188
      %4194 = dma.vmem_to_hbm [thread:$0]  %s4189, 6144, %s7, [#allocation3], 256, 256, 16
    $region33: #{tpu_custom_call.1} parent=1 // pred_fallthru
      _
    // Predicated region
    $region34: #{tpu_custom_call.1} parent=1 // pred_check
      _
    $region35: #{tpu_custom_call.1} parent=1 // pred_check_branch
      %4196 = sbr.rel (0) target = $region37
    $region36: #{tpu_custom_call.1} parent=1 // pred_region
      %4197 = dma.done [#allocation3], 6144
    $region37: #{tpu_custom_call.1} parent=1 // pred_fallthru
      _
    %4198 = vsyncpa [#allocation3], 1

</llo_original>
